<compile_context>
chip_gen: v5e
topology: v5e:2x2
jax: 0.10.0
libtpu: 0.0.40
codegen_flags: <defaults>
</compile_context>

<pallas_src>
import math

import jax
import jax.numpy as jnp
from jax import lax
from jax.experimental import pallas as pl
from jax.experimental.pallas import tpu as pltpu

H1, W1, C1 = 32, 32, 64          # conv1 output spatial / channels
H2, W2, C2 = 16, 16, 64          # conv2 output spatial / channels (after pool1)
HP, WP = 8, 8                    # final pooled spatial
ROWS1 = 8                        # conv1 rows per strip (even -> pooling stays in-strip)
K1 = 27                          # im2col contraction depth for conv1 (3*3*3)


def _batch_block(n):
    """Images per grid step; keeps >=2 grid steps for n>=2 (v7x megacore)."""
    if n <= 1:
        return 1
    return max(1, min(8, n // 2))


# ---------------------------------------------------------------------------
# Kernel 1: fused conv1 + pool + conv2 + pool for a block of B images.
# ---------------------------------------------------------------------------
def conv_block_kernel(col1_ref, w1_ref, b1_ref, w2_ref, b2_ref, o_ref,
                      p1_ref, s2_ref):
    # col1_ref : (B, 1024, 27) bf16  im2col, rows = s*256 + wp*128 + h*16 + w2
    # w1_ref   : (27, 64)      bf16  rows ordered (ky, kx, cin)
    # b1_ref   : (1, 64)       f32
    # w2_ref   : (3, 192, 64)  bf16  [ky][(kx, cin), cout]
    # b2_ref   : (1, 64)       f32
    # o_ref    : (B, 8, 512)   bf16  rows = pooled h, lanes = (w, c) flatten
    # p1_ref   : VMEM (18, 18, 64) f32  zero-bordered pooled conv1 activation
    # s2_ref   : VMEM (16, 16, 64) f32  conv2 output before pooling
    B = col1_ref.shape[0]

    # Zero only the 1-pixel border (interior is fully rewritten per image).
    # Done every grid step so megacore sharding stays correct.
    zrow = jnp.zeros((W2 + 2, C1), jnp.float32)
    p1_ref[0] = zrow
    p1_ref[H2 + 1] = zrow
    zcol = jnp.zeros((H2 + 2, 1, C1), jnp.float32)
    p1_ref[:, pl.ds(0, 1), :] = zcol
    p1_ref[:, pl.ds(W2 + 1, 1), :] = zcol

    # Hoisted (loop-invariant) weight / bias reads.
    w1 = w1_ref[...]                     # (27, 64) bf16
    b1 = b1_ref[...]                     # (1, 64) f32
    b2 = b2_ref[...]                     # (1, 64) f32

    def one_image(b, carry):
        # ---- conv1 + bias + ReLU + 2x2 max-pool, strip by strip -----------
        # Row order within a strip is (wp, h, w2), so the W-pool is a max of
        # the two 128-row halves and the H-pool a max of leading-dim slices:
        # pure cross-vreg VPU maxes, no relayout, no VMEM bounce.
        for s in range(H1 // ROWS1):
            rows = col1_ref[b, pl.ds(s * ROWS1 * W1, ROWS1 * W1), :]      # (256, 27)
            a = jnp.dot(rows, w1, preferred_element_type=jnp.float32)
            a = jnp.maximum(a + b1, 0.0)                                   # (256, 64)
            wmax = jnp.maximum(a[0:128], a[128:256])                       # (128, 64) rows=(h, w2)
            hm = wmax.reshape(ROWS1 // 2, 2, W2, C1)                       # (4, 2, 16, 64)
            pooled = jnp.maximum(hm[:, 0], hm[:, 1])                       # (4, 16, 64)
            p1_ref[pl.ds(1 + s * (ROWS1 // 2), ROWS1 // 2),
                   pl.ds(1, W2), :] = pooled

        # ---- conv2: fuse the 3 kx taps along K (K = 192 per ky dot) -------
        acc = jnp.zeros((H2 * W2, C2), jnp.float32)
        for ky in range(3):
            patch = jnp.concatenate(
                [p1_ref[pl.ds(ky, H2), pl.ds(kx, W2), :] for kx in range(3)],
                axis=-1)                                                   # (16, 16, 192) f32
            acc = acc + jnp.dot(
                patch.reshape(H2 * W2, 3 * C1).astype(jnp.bfloat16),
                w2_ref[ky],
                preferred_element_type=jnp.float32)
        acc = jnp.maximum(acc + b2, 0.0)                                   # (256, 64)

        # ---- 2x2 max-pool + lane-dense (h, w, c) flattened store ----------
        s2_ref[...] = acc.reshape(H2, W2, C2)
        tw2 = jnp.maximum(s2_ref[:, pl.ds(0, W2 // 2, 2), :],
                          s2_ref[:, pl.ds(1, W2 // 2, 2), :])              # (16, 8, 64)
        tw2 = tw2.reshape(H2 // 2, 2, W2 // 2, C2)
        pooled2 = jnp.maximum(tw2[:, 0], tw2[:, 1])                        # (8, 8, 64)
        out = jnp.concatenate([pooled2[:, j, :] for j in range(WP)],
                              axis=-1)                                     # (8, 512)
        o_ref[b] = out.astype(o_ref.dtype)
        return carry

    lax.fori_loop(0, B, one_image, 0)


def conv_stage(x_nchw, w1, b1, w2, b2):
    N, C, H, W = x_nchw.shape
    assert (C, H, W) == (3, 32, 32), "Rep expects CIFAR-10 shaped input (3, 32, 32)"
    B = _batch_block(N)
    Np = ((N + B - 1) // B) * B

    # im2col for conv1 in the wrapper (K = 27), with rows permuted per 8-row
    # strip to (wp, h, w2) so both pool reductions are register-resident.
    x = jnp.transpose(x_nchw, (0, 2, 3, 1))                        # NCHW -> NHWC
    if Np != N:
        x = jnp.pad(x, ((0, Np - N), (0, 0), (0, 0), (0, 0)))
    xp = jnp.pad(x, ((0, 0), (1, 1), (1, 1), (0, 0)))              # zero pad = 1
    cols = [xp[:, ky:ky + H1, kx:kx + W1, :]                       # (Np, 32, 32, 3) each
            for ky in range(3) for kx in range(3)]
    col = jnp.concatenate(cols, axis=-1)                           # (Np, 32, 32, 27)
    col = col.reshape(Np, H1 // ROWS1, ROWS1, W1 // 2, 2, K1)      # [n, s, h, w2, wp, k]
    col = jnp.transpose(col, (0, 1, 4, 2, 3, 5))                   # [n, s, wp, h, w2, k]
    col1 = col.reshape(Np, H1 * W1, K1).astype(jnp.bfloat16)

    out = pl.pallas_call(
        conv_block_kernel,
        out_shape=jax.ShapeDtypeStruct((Np, HP, WP * C2), jnp.bfloat16),
        grid_spec=pltpu.PrefetchScalarGridSpec(
            num_scalar_prefetch=0,
            grid=(Np // B,),
            in_specs=[
                pl.BlockSpec((B, H1 * W1, K1), lambda n: (n, 0, 0)),
                pl.BlockSpec((K1, C1), lambda n: (0, 0)),
                pl.BlockSpec((1, C1), lambda n: (0, 0)),
                pl.BlockSpec((3, 3 * C1, C2), lambda n: (0, 0, 0)),
                pl.BlockSpec((1, C2), lambda n: (0, 0)),
            ],
            out_specs=pl.BlockSpec((B, HP, WP * C2), lambda n: (n, 0, 0)),
            scratch_shapes=[
                pltpu.VMEM((H2 + 2, W2 + 2, C1), jnp.float32),     # padded pool1
                pltpu.VMEM((H2, W2, C2), jnp.float32),             # conv2 pre-pool
            ],
        ),
        compiler_params=pltpu.CompilerParams(
            dimension_semantics=("parallel",)),     # batch blocks independent (v7x megacore)
    )(col1, w1, b1, w2, b2)
    return out[:N] if Np != N else out


# ---------------------------------------------------------------------------
# Kernel 2: fc1 + ReLU -> fc2 + ReLU (dropout is identity in eval),
# tiled (batch tiles x K chunks) so the fc1 weight DMA pipelines with compute.
# ---------------------------------------------------------------------------
def mlp_kernel(h_ref, w1_ref, b1_ref, w2_ref, b2_ref, o_ref, acc_ref):
    k = pl.program_id(1)

    @pl.when(k == 0)
    def _():
        acc_ref[...] = jnp.zeros_like(acc_ref)

    acc_ref[...] += jnp.dot(h_ref[...], w1_ref[...],
                            preferred_element_type=jnp.float32)

    @pl.when(k == pl.num_programs(1) - 1)
    def _():
        y = jnp.maximum(acc_ref[...] + b1_ref[...], 0.0)           # fc1 + ReLU
        # TODO(synk): nn.Dropout(p=0.5) is identity in eval mode; training-mode RNG mask not implemented.
        z = jnp.dot(y.astype(jnp.bfloat16), w2_ref[...],
                    preferred_element_type=jnp.float32)
        o_ref[...] = jnp.maximum(z + b2_ref[...], 0.0).astype(o_ref.dtype)


def mlp_stage(h, w1, b1, w2, b2, *, kc=512):
    N, K = h.shape
    M1, M2 = w1.shape[1], w2.shape[1]
    assert K % kc == 0

    Nw = ((N + 7) // 8) * 8                   # sublane-aligned batch tile
    TN = math.gcd(Nw, 128)                    # batch tile (multiple of 8, divides Nw)
    if Nw != N:
        h = jnp.pad(h, ((0, Nw - N), (0, 0)))

    out = pl.pallas_call(
        mlp_kernel,
        out_shape=jax.ShapeDtypeStruct((Nw, M2), jnp.float32),
        grid_spec=pltpu.PrefetchScalarGridSpec(
            num_scalar_prefetch=0,
            grid=(Nw // TN, K // kc),
            in_specs=[
                pl.BlockSpec((TN, kc), lambda i, k: (i, k)),
                pl.BlockSpec((kc, M1), lambda i, k: (k, 0)),
                pl.BlockSpec((1, M1), lambda i, k: (0, 0)),
                pl.BlockSpec((M1, M2), lambda i, k: (0, 0)),
                pl.BlockSpec((1, M2), lambda i, k: (0, 0)),
            ],
            out_specs=pl.BlockSpec((TN, M2), lambda i, k: (i, 0)),
            scratch_shapes=[pltpu.VMEM((TN, M1), jnp.float32)],
        ),
        compiler_params=pltpu.CompilerParams(
            dimension_semantics=("parallel", "arbitrary")),
    )(h.astype(jnp.bfloat16), w1, b1, w2, b2)
    return out[:N]


# ---------------------------------------------------------------------------
# Parameters (PyTorch layout) and the one-time conversion to kernel layout.
# ---------------------------------------------------------------------------
def init_params(key):
    """PyTorch-layout parameters: conv weights OIHW, linear weights (out, in)."""
    ks = jax.random.split(key, 8)
    s = 0.05
    return {
        "conv1_w": s * jax.random.normal(ks[0], (64, 3, 3, 3), jnp.float32),
        "conv1_b": s * jax.random.normal(ks[1], (64,), jnp.float32),
        "conv2_w": s * jax.random.normal(ks[2], (64, 64, 3, 3), jnp.float32),
        "conv2_b": s * jax.random.normal(ks[3], (64,), jnp.float32),
        "fc1_w": s * jax.random.normal(ks[4], (384, 64 * 8 * 8), jnp.float32),
        "fc1_b": s * jax.random.normal(ks[5], (384,), jnp.float32),
        "fc2_w": s * jax.random.normal(ks[6], (192, 384), jnp.float32),
        "fc2_b": s * jax.random.normal(ks[7], (192,), jnp.float32),
    }


def prepare_params(p):
    """One-time conversion to kernel layout: bf16 weights, f32 biases, conv2
    weights (ky)-major with (kx, cin) contraction rows, fc1 rows permuted so
    the NHWC (h,w,c) flatten matches PyTorch's x.view(-1, 64*8*8) on NCHW."""
    conv1_w = jnp.transpose(p["conv1_w"], (2, 3, 1, 0)).reshape(K1, C1)        # (ky,kx,ci) x o
    conv2_w = jnp.transpose(p["conv2_w"], (2, 3, 1, 0)).reshape(3, 3 * C1, C2)  # ky x (kx,ci) x o
    fc1_w = jnp.transpose(p["fc1_w"].reshape(384, C2, HP, WP),
                          (2, 3, 1, 0)).reshape(HP * WP * C2, 384)             # rows = (h,w,c)
    fc2_w = jnp.transpose(p["fc2_w"], (1, 0))                                  # (384, 192)
    return {
        "conv1_w": conv1_w.astype(jnp.bfloat16),
        "conv1_b": p["conv1_b"].reshape(1, C1).astype(jnp.float32),
        "conv2_w": conv2_w.astype(jnp.bfloat16),
        "conv2_b": p["conv2_b"].reshape(1, C2).astype(jnp.float32),
        "fc1_w": fc1_w.astype(jnp.bfloat16),
        "fc1_b": p["fc1_b"].reshape(1, 384).astype(jnp.float32),
        "fc2_w": fc2_w.astype(jnp.bfloat16),
        "fc2_b": p["fc2_b"].reshape(1, 192).astype(jnp.float32),
    }


@jax.jit
def rep_forward(kparams, x_nchw, mask):
    h = conv_stage(x_nchw, kparams["conv1_w"], kparams["conv1_b"],
                   kparams["conv2_w"], kparams["conv2_b"])          # (N, 8, 512) bf16
    h = h.reshape(h.shape[0], HP * WP * C2)                         # (h, w, c) flatten
    x = mlp_stage(h, kparams["fc1_w"], kparams["fc1_b"],
                  kparams["fc2_w"], kparams["fc2_b"])               # (N, 192) f32
    return x, mask


# ---------------------------------------------------------------------------
# Pure-JAX f32 reference of Rep.forward (eval mode) for validation.
# ---------------------------------------------------------------------------
def rep_reference(p, x_nchw):
    def conv(x, w, b):
        y = jax.lax.conv_general_dilated(
            x, w, window_strides=(1, 1), padding=((1, 1), (1, 1)),
            dimension_numbers=("NCHW", "OIHW", "NCHW"))
        return jax.nn.relu(y + b.reshape(1, -1, 1, 1))

    def pool(x):
        return jax.lax.reduce_window(x, -jnp.inf, jax.lax.max,
                                     (1, 1, 2, 2), (1, 1, 2, 2), "VALID")

    x = pool(conv(x_nchw, p["conv1_w"], p["conv1_b"]))
    x = pool(conv(x, p["conv2_w"], p["conv2_b"]))
    x = x.reshape(x.shape[0], 64 * 8 * 8)
    x = jax.nn.relu(x @ p["fc1_w"].T + p["fc1_b"])
    x = jax.nn.relu(x @ p["fc2_w"].T + p["fc2_b"])
    return x


if __name__ == "__main__":
    key = jax.random.PRNGKey(0)
    k_x, k_m, k_p = jax.random.split(key, 3)

    # CIFAR-10 style input: spatial must be 32 so the flatten gives 64*8*8 = 4096.
    x = jax.random.normal(k_x, (2, 3, 32, 32), jnp.float32)        # NCHW, like PyTorch
    mask = jax.random.normal(k_m, (2, 10), jnp.float32)            # passed through untouched

    raw_params = init_params(k_p)
    kparams = prepare_params(raw_params)

    out, mask_out = rep_forward(kparams, x, mask)
    jax.block_until_ready((out, mask_out))

    assert out.shape == (2, 192) and out.dtype == jnp.float32
    assert mask_out.shape == mask.shape
    assert bool(jnp.all(out >= 0.0))                               # final ReLU

    # Validate against the pure-JAX f32 reference (loose tolerance: bf16 matmuls).
    ref = rep_reference(raw_params, x)
    assert bool(jnp.allclose(out, ref, atol=1e-1, rtol=1e-1)), (
        "mismatch vs reference, max abs err "
        f"{float(jnp.max(jnp.abs(out - ref)))}")

    print("KERNEL_OK")
</pallas_src>

<mosaic_0001>
module attributes {stable_mosaic.version = 11 : i64} {
  func.func @conv_block_kernel(%arg0: i32, %arg1: memref<1x1024x27xbf16, #tpu.memory_space<vmem>>, %arg2: memref<27x64xbf16, #tpu.memory_space<vmem>>, %arg3: memref<1x64xf32, #tpu.memory_space<vmem>>, %arg4: memref<3x192x64xbf16, #tpu.memory_space<vmem>>, %arg5: memref<1x64xf32, #tpu.memory_space<vmem>>, %arg6: memref<1x8x512xbf16, #tpu.memory_space<vmem>>, %arg7: memref<18x18x64xf32, #tpu.memory_space<vmem>>, %arg8: memref<16x16x64xf32, #tpu.memory_space<vmem>>) attributes {dimension_semantics = [#tpu.dimension_semantics<parallel>], iteration_bounds = array<i64: 2>, scalar_prefetch = 0 : i64, scratch_operands = 2 : i64, tpu.core_type = #tpu.core_type<tc>, window_params = [{transform_indices = @transform_0, window_bounds = array<i64: 1, 1024, 27>}, {pipeline_mode = #tpu.pipeline_mode<synchronous>, transform_indices = @transform_1, window_bounds = array<i64: 27, 64>}, {pipeline_mode = #tpu.pipeline_mode<synchronous>, transform_indices = @transform_2, window_bounds = array<i64: 1, 64>}, {pipeline_mode = #tpu.pipeline_mode<synchronous>, transform_indices = @transform_3, window_bounds = array<i64: 3, 192, 64>}, {pipeline_mode = #tpu.pipeline_mode<synchronous>, transform_indices = @transform_4, window_bounds = array<i64: 1, 64>}, {transform_indices = @transform_5, window_bounds = array<i64: 1, 8, 512>}]} {
    %cst = arith.constant 0.000000e+00 : f32
    %0 = vector.broadcast %cst : f32 to vector<18x64xf32>
    %c0 = arith.constant 0 : index
    %c0_0 = arith.constant 0 : index
    %c0_1 = arith.constant 0 : index
    %1 = vector.load %arg7[%c0, %c0_0, %c0_1] : memref<18x18x64xf32, #tpu.memory_space<vmem>>, vector<1x18x64xf32>
    %2 = vector.shape_cast %1 : vector<1x18x64xf32> to vector<18x64xf32>
    %3 = vector.shape_cast %0 : vector<18x64xf32> to vector<1x18x64xf32>
    tpu.vector_store %arg7[%c0, %c0_0, %c0_1], %3 {strides = array<i32>} : memref<18x18x64xf32, #tpu.memory_space<vmem>>, vector<1x18x64xf32>,
    %c17 = arith.constant 17 : index
    %c0_2 = arith.constant 0 : index
    %c0_3 = arith.constant 0 : index
    %4 = vector.load %arg7[%c17, %c0_2, %c0_3] : memref<18x18x64xf32, #tpu.memory_space<vmem>>, vector<1x18x64xf32>
    %5 = vector.shape_cast %4 : vector<1x18x64xf32> to vector<18x64xf32>
    %6 = vector.shape_cast %0 : vector<18x64xf32> to vector<1x18x64xf32>
    tpu.vector_store %arg7[%c17, %c0_2, %c0_3], %6 {strides = array<i32>} : memref<18x18x64xf32, #tpu.memory_space<vmem>>, vector<1x18x64xf32>,
    %cst_4 = arith.constant 0.000000e+00 : f32
    %7 = vector.broadcast %cst_4 : f32 to vector<18x1x64xf32>
    %c0_5 = arith.constant 0 : index
    %c0_6 = arith.constant 0 : index
    %c0_7 = arith.constant 0 : index
    %8 = vector.load %arg7[%c0_5, %c0_6, %c0_7] : memref<18x18x64xf32, #tpu.memory_space<vmem>>, vector<18x1x64xf32>
    tpu.vector_store %arg7[%c0_5, %c0_6, %c0_7], %7 {strides = array<i32>} : memref<18x18x64xf32, #tpu.memory_space<vmem>>, vector<18x1x64xf32>,
    %c0_8 = arith.constant 0 : index
    %c17_9 = arith.constant 17 : index
    %c0_10 = arith.constant 0 : index
    %9 = vector.load %arg7[%c0_8, %c17_9, %c0_10] : memref<18x18x64xf32, #tpu.memory_space<vmem>>, vector<18x1x64xf32>
    tpu.vector_store %arg7[%c0_8, %c17_9, %c0_10], %7 {strides = array<i32>} : memref<18x18x64xf32, #tpu.memory_space<vmem>>, vector<18x1x64xf32>,
    %c0_11 = arith.constant 0 : index
    %c0_12 = arith.constant 0 : index
    %10 = vector.load %arg2[%c0_11, %c0_12] : memref<27x64xbf16, #tpu.memory_space<vmem>>, vector<27x64xbf16>
    %c0_13 = arith.constant 0 : index
    %c0_14 = arith.constant 0 : index
    %11 = vector.load %arg3[%c0_13, %c0_14] : memref<1x64xf32, #tpu.memory_space<vmem>>, vector<1x64xf32>
    %c0_15 = arith.constant 0 : index
    %c0_16 = arith.constant 0 : index
    %12 = vector.load %arg5[%c0_15, %c0_16] : memref<1x64xf32, #tpu.memory_space<vmem>>, vector<1x64xf32>
    %c0_i32 = arith.constant 0 : i32
    %13 = arith.index_cast %c0_i32 : i32 to index
    %c0_17 = arith.constant 0 : index
    %c0_18 = arith.constant 0 : index
    %14 = vector.load %arg1[%13, %c0_17, %c0_18] : memref<1x1024x27xbf16, #tpu.memory_space<vmem>>, vector<1x256x27xbf16>
    %15 = vector.shape_cast %14 : vector<1x256x27xbf16> to vector<256x27xbf16>
    %cst_19 = arith.constant dense<0.000000e+00> : vector<256x64xf32>
    %16 = tpu.matmul %15, %10, %cst_19 {dimension_numbers = #tpu.dot_dimension_numbers<[1], [0], [0], [1], [0, 0, 1, 1], [], []>} : vector<256x27xbf16>, vector<27x64xbf16>, vector<256x64xf32> -> vector<256x64xf32>
    %17 = vector.broadcast %11 : vector<1x64xf32> to vector<256x64xf32>
    %18 = arith.addf %16, %17 : vector<256x64xf32>
    %cst_20 = arith.constant 0.000000e+00 : f32
    %19 = vector.broadcast %cst_20 : f32 to vector<256x64xf32>
    %20 = arith.maximumf %18, %19 : vector<256x64xf32>
    %21 = vector.extract_strided_slice %20 {offsets = [0, 0], sizes = [128, 64], strides = [1, 1]} : vector<256x64xf32> to vector<128x64xf32>
    %22 = vector.extract_strided_slice %20 {offsets = [128, 0], sizes = [128, 64], strides = [1, 1]} : vector<256x64xf32> to vector<128x64xf32>
    %23 = arith.maximumf %21, %22 : vector<128x64xf32>
    %24 = vector.shape_cast %23 : vector<128x64xf32> to vector<4x2x16x64xf32>
    %25 = vector.extract_strided_slice %24 {offsets = [0, 0, 0, 0], sizes = [4, 1, 16, 64], strides = [1, 1, 1, 1]} : vector<4x2x16x64xf32> to vector<4x1x16x64xf32>
    %26 = vector.shape_cast %25 : vector<4x1x16x64xf32> to vector<4x16x64xf32>
    %27 = vector.extract_strided_slice %24 {offsets = [0, 1, 0, 0], sizes = [4, 1, 16, 64], strides = [1, 1, 1, 1]} : vector<4x2x16x64xf32> to vector<4x1x16x64xf32>
    %28 = vector.shape_cast %27 : vector<4x1x16x64xf32> to vector<4x16x64xf32>
    %29 = arith.maximumf %26, %28 : vector<4x16x64xf32>
    %c1 = arith.constant 1 : index
    %c1_21 = arith.constant 1 : index
    %c0_22 = arith.constant 0 : index
    %30 = vector.load %arg7[%c1, %c1_21, %c0_22] : memref<18x18x64xf32, #tpu.memory_space<vmem>>, vector<4x16x64xf32>
    tpu.vector_store %arg7[%c1, %c1_21, %c0_22], %29 {strides = array<i32>} : memref<18x18x64xf32, #tpu.memory_space<vmem>>, vector<4x16x64xf32>,
    %31 = arith.index_cast %c0_i32 : i32 to index
    %c256 = arith.constant 256 : index
    %c0_23 = arith.constant 0 : index
    %32 = vector.load %arg1[%31, %c256, %c0_23] : memref<1x1024x27xbf16, #tpu.memory_space<vmem>>, vector<1x256x27xbf16>
    %33 = vector.shape_cast %32 : vector<1x256x27xbf16> to vector<256x27xbf16>
    %cst_24 = arith.constant dense<0.000000e+00> : vector<256x64xf32>
    %34 = tpu.matmul %33, %10, %cst_24 {dimension_numbers = #tpu.dot_dimension_numbers<[1], [0], [0], [1], [0, 0, 1, 1], [], []>} : vector<256x27xbf16>, vector<27x64xbf16>, vector<256x64xf32> -> vector<256x64xf32>
    %35 = vector.broadcast %11 : vector<1x64xf32> to vector<256x64xf32>
    %36 = arith.addf %34, %35 : vector<256x64xf32>
    %cst_25 = arith.constant 0.000000e+00 : f32
    %37 = vector.broadcast %cst_25 : f32 to vector<256x64xf32>
    %38 = arith.maximumf %36, %37 : vector<256x64xf32>
    %39 = vector.extract_strided_slice %38 {offsets = [0, 0], sizes = [128, 64], strides = [1, 1]} : vector<256x64xf32> to vector<128x64xf32>
    %40 = vector.extract_strided_slice %38 {offsets = [128, 0], sizes = [128, 64], strides = [1, 1]} : vector<256x64xf32> to vector<128x64xf32>
    %41 = arith.maximumf %39, %40 : vector<128x64xf32>
    %42 = vector.shape_cast %41 : vector<128x64xf32> to vector<4x2x16x64xf32>
    %43 = vector.extract_strided_slice %42 {offsets = [0, 0, 0, 0], sizes = [4, 1, 16, 64], strides = [1, 1, 1, 1]} : vector<4x2x16x64xf32> to vector<4x1x16x64xf32>
    %44 = vector.shape_cast %43 : vector<4x1x16x64xf32> to vector<4x16x64xf32>
    %45 = vector.extract_strided_slice %42 {offsets = [0, 1, 0, 0], sizes = [4, 1, 16, 64], strides = [1, 1, 1, 1]} : vector<4x2x16x64xf32> to vector<4x1x16x64xf32>
    %46 = vector.shape_cast %45 : vector<4x1x16x64xf32> to vector<4x16x64xf32>
    %47 = arith.maximumf %44, %46 : vector<4x16x64xf32>
    %c5 = arith.constant 5 : index
    %c1_26 = arith.constant 1 : index
    %c0_27 = arith.constant 0 : index
    %48 = vector.load %arg7[%c5, %c1_26, %c0_27] : memref<18x18x64xf32, #tpu.memory_space<vmem>>, vector<4x16x64xf32>
    tpu.vector_store %arg7[%c5, %c1_26, %c0_27], %47 {strides = array<i32>} : memref<18x18x64xf32, #tpu.memory_space<vmem>>, vector<4x16x64xf32>,
    %49 = arith.index_cast %c0_i32 : i32 to index
    %c512 = arith.constant 512 : index
    %c0_28 = arith.constant 0 : index
    %50 = vector.load %arg1[%49, %c512, %c0_28] : memref<1x1024x27xbf16, #tpu.memory_space<vmem>>, vector<1x256x27xbf16>
    %51 = vector.shape_cast %50 : vector<1x256x27xbf16> to vector<256x27xbf16>
    %cst_29 = arith.constant dense<0.000000e+00> : vector<256x64xf32>
    %52 = tpu.matmul %51, %10, %cst_29 {dimension_numbers = #tpu.dot_dimension_numbers<[1], [0], [0], [1], [0, 0, 1, 1], [], []>} : vector<256x27xbf16>, vector<27x64xbf16>, vector<256x64xf32> -> vector<256x64xf32>
    %53 = vector.broadcast %11 : vector<1x64xf32> to vector<256x64xf32>
    %54 = arith.addf %52, %53 : vector<256x64xf32>
    %cst_30 = arith.constant 0.000000e+00 : f32
    %55 = vector.broadcast %cst_30 : f32 to vector<256x64xf32>
    %56 = arith.maximumf %54, %55 : vector<256x64xf32>
    %57 = vector.extract_strided_slice %56 {offsets = [0, 0], sizes = [128, 64], strides = [1, 1]} : vector<256x64xf32> to vector<128x64xf32>
    %58 = vector.extract_strided_slice %56 {offsets = [128, 0], sizes = [128, 64], strides = [1, 1]} : vector<256x64xf32> to vector<128x64xf32>
    %59 = arith.maximumf %57, %58 : vector<128x64xf32>
    %60 = vector.shape_cast %59 : vector<128x64xf32> to vector<4x2x16x64xf32>
    %61 = vector.extract_strided_slice %60 {offsets = [0, 0, 0, 0], sizes = [4, 1, 16, 64], strides = [1, 1, 1, 1]} : vector<4x2x16x64xf32> to vector<4x1x16x64xf32>
    %62 = vector.shape_cast %61 : vector<4x1x16x64xf32> to vector<4x16x64xf32>
    %63 = vector.extract_strided_slice %60 {offsets = [0, 1, 0, 0], sizes = [4, 1, 16, 64], strides = [1, 1, 1, 1]} : vector<4x2x16x64xf32> to vector<4x1x16x64xf32>
    %64 = vector.shape_cast %63 : vector<4x1x16x64xf32> to vector<4x16x64xf32>
    %65 = arith.maximumf %62, %64 : vector<4x16x64xf32>
    %c9 = arith.constant 9 : index
    %c1_31 = arith.constant 1 : index
    %c0_32 = arith.constant 0 : index
    %66 = vector.load %arg7[%c9, %c1_31, %c0_32] : memref<18x18x64xf32, #tpu.memory_space<vmem>>, vector<4x16x64xf32>
    tpu.vector_store %arg7[%c9, %c1_31, %c0_32], %65 {strides = array<i32>} : memref<18x18x64xf32, #tpu.memory_space<vmem>>, vector<4x16x64xf32>,
    %67 = arith.index_cast %c0_i32 : i32 to index
    %c768 = arith.constant 768 : index
    %c0_33 = arith.constant 0 : index
    %68 = vector.load %arg1[%67, %c768, %c0_33] : memref<1x1024x27xbf16, #tpu.memory_space<vmem>>, vector<1x256x27xbf16>
    %69 = vector.shape_cast %68 : vector<1x256x27xbf16> to vector<256x27xbf16>
    %cst_34 = arith.constant dense<0.000000e+00> : vector<256x64xf32>
    %70 = tpu.matmul %69, %10, %cst_34 {dimension_numbers = #tpu.dot_dimension_numbers<[1], [0], [0], [1], [0, 0, 1, 1], [], []>} : vector<256x27xbf16>, vector<27x64xbf16>, vector<256x64xf32> -> vector<256x64xf32>
    %71 = vector.broadcast %11 : vector<1x64xf32> to vector<256x64xf32>
    %72 = arith.addf %70, %71 : vector<256x64xf32>
    %cst_35 = arith.constant 0.000000e+00 : f32
    %73 = vector.broadcast %cst_35 : f32 to vector<256x64xf32>
    %74 = arith.maximumf %72, %73 : vector<256x64xf32>
    %75 = vector.extract_strided_slice %74 {offsets = [0, 0], sizes = [128, 64], strides = [1, 1]} : vector<256x64xf32> to vector<128x64xf32>
    %76 = vector.extract_strided_slice %74 {offsets = [128, 0], sizes = [128, 64], strides = [1, 1]} : vector<256x64xf32> to vector<128x64xf32>
    %77 = arith.maximumf %75, %76 : vector<128x64xf32>
    %78 = vector.shape_cast %77 : vector<128x64xf32> to vector<4x2x16x64xf32>
    %79 = vector.extract_strided_slice %78 {offsets = [0, 0, 0, 0], sizes = [4, 1, 16, 64], strides = [1, 1, 1, 1]} : vector<4x2x16x64xf32> to vector<4x1x16x64xf32>
    %80 = vector.shape_cast %79 : vector<4x1x16x64xf32> to vector<4x16x64xf32>
    %81 = vector.extract_strided_slice %78 {offsets = [0, 1, 0, 0], sizes = [4, 1, 16, 64], strides = [1, 1, 1, 1]} : vector<4x2x16x64xf32> to vector<4x1x16x64xf32>
    %82 = vector.shape_cast %81 : vector<4x1x16x64xf32> to vector<4x16x64xf32>
    %83 = arith.maximumf %80, %82 : vector<4x16x64xf32>
    %c13 = arith.constant 13 : index
    %c1_36 = arith.constant 1 : index
    %c0_37 = arith.constant 0 : index
    %84 = vector.load %arg7[%c13, %c1_36, %c0_37] : memref<18x18x64xf32, #tpu.memory_space<vmem>>, vector<4x16x64xf32>
    tpu.vector_store %arg7[%c13, %c1_36, %c0_37], %83 {strides = array<i32>} : memref<18x18x64xf32, #tpu.memory_space<vmem>>, vector<4x16x64xf32>,
    %cst_38 = arith.constant 0.000000e+00 : f32
    %85 = vector.broadcast %cst_38 : f32 to vector<256x64xf32>
    %c0_39 = arith.constant 0 : index
    %c0_40 = arith.constant 0 : index
    %c0_41 = arith.constant 0 : index
    %86 = vector.load %arg7[%c0_39, %c0_40, %c0_41] : memref<18x18x64xf32, #tpu.memory_space<vmem>>, vector<16x16x64xf32>
    %c0_42 = arith.constant 0 : index
    %c1_43 = arith.constant 1 : index
    %c0_44 = arith.constant 0 : index
    %87 = vector.load %arg7[%c0_42, %c1_43, %c0_44] : memref<18x18x64xf32, #tpu.memory_space<vmem>>, vector<16x16x64xf32>
    %c0_45 = arith.constant 0 : index
    %c2 = arith.constant 2 : index
    %c0_46 = arith.constant 0 : index
    %88 = vector.load %arg7[%c0_45, %c2, %c0_46] : memref<18x18x64xf32, #tpu.memory_space<vmem>>, vector<16x16x64xf32>
    %89 = tpu.concatenate %86, %87, %88 in 2 : vector<16x16x64xf32>, vector<16x16x64xf32>, vector<16x16x64xf32> -> vector<16x16x192xf32>
    %90 = vector.shape_cast %89 : vector<16x16x192xf32> to vector<256x192xf32>
    %91 = arith.truncf %90 : vector<256x192xf32> to vector<256x192xbf16>
    %c0_47 = arith.constant 0 : index
    %c0_48 = arith.constant 0 : index
    %c0_49 = arith.constant 0 : index
    %92 = vector.load %arg4[%c0_47, %c0_48, %c0_49] : memref<3x192x64xbf16, #tpu.memory_space<vmem>>, vector<1x192x64xbf16>
    %93 = vector.shape_cast %92 : vector<1x192x64xbf16> to vector<192x64xbf16>
    %cst_50 = arith.constant dense<0.000000e+00> : vector<256x64xf32>
    %94 = tpu.matmul %91, %93, %cst_50 {dimension_numbers = #tpu.dot_dimension_numbers<[1], [0], [0], [1], [0, 0, 1, 1], [], []>} : vector<256x192xbf16>, vector<192x64xbf16>, vector<256x64xf32> -> vector<256x64xf32>
    %95 = arith.addf %85, %94 : vector<256x64xf32>
    %c1_51 = arith.constant 1 : index
    %c0_52 = arith.constant 0 : index
    %c0_53 = arith.constant 0 : index
    %96 = vector.load %arg7[%c1_51, %c0_52, %c0_53] : memref<18x18x64xf32, #tpu.memory_space<vmem>>, vector<16x16x64xf32>
    %c1_54 = arith.constant 1 : index
    %c1_55 = arith.constant 1 : index
    %c0_56 = arith.constant 0 : index
    %97 = vector.load %arg7[%c1_54, %c1_55, %c0_56] : memref<18x18x64xf32, #tpu.memory_space<vmem>>, vector<16x16x64xf32>
    %c1_57 = arith.constant 1 : index
    %c2_58 = arith.constant 2 : index
    %c0_59 = arith.constant 0 : index
    %98 = vector.load %arg7[%c1_57, %c2_58, %c0_59] : memref<18x18x64xf32, #tpu.memory_space<vmem>>, vector<16x16x64xf32>
    %99 = tpu.concatenate %96, %97, %98 in 2 : vector<16x16x64xf32>, vector<16x16x64xf32>, vector<16x16x64xf32> -> vector<16x16x192xf32>
    %100 = vector.shape_cast %99 : vector<16x16x192xf32> to vector<256x192xf32>
    %101 = arith.truncf %100 : vector<256x192xf32> to vector<256x192xbf16>
    %c1_60 = arith.constant 1 : index
    %c0_61 = arith.constant 0 : index
    %c0_62 = arith.constant 0 : index
    %102 = vector.load %arg4[%c1_60, %c0_61, %c0_62] : memref<3x192x64xbf16, #tpu.memory_space<vmem>>, vector<1x192x64xbf16>
    %103 = vector.shape_cast %102 : vector<1x192x64xbf16> to vector<192x64xbf16>
    %cst_63 = arith.constant dense<0.000000e+00> : vector<256x64xf32>
    %104 = tpu.matmul %101, %103, %cst_63 {dimension_numbers = #tpu.dot_dimension_numbers<[1], [0], [0], [1], [0, 0, 1, 1], [], []>} : vector<256x192xbf16>, vector<192x64xbf16>, vector<256x64xf32> -> vector<256x64xf32>
    %105 = arith.addf %95, %104 : vector<256x64xf32>
    %c2_64 = arith.constant 2 : index
    %c0_65 = arith.constant 0 : index
    %c0_66 = arith.constant 0 : index
    %106 = vector.load %arg7[%c2_64, %c0_65, %c0_66] : memref<18x18x64xf32, #tpu.memory_space<vmem>>, vector<16x16x64xf32>
    %c2_67 = arith.constant 2 : index
    %c1_68 = arith.constant 1 : index
    %c0_69 = arith.constant 0 : index
    %107 = vector.load %arg7[%c2_67, %c1_68, %c0_69] : memref<18x18x64xf32, #tpu.memory_space<vmem>>, vector<16x16x64xf32>
    %c2_70 = arith.constant 2 : index
    %c2_71 = arith.constant 2 : index
    %c0_72 = arith.constant 0 : index
    %108 = vector.load %arg7[%c2_70, %c2_71, %c0_72] : memref<18x18x64xf32, #tpu.memory_space<vmem>>, vector<16x16x64xf32>
    %109 = tpu.concatenate %106, %107, %108 in 2 : vector<16x16x64xf32>, vector<16x16x64xf32>, vector<16x16x64xf32> -> vector<16x16x192xf32>
    %110 = vector.shape_cast %109 : vector<16x16x192xf32> to vector<256x192xf32>
    %111 = arith.truncf %110 : vector<256x192xf32> to vector<256x192xbf16>
    %c2_73 = arith.constant 2 : index
    %c0_74 = arith.constant 0 : index
    %c0_75 = arith.constant 0 : index
    %112 = vector.load %arg4[%c2_73, %c0_74, %c0_75] : memref<3x192x64xbf16, #tpu.memory_space<vmem>>, vector<1x192x64xbf16>
    %113 = vector.shape_cast %112 : vector<1x192x64xbf16> to vector<192x64xbf16>
    %cst_76 = arith.constant dense<0.000000e+00> : vector<256x64xf32>
    %114 = tpu.matmul %111, %113, %cst_76 {dimension_numbers = #tpu.dot_dimension_numbers<[1], [0], [0], [1], [0, 0, 1, 1], [], []>} : vector<256x192xbf16>, vector<192x64xbf16>, vector<256x64xf32> -> vector<256x64xf32>
    %115 = arith.addf %105, %114 : vector<256x64xf32>
    %116 = vector.broadcast %12 : vector<1x64xf32> to vector<256x64xf32>
    %117 = arith.addf %115, %116 : vector<256x64xf32>
    %cst_77 = arith.constant 0.000000e+00 : f32
    %118 = vector.broadcast %cst_77 : f32 to vector<256x64xf32>
    %119 = arith.maximumf %117, %118 : vector<256x64xf32>
    %120 = vector.shape_cast %119 : vector<256x64xf32> to vector<16x16x64xf32>
    %c0_78 = arith.constant 0 : index
    %c0_79 = arith.constant 0 : index
    %c0_80 = arith.constant 0 : index
    %121 = vector.load %arg8[%c0_78, %c0_79, %c0_80] : memref<16x16x64xf32, #tpu.memory_space<vmem>>, vector<16x16x64xf32>
    tpu.vector_store %arg8[%c0_78, %c0_79, %c0_80], %120 {strides = array<i32>} : memref<16x16x64xf32, #tpu.memory_space<vmem>>, vector<16x16x64xf32>,
    %c0_81 = arith.constant 0 : index
    %c0_82 = arith.constant 0 : index
    %c0_83 = arith.constant 0 : index
    %122 = tpu.strided_load %arg8[%c0_81, %c0_82, %c0_83] {strides = array<i32: 1, 2, 1>} : memref<16x16x64xf32, #tpu.memory_space<vmem>>, vector<16x8x64xf32>
    %c0_84 = arith.constant 0 : index
    %c1_85 = arith.constant 1 : index
    %c0_86 = arith.constant 0 : index
    %123 = tpu.strided_load %arg8[%c0_84, %c1_85, %c0_86] {strides = array<i32: 1, 2, 1>} : memref<16x16x64xf32, #tpu.memory_space<vmem>>, vector<16x8x64xf32>
    %124 = arith.maximumf %122, %123 : vector<16x8x64xf32>
    %125 = vector.shape_cast %124 : vector<16x8x64xf32> to vector<8x2x8x64xf32>
    %126 = vector.extract_strided_slice %125 {offsets = [0, 0, 0, 0], sizes = [8, 1, 8, 64], strides = [1, 1, 1, 1]} : vector<8x2x8x64xf32> to vector<8x1x8x64xf32>
    %127 = vector.shape_cast %126 : vector<8x1x8x64xf32> to vector<8x8x64xf32>
    %128 = vector.extract_strided_slice %125 {offsets = [0, 1, 0, 0], sizes = [8, 1, 8, 64], strides = [1, 1, 1, 1]} : vector<8x2x8x64xf32> to vector<8x1x8x64xf32>
    %129 = vector.shape_cast %128 : vector<8x1x8x64xf32> to vector<8x8x64xf32>
    %130 = arith.maximumf %127, %129 : vector<8x8x64xf32>
    %131 = vector.extract_strided_slice %130 {offsets = [0, 0, 0], sizes = [8, 1, 64], strides = [1, 1, 1]} : vector<8x8x64xf32> to vector<8x1x64xf32>
    %132 = vector.shape_cast %131 : vector<8x1x64xf32> to vector<8x64xf32>
    %133 = vector.extract_strided_slice %130 {offsets = [0, 1, 0], sizes = [8, 1, 64], strides = [1, 1, 1]} : vector<8x8x64xf32> to vector<8x1x64xf32>
    %134 = vector.shape_cast %133 : vector<8x1x64xf32> to vector<8x64xf32>
    %135 = vector.extract_strided_slice %130 {offsets = [0, 2, 0], sizes = [8, 1, 64], strides = [1, 1, 1]} : vector<8x8x64xf32> to vector<8x1x64xf32>
    %136 = vector.shape_cast %135 : vector<8x1x64xf32> to vector<8x64xf32>
    %137 = vector.extract_strided_slice %130 {offsets = [0, 3, 0], sizes = [8, 1, 64], strides = [1, 1, 1]} : vector<8x8x64xf32> to vector<8x1x64xf32>
    %138 = vector.shape_cast %137 : vector<8x1x64xf32> to vector<8x64xf32>
    %139 = vector.extract_strided_slice %130 {offsets = [0, 4, 0], sizes = [8, 1, 64], strides = [1, 1, 1]} : vector<8x8x64xf32> to vector<8x1x64xf32>
    %140 = vector.shape_cast %139 : vector<8x1x64xf32> to vector<8x64xf32>
    %141 = vector.extract_strided_slice %130 {offsets = [0, 5, 0], sizes = [8, 1, 64], strides = [1, 1, 1]} : vector<8x8x64xf32> to vector<8x1x64xf32>
    %142 = vector.shape_cast %141 : vector<8x1x64xf32> to vector<8x64xf32>
    %143 = vector.extract_strided_slice %130 {offsets = [0, 6, 0], sizes = [8, 1, 64], strides = [1, 1, 1]} : vector<8x8x64xf32> to vector<8x1x64xf32>
    %144 = vector.shape_cast %143 : vector<8x1x64xf32> to vector<8x64xf32>
    %145 = vector.extract_strided_slice %130 {offsets = [0, 7, 0], sizes = [8, 1, 64], strides = [1, 1, 1]} : vector<8x8x64xf32> to vector<8x1x64xf32>
    %146 = vector.shape_cast %145 : vector<8x1x64xf32> to vector<8x64xf32>
    %147 = tpu.concatenate %132, %134, %136, %138, %140, %142, %144, %146 in 1 : vector<8x64xf32>, vector<8x64xf32>, vector<8x64xf32>, vector<8x64xf32>, vector<8x64xf32>, vector<8x64xf32>, vector<8x64xf32>, vector<8x64xf32> -> vector<8x512xf32>
    %148 = arith.truncf %147 : vector<8x512xf32> to vector<8x512xbf16>
    %149 = arith.index_cast %c0_i32 : i32 to index
    %c0_87 = arith.constant 0 : index
    %c0_88 = arith.constant 0 : index
    %150 = vector.load %arg6[%149, %c0_87, %c0_88] : memref<1x8x512xbf16, #tpu.memory_space<vmem>>, vector<1x8x512xbf16>
    %151 = vector.shape_cast %150 : vector<1x8x512xbf16> to vector<8x512xbf16>
    %152 = vector.shape_cast %148 : vector<8x512xbf16> to vector<1x8x512xbf16>
    tpu.vector_store %arg6[%149, %c0_87, %c0_88], %152 {strides = array<i32>} : memref<1x8x512xbf16, #tpu.memory_space<vmem>>, vector<1x8x512xbf16>,
    %c1_i32 = arith.constant 1 : i32
    return
  }
  func.func @transform_0(%arg0: i32) -> (i32, i32, i32) {
    %c0_i32 = arith.constant 0 : i32
    %c0_i32_0 = arith.constant 0 : i32
    %c0_i32_1 = arith.constant 0 : i32
    return %arg0, %c0_i32, %c0_i32_0 : i32, i32, i32
  }
  func.func @transform_1(%arg0: i32) -> (i32, i32) {
    %c0_i32 = arith.constant 0 : i32
    %c0_i32_0 = arith.constant 0 : i32
    %c0_i32_1 = arith.constant 0 : i32
    return %c0_i32, %c0_i32_0 : i32, i32
  }
  func.func @transform_2(%arg0: i32) -> (i32, i32) {
    %c0_i32 = arith.constant 0 : i32
    %c0_i32_0 = arith.constant 0 : i32
    %c0_i32_1 = arith.constant 0 : i32
    return %c0_i32, %c0_i32_0 : i32, i32
  }
  func.func @transform_3(%arg0: i32) -> (i32, i32, i32) {
    %c0_i32 = arith.constant 0 : i32
    %c0_i32_0 = arith.constant 0 : i32
    %c0_i32_1 = arith.constant 0 : i32
    %c0_i32_2 = arith.constant 0 : i32
    return %c0_i32, %c0_i32_0, %c0_i32_1 : i32, i32, i32
  }
  func.func @transform_4(%arg0: i32) -> (i32, i32) {
    %c0_i32 = arith.constant 0 : i32
    %c0_i32_0 = arith.constant 0 : i32
    %c0_i32_1 = arith.constant 0 : i32
    return %c0_i32, %c0_i32_0 : i32, i32
  }
  func.func @transform_5(%arg0: i32) -> (i32, i32, i32) {
    %c0_i32 = arith.constant 0 : i32
    %c0_i32_0 = arith.constant 0 : i32
    %c0_i32_1 = arith.constant 0 : i32
    return %arg0, %c0_i32, %c0_i32_0 : i32, i32, i32
  }
}

module attributes {stable_mosaic.version = 11 : i64} {
  func.func @mlp_kernel(%arg0: i32, %arg1: i32, %arg2: memref<8x512xbf16, #tpu.memory_space<vmem>>, %arg3: memref<512x384xbf16, #tpu.memory_space<vmem>>, %arg4: memref<1x384xf32, #tpu.memory_space<vmem>>, %arg5: memref<384x192xbf16, #tpu.memory_space<vmem>>, %arg6: memref<1x192xf32, #tpu.memory_space<vmem>>, %arg7: memref<8x192xf32, #tpu.memory_space<vmem>>, %arg8: memref<8x384xf32, #tpu.memory_space<vmem>>) attributes {dimension_semantics = [#tpu.dimension_semantics<parallel>, #tpu.dimension_semantics<arbitrary>], iteration_bounds = array<i64: 1, 8>, scalar_prefetch = 0 : i64, scratch_operands = 1 : i64, tpu.core_type = #tpu.core_type<tc>, window_params = [{transform_indices = @transform_0, window_bounds = array<i64: 8, 512>}, {transform_indices = @transform_1, window_bounds = array<i64: 512, 384>}, {pipeline_mode = #tpu.pipeline_mode<synchronous>, transform_indices = @transform_2, window_bounds = array<i64: 1, 384>}, {pipeline_mode = #tpu.pipeline_mode<synchronous>, transform_indices = @transform_3, window_bounds = array<i64: 384, 192>}, {pipeline_mode = #tpu.pipeline_mode<synchronous>, transform_indices = @transform_4, window_bounds = array<i64: 1, 192>}, {transform_indices = @transform_5, window_bounds = array<i64: 8, 192>}]} {
    %c0_i32 = arith.constant 0 : i32
    %0 = arith.cmpi eq, %arg1, %c0_i32 : i32
    %1 = arith.extui %0 : i1 to i32
    %c0_i32_0 = arith.constant 0 : i32
    %2 = arith.cmpi ne, %1, %c0_i32_0 : i32
    scf.if %2 {
      %cst_9 = arith.constant 0.000000e+00 : f32
      %12 = vector.broadcast %cst_9 : f32 to vector<8x384xf32>
      %c0_10 = arith.constant 0 : index
      %c0_11 = arith.constant 0 : index
      %13 = vector.load %arg8[%c0_10, %c0_11] : memref<8x384xf32, #tpu.memory_space<vmem>>, vector<8x384xf32>
      tpu.vector_store %arg8[%c0_10, %c0_11], %12 {strides = array<i32>} : memref<8x384xf32, #tpu.memory_space<vmem>>, vector<8x384xf32>,
    } else {
    }
    %c0 = arith.constant 0 : index
    %c0_1 = arith.constant 0 : index
    %3 = vector.load %arg8[%c0, %c0_1] : memref<8x384xf32, #tpu.memory_space<vmem>>, vector<8x384xf32>
    %c0_2 = arith.constant 0 : index
    %c0_3 = arith.constant 0 : index
    %4 = vector.load %arg2[%c0_2, %c0_3] : memref<8x512xbf16, #tpu.memory_space<vmem>>, vector<8x512xbf16>
    %c0_4 = arith.constant 0 : index
    %c0_5 = arith.constant 0 : index
    %5 = vector.load %arg3[%c0_4, %c0_5] : memref<512x384xbf16, #tpu.memory_space<vmem>>, vector<512x384xbf16>
    %cst = arith.constant dense<0.000000e+00> : vector<8x384xf32>
    %6 = tpu.matmul %4, %5, %cst {dimension_numbers = #tpu.dot_dimension_numbers<[1], [0], [0], [1], [0, 0, 1, 1], [], []>} : vector<8x512xbf16>, vector<512x384xbf16>, vector<8x384xf32> -> vector<8x384xf32>
    %7 = arith.addf %3, %6 : vector<8x384xf32>
    %c0_6 = arith.constant 0 : index
    %c0_7 = arith.constant 0 : index
    %8 = vector.load %arg8[%c0_6, %c0_7] : memref<8x384xf32, #tpu.memory_space<vmem>>, vector<8x384xf32>
    tpu.vector_store %arg8[%c0_6, %c0_7], %7 {strides = array<i32>} : memref<8x384xf32, #tpu.memory_space<vmem>>, vector<8x384xf32>,
    %c7_i32 = arith.constant 7 : i32
    %9 = arith.cmpi eq, %arg1, %c7_i32 : i32
    %10 = arith.extui %9 : i1 to i32
    %c0_i32_8 = arith.constant 0 : i32
    %11 = arith.cmpi ne, %10, %c0_i32_8 : i32
    scf.if %11 {
      %c0_9 = arith.constant 0 : index
      %c0_10 = arith.constant 0 : index
      %12 = vector.load %arg8[%c0_9, %c0_10] : memref<8x384xf32, #tpu.memory_space<vmem>>, vector<8x384xf32>
      %c0_11 = arith.constant 0 : index
      %c0_12 = arith.constant 0 : index
      %13 = vector.load %arg4[%c0_11, %c0_12] : memref<1x384xf32, #tpu.memory_space<vmem>>, vector<1x384xf32>
      %14 = vector.broadcast %13 : vector<1x384xf32> to vector<8x384xf32>
      %15 = arith.addf %12, %14 : vector<8x384xf32>
      %cst_13 = arith.constant 0.000000e+00 : f32
      %16 = vector.broadcast %cst_13 : f32 to vector<8x384xf32>
      %17 = arith.maximumf %15, %16 : vector<8x384xf32>
      %18 = arith.truncf %17 : vector<8x384xf32> to vector<8x384xbf16>
      %c0_14 = arith.constant 0 : index
      %c0_15 = arith.constant 0 : index
      %19 = vector.load %arg5[%c0_14, %c0_15] : memref<384x192xbf16, #tpu.memory_space<vmem>>, vector<384x192xbf16>
      %cst_16 = arith.constant dense<0.000000e+00> : vector<8x192xf32>
      %20 = tpu.matmul %18, %19, %cst_16 {dimension_numbers = #tpu.dot_dimension_numbers<[1], [0], [0], [1], [0, 0, 1, 1], [], []>} : vector<8x384xbf16>, vector<384x192xbf16>, vector<8x192xf32> -> vector<8x192xf32>
      %c0_17 = arith.constant 0 : index
      %c0_18 = arith.constant 0 : index
      %21 = vector.load %arg6[%c0_17, %c0_18] : memref<1x192xf32, #tpu.memory_space<vmem>>, vector<1x192xf32>
      %22 = vector.broadcast %21 : vector<1x192xf32> to vector<8x192xf32>
      %23 = arith.addf %20, %22 : vector<8x192xf32>
      %cst_19 = arith.constant 0.000000e+00 : f32
      %24 = vector.broadcast %cst_19 : f32 to vector<8x192xf32>
      %25 = arith.maximumf %23, %24 : vector<8x192xf32>
      %c0_20 = arith.constant 0 : index
      %c0_21 = arith.constant 0 : index
      %26 = vector.load %arg7[%c0_20, %c0_21] : memref<8x192xf32, #tpu.memory_space<vmem>>, vector<8x192xf32>
      tpu.vector_store %arg7[%c0_20, %c0_21], %25 {strides = array<i32>} : memref<8x192xf32, #tpu.memory_space<vmem>>, vector<8x192xf32>,
    } else {
    }
    return
  }
  func.func @transform_0(%arg0: i32, %arg1: i32) -> (i32, i32) {
    %c0_i32 = arith.constant 0 : i32
    return %arg0, %arg1 : i32, i32
  }
  func.func @transform_1(%arg0: i32, %arg1: i32) -> (i32, i32) {
    %c0_i32 = arith.constant 0 : i32
    %c0_i32_0 = arith.constant 0 : i32
    return %arg1, %c0_i32 : i32, i32
  }
  func.func @transform_2(%arg0: i32, %arg1: i32) -> (i32, i32) {
    %c0_i32 = arith.constant 0 : i32
    %c0_i32_0 = arith.constant 0 : i32
    %c0_i32_1 = arith.constant 0 : i32
    return %c0_i32, %c0_i32_0 : i32, i32
  }
  func.func @transform_3(%arg0: i32, %arg1: i32) -> (i32, i32) {
    %c0_i32 = arith.constant 0 : i32
    %c0_i32_0 = arith.constant 0 : i32
    %c0_i32_1 = arith.constant 0 : i32
    return %c0_i32, %c0_i32_0 : i32, i32
  }
  func.func @transform_4(%arg0: i32, %arg1: i32) -> (i32, i32) {
    %c0_i32 = arith.constant 0 : i32
    %c0_i32_0 = arith.constant 0 : i32
    %c0_i32_1 = arith.constant 0 : i32
    return %c0_i32, %c0_i32_0 : i32, i32
  }
  func.func @transform_5(%arg0: i32, %arg1: i32) -> (i32, i32) {
    %c0_i32 = arith.constant 0 : i32
    %c0_i32_0 = arith.constant 0 : i32
    return %arg0, %c0_i32 : i32, i32
  }
}

</mosaic_0001>

<llo_original>
// kernel: rep_forward.3
$region0: #{rep_forward.3}
  #allocation0 [shape = 'u32[]', space=smem, size = 0x4, offset = 0x4, fixed_abs, tag = 'smem constant byte address 0x4 - core index']
  #allocation1 [shape = 'u32[72,128]{1,0:T(1,128)}', space=vmem, size = 0x9000, scoped, tag = 'internal scratch']
  #allocation2 [shape = 'f32[8,384]{1,0:T(8,128)}', space=vmem, size = 0x3000, scoped, tag = 'scratch operand']
  %s0 = inlined_call_operand.vmem [shape: bf16[8,4096], index: 0, kind: input, shape index: {}]
  %s1 = inlined_call_operand.vmem [shape: bf16[4096,384], index: 1, kind: input, shape index: {}]
  %s2 = inlined_call_operand.vmem [shape: f32[1,384], index: 2, kind: input, shape index: {}]
  %s3 = inlined_call_operand.vmem [shape: bf16[384,192], index: 3, kind: input, shape index: {}]
  %s4 = inlined_call_operand.vmem [shape: f32[1,192], index: 4, kind: input, shape index: {}]
  %s5 = inlined_call_operand.vmem [shape: f32[8,192], index: 5, kind: output, shape index: {}]
  %s6 = sld [smem:[#allocation0]]
  $region61: #{rep_forward.3} parent=0
    _
  %s8 = ssub.s32 1, %s6
  %s9 = scalar_select 0, %s8, %s6
  loop: start=0, step=1, limit=10
  $region2: #{rep_forward.3} parent=0 // loop_pre_header
    _
  $region3: #{rep_forward.3} parent=0 // loop_header
    %s11 = sphi 0, %s15
    %p12 = scmp.ge.s32.totalorder %s11, 10
    %s18 = sphi 0, %s30
    %s19 = sphi 0, %s26
    %s20 = sphi 0, %s18
    %s21 = sphi 0, %s19
    %s22 = sphi 0, %s20
    %s23 = sphi 0, %s21
    %s35 = sphi 0, %s37
    %s38 = sphi 0, %s35
    %s39 = sphi 0, %s38
    %s55 = sphi 0, %s39
    %s61 = sphi 0, %s63
    %s64 = sphi 0, %s61
    %s65 = sphi 0, %s64
    %s81 = sphi 0, %s65
    %s85 = sphi 0, %s85
    %s87 = sphi 0, %s85
    %s88 = sphi 0, %s87
    %s102 = sphi 0, %s88
    %s106 = sphi 0, %s106
    %s108 = sphi 0, %s106
    %s109 = sphi 0, %s108
    %s123 = sphi 0, %s109
    %s127 = sphi 0, %s127
    %s129 = sphi 0, %s127
    %s130 = sphi 0, %s129
    %s144 = sphi 0, %s130
    %s150 = sphi 0, %s152
    %s153 = sphi 0, %s150
    %s154 = sphi 0, %s153
    %s170 = sphi 0, %s154
  $region4: #{rep_forward.3} parent=0 // loop_header_branch
    %14 = sbr.rel (%p12) target = $region8
  $region5: #{rep_forward.3} parent=0 // loop_body
    %s16 = ssub.s32 %s11, 1
    %s17 = ssub.s32 %s11, 2
    %s24 = sadd.s32 1, %s19
    %p25 = scmp.ge.s32.totalorder %s24, 8
    %s26 = scalar_select %p25, 0, %s24
    %s27 = sadd.s32 1, %s18
    %s28 = scalar_select %p25, %s27, %s18
    %p29 = scmp.ge.s32.totalorder %s28, 1
    %s30 = scalar_select %p29, 0, %s28
    %s31 = ssub.s32 %s18, %s30
    %s32 = ssub.s32 %s19, %s26
    %s33 = sor.u32 %s31, %s32
    %p34 = scmp.eq.s32.totalorder %s33, 0
    %s36 = sadd.s32 %s35, 1
    %s37 = scalar_select %p34, %s35, %s36
    %p40 = pneg %p34
    %p41 = scmp.eq.s32.totalorder %s11, 7
    %p42 = por %p40, %p41
    %p43 = scmp.ne.s32.totalorder %s35, %s38
    %p44 = scmp.eq.s32.totalorder %s11, 0
    %p45 = por %p43, %p44
    %p46 = scmp.ne.s32.totalorder %s35, %s38
    %p47 = scmp.eq.s32.totalorder %s16, 7
    %p48 = por %p46, %p47
    %p49 = scmp.ne.s32.totalorder %s38, %s39
    %p50 = scmp.eq.s32.totalorder %s16, 0
    %p51 = por %p49, %p50
    %p52 = scmp.ne.s32.totalorder %s38, %s39
    %p53 = scmp.eq.s32.totalorder %s17, 7
    %p54 = por %p52, %p53
    %p56 = scmp.ne.s32.totalorder %s39, %s55
    %p57 = scmp.eq.s32.totalorder %s17, 0
    %p58 = por %p56, %p57
    %s59 = ssub.s32 %s19, %s26
    %p60 = scmp.eq.s32.totalorder %s59, 0
    %s62 = sadd.s32 %s61, 1
    %s63 = scalar_select %p60, %s61, %s62
    %p66 = pneg %p60
    %p67 = scmp.eq.s32.totalorder %s11, 7
    %p68 = por %p66, %p67
    %p69 = scmp.ne.s32.totalorder %s61, %s64
    %p70 = scmp.eq.s32.totalorder %s11, 0
    %p71 = por %p69, %p70
    %p72 = scmp.ne.s32.totalorder %s61, %s64
    %p73 = scmp.eq.s32.totalorder %s16, 7
    %p74 = por %p72, %p73
    %p75 = scmp.ne.s32.totalorder %s64, %s65
    %p76 = scmp.eq.s32.totalorder %s16, 0
    %p77 = por %p75, %p76
    %p78 = scmp.ne.s32.totalorder %s64, %s65
    %p79 = scmp.eq.s32.totalorder %s17, 7
    %p80 = por %p78, %p79
    %p82 = scmp.ne.s32.totalorder %s65, %s81
    %p83 = scmp.eq.s32.totalorder %s17, 0
    %p84 = por %p82, %p83
    %s86 = sadd.s32 %s85, 1
    %p89 = scmp.eq.s32.totalorder %s11, 7
    %p90 = scmp.ne.s32.totalorder %s85, %s87
    %p91 = scmp.eq.s32.totalorder %s11, 0
    %p92 = por %p90, %p91
    %p93 = scmp.ne.s32.totalorder %s85, %s87
    %p94 = scmp.eq.s32.totalorder %s16, 7
    %p95 = por %p93, %p94
    %p96 = scmp.ne.s32.totalorder %s87, %s88
    %p97 = scmp.eq.s32.totalorder %s16, 0
    %p98 = por %p96, %p97
    %p99 = scmp.ne.s32.totalorder %s87, %s88
    %p100 = scmp.eq.s32.totalorder %s17, 7
    %p101 = por %p99, %p100
    %p103 = scmp.ne.s32.totalorder %s88, %s102
    %p104 = scmp.eq.s32.totalorder %s17, 0
    %p105 = por %p103, %p104
    %s107 = sadd.s32 %s106, 1
    %p110 = scmp.eq.s32.totalorder %s11, 7
    %p111 = scmp.ne.s32.totalorder %s106, %s108
    %p112 = scmp.eq.s32.totalorder %s11, 0
    %p113 = por %p111, %p112
    %p114 = scmp.ne.s32.totalorder %s106, %s108
    %p115 = scmp.eq.s32.totalorder %s16, 7
    %p116 = por %p114, %p115
    %p117 = scmp.ne.s32.totalorder %s108, %s109
    %p118 = scmp.eq.s32.totalorder %s16, 0
    %p119 = por %p117, %p118
    %p120 = scmp.ne.s32.totalorder %s108, %s109
    %p121 = scmp.eq.s32.totalorder %s17, 7
    %p122 = por %p120, %p121
    %p124 = scmp.ne.s32.totalorder %s109, %s123
    %p125 = scmp.eq.s32.totalorder %s17, 0
    %p126 = por %p124, %p125
    %s128 = sadd.s32 %s127, 1
    %p131 = scmp.eq.s32.totalorder %s11, 7
    %p132 = scmp.ne.s32.totalorder %s127, %s129
    %p133 = scmp.eq.s32.totalorder %s11, 0
    %p134 = por %p132, %p133
    %p135 = scmp.ne.s32.totalorder %s127, %s129
    %p136 = scmp.eq.s32.totalorder %s16, 7
    %p137 = por %p135, %p136
    %p138 = scmp.ne.s32.totalorder %s129, %s130
    %p139 = scmp.eq.s32.totalorder %s16, 0
    %p140 = por %p138, %p139
    %p141 = scmp.ne.s32.totalorder %s129, %s130
    %p142 = scmp.eq.s32.totalorder %s17, 7
    %p143 = por %p141, %p142
    %p145 = scmp.ne.s32.totalorder %s130, %s144
    %p146 = scmp.eq.s32.totalorder %s17, 0
    %p147 = por %p145, %p146
    %s148 = ssub.s32 %s18, %s30
    %p149 = scmp.eq.s32.totalorder %s148, 0
    %s151 = sadd.s32 %s150, 1
    %s152 = scalar_select %p149, %s150, %s151
    %p155 = pneg %p149
    %p156 = scmp.eq.s32.totalorder %s11, 7
    %p157 = por %p155, %p156
    %p158 = scmp.ne.s32.totalorder %s150, %s153
    %p159 = scmp.eq.s32.totalorder %s11, 0
    %p160 = por %p158, %p159
    %p161 = scmp.ne.s32.totalorder %s150, %s153
    %p162 = scmp.eq.s32.totalorder %s16, 7
    %p163 = por %p161, %p162
    %p164 = scmp.ne.s32.totalorder %s153, %s154
    %p165 = scmp.eq.s32.totalorder %s16, 0
    %p166 = por %p164, %p165
    %p167 = scmp.ne.s32.totalorder %s153, %s154
    %p168 = scmp.eq.s32.totalorder %s17, 7
    %p169 = por %p167, %p168
    %p171 = scmp.ne.s32.totalorder %s154, %s170
    %p172 = scmp.eq.s32.totalorder %s17, 0
    %p173 = por %p171, %p172
    %p174 = scmp.le.s32.totalorder 1, %s11
    %p175 = scmp.lt.s32.totalorder %s11, 9
    %p176 = pnand %p174, %p175
    %p177 = pneg %p176
    // Predicated region
    $region9: #{rep_forward.3} parent=5 // pred_check
      _
    $region10: #{rep_forward.3} parent=5 // pred_check_branch
      %179 = sbr.rel (%p176) target = $region12
    $region11: #{rep_forward.3} parent=5 // pred_region
      %s180 = ssub.s32 %s11, 1
      // Predicated region
      $region13: #{rep_forward.3} parent=11 // pred_check
        %p181 = pneg %p98
      $region14: #{rep_forward.3} parent=11 // pred_check_branch
        %183 = sbr.rel (%p181) target = $region16
      $region15: #{rep_forward.3} parent=11 // pred_region
        _
      $region16: #{rep_forward.3} parent=11 // pred_fallthru
        _
      // Predicated region
      $region17: #{rep_forward.3} parent=11 // pred_check
        %p184 = pneg %p119
      $region18: #{rep_forward.3} parent=11 // pred_check_branch
        %186 = sbr.rel (%p184) target = $region20
      $region19: #{rep_forward.3} parent=11 // pred_region
        _
      $region20: #{rep_forward.3} parent=11 // pred_fallthru
        _
      // Predicated region
      $region21: #{rep_forward.3} parent=11 // pred_check
        %p187 = pneg %p140
      $region22: #{rep_forward.3} parent=11 // pred_check_branch
        %189 = sbr.rel (%p187) target = $region24
      $region23: #{rep_forward.3} parent=11 // pred_region
        _
      $region24: #{rep_forward.3} parent=11 // pred_fallthru
        _
    $region12: #{rep_forward.3} parent=5 // pred_fallthru
      _
    %p190 = scmp.lt.s32.totalorder %s11, 8
    // Predicated region
    $region25: #{rep_forward.3} parent=5 // pred_check
      %p191 = pneg %p190
    $region26: #{rep_forward.3} parent=5 // pred_check_branch
      %193 = sbr.rel (%p191) target = $region28
    $region27: #{rep_forward.3} parent=5 // pred_region
      // Predicated region
      $region29: #{rep_forward.3} parent=27 // pred_check
        %p194 = pneg %p45
      $region30: #{rep_forward.3} parent=27 // pred_check_branch
        %196 = sbr.rel (%p194) target = $region32
      $region31: #{rep_forward.3} parent=27 // pred_region
        %s197 = smul.u32 4, %s19
        %p198 = scmp.lt.s32.totalorder %s18, 0
        %s199 = scalar_select %p198, %s18, 0
        %p200 = scmp.lt.s32.totalorder %s197, 31
        %s201 = scalar_select %p200, %s197, 31
        %s202 = smul.addr %s199, 32
        %s203 = sadd.s32 %s201, %s202
        %s204 = smul.addr %s203, 4
        %s205 = scalar_lea.vmem %s0, %s204
        %s206 = smul.u32 4, %s19
      $region32: #{rep_forward.3} parent=27 // pred_fallthru
        _
      // Predicated region
      $region33: #{rep_forward.3} parent=27 // pred_check
        %p207 = pneg %p71
      $region34: #{rep_forward.3} parent=27 // pred_check_branch
        %209 = sbr.rel (%p207) target = $region36
      $region35: #{rep_forward.3} parent=27 // pred_region
        %s210 = smul.u32 64, %s19
        %p211 = scmp.lt.s32.totalorder %s210, 511
        %s212 = scalar_select %p211, %s210, 511
        %s213 = smul.addr %s212, 3
        %s214 = smul.addr %s213, 4
        %s215 = scalar_lea.vmem %s1, %s214
        %s216 = smul.u32 64, %s19
      $region36: #{rep_forward.3} parent=27 // pred_fallthru
        _
    $region28: #{rep_forward.3} parent=5 // pred_fallthru
      _
    %p217 = scmp.le.s32.totalorder 1, %s11
    %p218 = scmp.lt.s32.totalorder %s11, 9
    %p219 = pnand %p217, %p218
    %p220 = pneg %p219
    // Predicated region
    $region37: #{rep_forward.3} parent=5 // pred_check
      _
    $region38: #{rep_forward.3} parent=5 // pred_check_branch
      %222 = sbr.rel (%p219) target = $region40
    $region39: #{rep_forward.3} parent=5 // pred_region
      %s223 = ssub.s32 %s11, 1
      %s224 = smul.u32 4, %s21
      %p225 = scmp.lt.s32.totalorder %s20, 0
      %s226 = scalar_select %p225, %s20, 0
      %p227 = scmp.lt.s32.totalorder %s224, 31
      %s228 = scalar_select %p227, %s224, 31
      %s229 = smul.addr %s226, 32
      %s230 = sadd.s32 %s228, %s229
      %s231 = smul.addr %s230, 4
      %s232 = scalar_lea.vmem %s0, %s231
      %p233 = pneg %p51
      %p234 = pneg %p48
      %s235 = smul.u32 64, %s21
      %p236 = scmp.lt.s32.totalorder %s235, 511
      %s237 = scalar_select %p236, %s235, 511
      %s238 = smul.addr %s237, 3
      %s239 = smul.addr %s238, 4
      %s240 = scalar_lea.vmem %s1, %s239
      %p241 = pneg %p77
      %p242 = pneg %p74
      %p243 = pneg %p98
      %p244 = pneg %p95
      %p245 = pneg %p119
      %p246 = pneg %p116
      %p247 = pneg %p140
      %p248 = pneg %p137
      %p249 = pneg %p166
      %p250 = pneg %p163
      %p251 = scmp.lt.s32.totalorder %s20, 0
      %s252 = scalar_select %p251, %s20, 0
      %s253 = smul.addr %s252, 2
      %s254 = smul.addr %s253, 8
      %s255 = scalar_lea.vmem %s5, %s254
      %s256 = smul.u32 4, %s21
      %p257 = scmp.lt.s32.totalorder %s20, 0
      %s258 = scalar_select %p257, %s20, 0
      %p259 = scmp.lt.s32.totalorder %s256, 31
      %s260 = scalar_select %p259, %s256, 31
      %s261 = smul.addr %s258, 32
      %s262 = sadd.s32 %s260, %s261
      %s263 = smul.addr %s262, 4
      %s264 = scalar_lea.vmem %s0, %s263
      %s265 = smul.u32 4, %s21
      %s266 = smul.u32 64, %s21
      %p267 = scmp.lt.s32.totalorder %s266, 511
      %s268 = scalar_select %p267, %s266, 511
      %s269 = smul.addr %s268, 3
      %s270 = smul.addr %s269, 4
      %s271 = scalar_lea.vmem %s1, %s270
      %s272 = smul.u32 64, %s21
      %p273 = scmp.lt.s32.totalorder %s20, 0
      %s274 = scalar_select %p273, %s20, 0
      %s275 = smul.addr %s274, 2
      %s276 = smul.addr %s275, 8
      %s277 = scalar_lea.vmem %s5, %s276
      %p278 = scmp.eq.s32.totalorder %s21, 0
      // Predicated region
      $region41: #{rep_forward.3} parent=39 // pred_check
        %p279 = pneg %p278
      $region42: #{rep_forward.3} parent=39 // pred_check_branch
        %281 = sbr.rel (%p279) target = $region44
      $region43: #{rep_forward.3} parent=39 // pred_region
        %282 = vst [vmem:[#allocation2] sm:$0xff] 0.0
        %283 = vst [vmem:[#allocation2 + $0x8] sm:$0xff] 0.0
        %284 = vst [vmem:[#allocation2 + $0x10] sm:$0xff] 0.0
      $region44: #{rep_forward.3} parent=39 // pred_fallthru
        _
      %v285 = vld [vmem:[#allocation2] sm:$0xff]
      %v286 = vld [vmem:[#allocation2 + $0x8] sm:$0xff]
      %v287 = vld [vmem:[#allocation2 + $0x10] sm:$0xff]
      %v288 = vld [vmem:[%s264] sm:$0xff]
      %v289 = vld [vmem:[%s264 + $0x8] sm:$0xff]
      %v290 = vld [vmem:[%s271] sm:$0xff]
      %v291 = vld [vmem:[%s271 + $0x8] sm:$0xf]
      %v292 = vld [vmem:[%s271 + $0xc] sm:$0xff]
      %v293 = vld [vmem:[%s271 + $0x14] sm:$0xf]
      %v294 = vld [vmem:[%s271 + $0x18] sm:$0xff]
      %v295 = vld [vmem:[%s271 + $0x20] sm:$0xf]
      %v296 = vld [vmem:[%s271 + $0x24] sm:$0xff]
      %v297 = vld [vmem:[%s271 + $0x2c] sm:$0xf]
      %v298 = vld [vmem:[%s271 + $0x30] sm:$0xff]
      %v299 = vld [vmem:[%s271 + $0x38] sm:$0xf]
      %v300 = vld [vmem:[%s271 + $0x3c] sm:$0xff]
      %v301 = vld [vmem:[%s271 + $0x44] sm:$0xf]
      %v302 = vld [vmem:[%s271 + $0x48] sm:$0xff]
      %v303 = vld [vmem:[%s271 + $0x50] sm:$0xf]
      %v304 = vld [vmem:[%s271 + $0x54] sm:$0xff]
      %v305 = vld [vmem:[%s271 + $0x5c] sm:$0xf]
      %v306 = vld [vmem:[%s271 + $0x60] sm:$0xff]
      %v307 = vld [vmem:[%s271 + $0x68] sm:$0xf]
      %v308 = vld [vmem:[%s271 + $0x6c] sm:$0xff]
      %v309 = vld [vmem:[%s271 + $0x74] sm:$0xf]
      %v310 = vld [vmem:[%s271 + $0x78] sm:$0xff]
      %v311 = vld [vmem:[%s271 + $0x80] sm:$0xf]
      %v312 = vld [vmem:[%s271 + $0x84] sm:$0xff]
      %v313 = vld [vmem:[%s271 + $0x8c] sm:$0xf]
      %v314 = vld [vmem:[%s271 + $0x90] sm:$0xff]
      %v315 = vld [vmem:[%s271 + $0x98] sm:$0xf]
      %v316 = vld [vmem:[%s271 + $0x9c] sm:$0xff]
      %v317 = vld [vmem:[%s271 + $0xa4] sm:$0xf]
      %v318 = vld [vmem:[%s271 + $0xa8] sm:$0xff]
      %v319 = vld [vmem:[%s271 + $0xb0] sm:$0xf]
      %v320 = vld [vmem:[%s271 + $0xb4] sm:$0xff]
      %v321 = vld [vmem:[%s271 + $0xbc] sm:$0xf]
      %v322 = vld [vmem:[%s271 + $0xc0] sm:$0xff]
      %v323 = vld [vmem:[%s271 + $0xc8] sm:$0xf]
      %v324 = vld [vmem:[%s271 + $0xcc] sm:$0xff]
      %v325 = vld [vmem:[%s271 + $0xd4] sm:$0xf]
      %v326 = vld [vmem:[%s271 + $0xd8] sm:$0xff]
      %v327 = vld [vmem:[%s271 + $0xe0] sm:$0xf]
      %v328 = vld [vmem:[%s271 + $0xe4] sm:$0xff]
      %v329 = vld [vmem:[%s271 + $0xec] sm:$0xf]
      %v330 = vld [vmem:[%s271 + $0xf0] sm:$0xff]
      %v331 = vld [vmem:[%s271 + $0xf8] sm:$0xf]
      %v332 = vld [vmem:[%s271 + $0xfc] sm:$0xff]
      %v333 = vld [vmem:[%s271 + $0x104] sm:$0xf]
      %v334 = vld [vmem:[%s271 + $0x108] sm:$0xff]
      %v335 = vld [vmem:[%s271 + $0x110] sm:$0xf]
      %v336 = vld [vmem:[%s271 + $0x114] sm:$0xff]
      %v337 = vld [vmem:[%s271 + $0x11c] sm:$0xf]
      %v338 = vld [vmem:[%s271 + $0x120] sm:$0xff]
      %v339 = vld [vmem:[%s271 + $0x128] sm:$0xf]
      %v340 = vld [vmem:[%s271 + $0x12c] sm:$0xff]
      %v341 = vld [vmem:[%s271 + $0x134] sm:$0xf]
      %v342 = vld [vmem:[%s271 + $0x138] sm:$0xff]
      %v343 = vld [vmem:[%s271 + $0x140] sm:$0xf]
      %v344 = vld [vmem:[%s271 + $0x144] sm:$0xff]
      %v345 = vld [vmem:[%s271 + $0x14c] sm:$0xf]
      %v346 = vld [vmem:[%s271 + $0x150] sm:$0xff]
      %v347 = vld [vmem:[%s271 + $0x158] sm:$0xf]
      %v348 = vld [vmem:[%s271 + $0x15c] sm:$0xff]
      %v349 = vld [vmem:[%s271 + $0x164] sm:$0xf]
      %v350 = vld [vmem:[%s271 + $0x168] sm:$0xff]
      %v351 = vld [vmem:[%s271 + $0x170] sm:$0xf]
      %v352 = vld [vmem:[%s271 + $0x174] sm:$0xff]
      %v353 = vld [vmem:[%s271 + $0x17c] sm:$0xf]
      %v354 = vld [vmem:[%s271 + $0x180] sm:$0xff]
      %v355 = vld [vmem:[%s271 + $0x188] sm:$0xf]
      %v356 = vld [vmem:[%s271 + $0x18c] sm:$0xff]
      %v357 = vld [vmem:[%s271 + $0x194] sm:$0xf]
      %v358 = vld [vmem:[%s271 + $0x198] sm:$0xff]
      %v359 = vld [vmem:[%s271 + $0x1a0] sm:$0xf]
      %v360 = vld [vmem:[%s271 + $0x1a4] sm:$0xff]
      %v361 = vld [vmem:[%s271 + $0x1ac] sm:$0xf]
      %v362 = vld [vmem:[%s271 + $0x1b0] sm:$0xff]
      %v363 = vld [vmem:[%s271 + $0x1b8] sm:$0xf]
      %v364 = vld [vmem:[%s271 + $0x1bc] sm:$0xff]
      %v365 = vld [vmem:[%s271 + $0x1c4] sm:$0xf]
      %v366 = vld [vmem:[%s271 + $0x1c8] sm:$0xff]
      %v367 = vld [vmem:[%s271 + $0x1d0] sm:$0xf]
      %v368 = vld [vmem:[%s271 + $0x1d4] sm:$0xff]
      %v369 = vld [vmem:[%s271 + $0x1dc] sm:$0xf]
      %v370 = vld [vmem:[%s271 + $0x1e0] sm:$0xff]
      %v371 = vld [vmem:[%s271 + $0x1e8] sm:$0xf]
      %v372 = vld [vmem:[%s271 + $0x1ec] sm:$0xff]
      %v373 = vld [vmem:[%s271 + $0x1f4] sm:$0xf]
      %v374 = vld [vmem:[%s271 + $0x1f8] sm:$0xff]
      %v375 = vld [vmem:[%s271 + $0x200] sm:$0xf]
      %v376 = vld [vmem:[%s271 + $0x204] sm:$0xff]
      %v377 = vld [vmem:[%s271 + $0x20c] sm:$0xf]
      %v378 = vld [vmem:[%s271 + $0x210] sm:$0xff]
      %v379 = vld [vmem:[%s271 + $0x218] sm:$0xf]
      %v380 = vld [vmem:[%s271 + $0x21c] sm:$0xff]
      %v381 = vld [vmem:[%s271 + $0x224] sm:$0xf]
      %v382 = vld [vmem:[%s271 + $0x228] sm:$0xff]
      %v383 = vld [vmem:[%s271 + $0x230] sm:$0xf]
      %v384 = vld [vmem:[%s271 + $0x234] sm:$0xff]
      %v385 = vld [vmem:[%s271 + $0x23c] sm:$0xf]
      %v386 = vld [vmem:[%s271 + $0x240] sm:$0xff]
      %v387 = vld [vmem:[%s271 + $0x248] sm:$0xf]
      %v388 = vld [vmem:[%s271 + $0x24c] sm:$0xff]
      %v389 = vld [vmem:[%s271 + $0x254] sm:$0xf]
      %v390 = vld [vmem:[%s271 + $0x258] sm:$0xff]
      %v391 = vld [vmem:[%s271 + $0x260] sm:$0xf]
      %v392 = vld [vmem:[%s271 + $0x264] sm:$0xff]
      %v393 = vld [vmem:[%s271 + $0x26c] sm:$0xf]
      %v394 = vld [vmem:[%s271 + $0x270] sm:$0xff]
      %v395 = vld [vmem:[%s271 + $0x278] sm:$0xf]
      %v396 = vld [vmem:[%s271 + $0x27c] sm:$0xff]
      %v397 = vld [vmem:[%s271 + $0x284] sm:$0xf]
      %v398 = vld [vmem:[%s271 + $0x288] sm:$0xff]
      %v399 = vld [vmem:[%s271 + $0x290] sm:$0xf]
      %v400 = vld [vmem:[%s271 + $0x294] sm:$0xff]
      %v401 = vld [vmem:[%s271 + $0x29c] sm:$0xf]
      %v402 = vld [vmem:[%s271 + $0x2a0] sm:$0xff]
      %v403 = vld [vmem:[%s271 + $0x2a8] sm:$0xf]
      %v404 = vld [vmem:[%s271 + $0x2ac] sm:$0xff]
      %v405 = vld [vmem:[%s271 + $0x2b4] sm:$0xf]
      %v406 = vld [vmem:[%s271 + $0x2b8] sm:$0xff]
      %v407 = vld [vmem:[%s271 + $0x2c0] sm:$0xf]
      %v408 = vld [vmem:[%s271 + $0x2c4] sm:$0xff]
      %v409 = vld [vmem:[%s271 + $0x2cc] sm:$0xf]
      %v410 = vld [vmem:[%s271 + $0x2d0] sm:$0xff]
      %v411 = vld [vmem:[%s271 + $0x2d8] sm:$0xf]
      %v412 = vld [vmem:[%s271 + $0x2dc] sm:$0xff]
      %v413 = vld [vmem:[%s271 + $0x2e4] sm:$0xf]
      %v414 = vld [vmem:[%s271 + $0x2e8] sm:$0xff]
      %v415 = vld [vmem:[%s271 + $0x2f0] sm:$0xf]
      %v416 = vld [vmem:[%s271 + $0x2f4] sm:$0xff]
      %v417 = vld [vmem:[%s271 + $0x2fc] sm:$0xf]
      %v420 = vunpack.c.l.b16 %v288
      %v421 = vunpack.c.h.b16 %v288
      %v422 = vunpack.c.l.b16 %v289
      %v423 = vunpack.c.h.b16 %v289
      %v424 = vpack.c.b16 %v420, %v420
      %v425 = vpack.c.b16 %v421, %v421
      %v426 = vpack.c.b16 %v422, %v422
      %v427 = vpack.c.b16 %v423, %v423
      %v560 = vunpack.c.l.b16 %v290
      %v561 = vunpack.c.h.b16 %v290
      %v562 = vunpack.c.l.b16 %v291
      %v563 = vunpack.c.l.b16 %v292
      %v564 = vunpack.c.h.b16 %v292
      %v565 = vunpack.c.l.b16 %v293
      %v566 = vunpack.c.l.b16 %v294
      %v567 = vunpack.c.h.b16 %v294
      %v568 = vunpack.c.l.b16 %v295
      %v569 = vunpack.c.l.b16 %v296
      %v570 = vunpack.c.h.b16 %v296
      %v571 = vunpack.c.l.b16 %v297
      %v572 = vunpack.c.l.b16 %v298
      %v573 = vunpack.c.h.b16 %v298
      %v574 = vunpack.c.l.b16 %v299
      %v575 = vunpack.c.l.b16 %v300
      %v576 = vunpack.c.h.b16 %v300
      %v577 = vunpack.c.l.b16 %v301
      %v578 = vunpack.c.l.b16 %v302
      %v579 = vunpack.c.h.b16 %v302
      %v580 = vunpack.c.l.b16 %v303
      %v581 = vunpack.c.l.b16 %v304
      %v582 = vunpack.c.h.b16 %v304
      %v583 = vunpack.c.l.b16 %v305
      %v584 = vunpack.c.l.b16 %v306
      %v585 = vunpack.c.h.b16 %v306
      %v586 = vunpack.c.l.b16 %v307
      %v587 = vunpack.c.l.b16 %v308
      %v588 = vunpack.c.h.b16 %v308
      %v589 = vunpack.c.l.b16 %v309
      %v590 = vunpack.c.l.b16 %v310
      %v591 = vunpack.c.h.b16 %v310
      %v592 = vunpack.c.l.b16 %v311
      %v593 = vunpack.c.l.b16 %v312
      %v594 = vunpack.c.h.b16 %v312
      %v595 = vunpack.c.l.b16 %v313
      %v596 = vunpack.c.l.b16 %v314
      %v597 = vunpack.c.h.b16 %v314
      %v598 = vunpack.c.l.b16 %v315
      %v599 = vunpack.c.l.b16 %v316
      %v600 = vunpack.c.h.b16 %v316
      %v601 = vunpack.c.l.b16 %v317
      %v602 = vunpack.c.l.b16 %v318
      %v603 = vunpack.c.h.b16 %v318
      %v604 = vunpack.c.l.b16 %v319
      %v605 = vunpack.c.l.b16 %v320
      %v606 = vunpack.c.h.b16 %v320
      %v607 = vunpack.c.l.b16 %v321
      %v608 = vunpack.c.l.b16 %v322
      %v609 = vunpack.c.h.b16 %v322
      %v610 = vunpack.c.l.b16 %v323
      %v611 = vunpack.c.l.b16 %v324
      %v612 = vunpack.c.h.b16 %v324
      %v613 = vunpack.c.l.b16 %v325
      %v614 = vunpack.c.l.b16 %v326
      %v615 = vunpack.c.h.b16 %v326
      %v616 = vunpack.c.l.b16 %v327
      %v617 = vunpack.c.l.b16 %v328
      %v618 = vunpack.c.h.b16 %v328
      %v619 = vunpack.c.l.b16 %v329
      %v620 = vunpack.c.l.b16 %v330
      %v621 = vunpack.c.h.b16 %v330
      %v622 = vunpack.c.l.b16 %v331
      %v623 = vunpack.c.l.b16 %v332
      %v624 = vunpack.c.h.b16 %v332
      %v625 = vunpack.c.l.b16 %v333
      %v626 = vunpack.c.l.b16 %v334
      %v627 = vunpack.c.h.b16 %v334
      %v628 = vunpack.c.l.b16 %v335
      %v629 = vunpack.c.l.b16 %v336
      %v630 = vunpack.c.h.b16 %v336
      %v631 = vunpack.c.l.b16 %v337
      %v632 = vunpack.c.l.b16 %v338
      %v633 = vunpack.c.h.b16 %v338
      %v634 = vunpack.c.l.b16 %v339
      %v635 = vunpack.c.l.b16 %v340
      %v636 = vunpack.c.h.b16 %v340
      %v637 = vunpack.c.l.b16 %v341
      %v638 = vunpack.c.l.b16 %v342
      %v639 = vunpack.c.h.b16 %v342
      %v640 = vunpack.c.l.b16 %v343
      %v641 = vunpack.c.l.b16 %v344
      %v642 = vunpack.c.h.b16 %v344
      %v643 = vunpack.c.l.b16 %v345
      %v644 = vunpack.c.l.b16 %v346
      %v645 = vunpack.c.h.b16 %v346
      %v646 = vunpack.c.l.b16 %v347
      %v647 = vunpack.c.l.b16 %v348
      %v648 = vunpack.c.h.b16 %v348
      %v649 = vunpack.c.l.b16 %v349
      %v650 = vunpack.c.l.b16 %v350
      %v651 = vunpack.c.h.b16 %v350
      %v652 = vunpack.c.l.b16 %v351
      %v653 = vunpack.c.l.b16 %v352
      %v654 = vunpack.c.h.b16 %v352
      %v655 = vunpack.c.l.b16 %v353
      %v656 = vunpack.c.l.b16 %v354
      %v657 = vunpack.c.h.b16 %v354
      %v658 = vunpack.c.l.b16 %v355
      %v659 = vunpack.c.l.b16 %v356
      %v660 = vunpack.c.h.b16 %v356
      %v661 = vunpack.c.l.b16 %v357
      %v662 = vunpack.c.l.b16 %v358
      %v663 = vunpack.c.h.b16 %v358
      %v664 = vunpack.c.l.b16 %v359
      %v665 = vunpack.c.l.b16 %v360
      %v666 = vunpack.c.h.b16 %v360
      %v667 = vunpack.c.l.b16 %v361
      %v668 = vunpack.c.l.b16 %v362
      %v669 = vunpack.c.h.b16 %v362
      %v670 = vunpack.c.l.b16 %v363
      %v671 = vunpack.c.l.b16 %v364
      %v672 = vunpack.c.h.b16 %v364
      %v673 = vunpack.c.l.b16 %v365
      %v674 = vunpack.c.l.b16 %v366
      %v675 = vunpack.c.h.b16 %v366
      %v676 = vunpack.c.l.b16 %v367
      %v677 = vunpack.c.l.b16 %v368
      %v678 = vunpack.c.h.b16 %v368
      %v679 = vunpack.c.l.b16 %v369
      %v680 = vunpack.c.l.b16 %v370
      %v681 = vunpack.c.h.b16 %v370
      %v682 = vunpack.c.l.b16 %v371
      %v683 = vunpack.c.l.b16 %v372
      %v684 = vunpack.c.h.b16 %v372
      %v685 = vunpack.c.l.b16 %v373
      %v686 = vunpack.c.l.b16 %v374
      %v687 = vunpack.c.h.b16 %v374
      %v688 = vunpack.c.l.b16 %v375
      %v689 = vunpack.c.l.b16 %v376
      %v690 = vunpack.c.h.b16 %v376
      %v691 = vunpack.c.l.b16 %v377
      %v692 = vunpack.c.l.b16 %v378
      %v693 = vunpack.c.h.b16 %v378
      %v694 = vunpack.c.l.b16 %v379
      %v695 = vunpack.c.l.b16 %v380
      %v696 = vunpack.c.h.b16 %v380
      %v697 = vunpack.c.l.b16 %v381
      %v698 = vunpack.c.l.b16 %v382
      %v699 = vunpack.c.h.b16 %v382
      %v700 = vunpack.c.l.b16 %v383
      %v701 = vunpack.c.l.b16 %v384
      %v702 = vunpack.c.h.b16 %v384
      %v703 = vunpack.c.l.b16 %v385
      %v704 = vunpack.c.l.b16 %v386
      %v705 = vunpack.c.h.b16 %v386
      %v706 = vunpack.c.l.b16 %v387
      %v707 = vunpack.c.l.b16 %v388
      %v708 = vunpack.c.h.b16 %v388
      %v709 = vunpack.c.l.b16 %v389
      %v710 = vunpack.c.l.b16 %v390
      %v711 = vunpack.c.h.b16 %v390
      %v712 = vunpack.c.l.b16 %v391
      %v713 = vunpack.c.l.b16 %v392
      %v714 = vunpack.c.h.b16 %v392
      %v715 = vunpack.c.l.b16 %v393
      %v716 = vunpack.c.l.b16 %v394
      %v717 = vunpack.c.h.b16 %v394
      %v718 = vunpack.c.l.b16 %v395
      %v719 = vunpack.c.l.b16 %v396
      %v720 = vunpack.c.h.b16 %v396
      %v721 = vunpack.c.l.b16 %v397
      %v722 = vunpack.c.l.b16 %v398
      %v723 = vunpack.c.h.b16 %v398
      %v724 = vunpack.c.l.b16 %v399
      %v725 = vunpack.c.l.b16 %v400
      %v726 = vunpack.c.h.b16 %v400
      %v727 = vunpack.c.l.b16 %v401
      %v728 = vunpack.c.l.b16 %v402
      %v729 = vunpack.c.h.b16 %v402
      %v730 = vunpack.c.l.b16 %v403
      %v731 = vunpack.c.l.b16 %v404
      %v732 = vunpack.c.h.b16 %v404
      %v733 = vunpack.c.l.b16 %v405
      %v734 = vunpack.c.l.b16 %v406
      %v735 = vunpack.c.h.b16 %v406
      %v736 = vunpack.c.l.b16 %v407
      %v737 = vunpack.c.l.b16 %v408
      %v738 = vunpack.c.h.b16 %v408
      %v739 = vunpack.c.l.b16 %v409
      %v740 = vunpack.c.l.b16 %v410
      %v741 = vunpack.c.h.b16 %v410
      %v742 = vunpack.c.l.b16 %v411
      %v743 = vunpack.c.l.b16 %v412
      %v744 = vunpack.c.h.b16 %v412
      %v745 = vunpack.c.l.b16 %v413
      %v746 = vunpack.c.l.b16 %v414
      %v747 = vunpack.c.h.b16 %v414
      %v748 = vunpack.c.l.b16 %v415
      %v749 = vunpack.c.l.b16 %v416
      %v750 = vunpack.c.h.b16 %v416
      %v751 = vunpack.c.l.b16 %v417
      %v752 = vpack.c.b16 %v563, %v560
      %v753 = vpack.c.b16 %v564, %v561
      %v754 = vpack.c.b16 %v565, %v562
      %v755 = vpack.c.b16 %v569, %v566
      %v756 = vpack.c.b16 %v570, %v567
      %v757 = vpack.c.b16 %v571, %v568
      %v758 = vpack.c.b16 %v575, %v572
      %v759 = vpack.c.b16 %v576, %v573
      %v760 = vpack.c.b16 %v577, %v574
      %v761 = vpack.c.b16 %v581, %v578
      %v762 = vpack.c.b16 %v582, %v579
      %v763 = vpack.c.b16 %v583, %v580
      %v764 = vpack.c.b16 %v587, %v584
      %v765 = vpack.c.b16 %v588, %v585
      %v766 = vpack.c.b16 %v589, %v586
      %v767 = vpack.c.b16 %v593, %v590
      %v768 = vpack.c.b16 %v594, %v591
      %v769 = vpack.c.b16 %v595, %v592
      %v770 = vpack.c.b16 %v599, %v596
      %v771 = vpack.c.b16 %v600, %v597
      %v772 = vpack.c.b16 %v601, %v598
      %v773 = vpack.c.b16 %v605, %v602
      %v774 = vpack.c.b16 %v606, %v603
      %v775 = vpack.c.b16 %v607, %v604
      %v776 = vpack.c.b16 %v611, %v608
      %v777 = vpack.c.b16 %v612, %v609
      %v778 = vpack.c.b16 %v613, %v610
      %v779 = vpack.c.b16 %v617, %v614
      %v780 = vpack.c.b16 %v618, %v615
      %v781 = vpack.c.b16 %v619, %v616
      %v782 = vpack.c.b16 %v623, %v620
      %v783 = vpack.c.b16 %v624, %v621
      %v784 = vpack.c.b16 %v625, %v622
      %v785 = vpack.c.b16 %v629, %v626
      %v786 = vpack.c.b16 %v630, %v627
      %v787 = vpack.c.b16 %v631, %v628
      %v788 = vpack.c.b16 %v635, %v632
      %v789 = vpack.c.b16 %v636, %v633
      %v790 = vpack.c.b16 %v637, %v634
      %v791 = vpack.c.b16 %v641, %v638
      %v792 = vpack.c.b16 %v642, %v639
      %v793 = vpack.c.b16 %v643, %v640
      %v794 = vpack.c.b16 %v647, %v644
      %v795 = vpack.c.b16 %v648, %v645
      %v796 = vpack.c.b16 %v649, %v646
      %v797 = vpack.c.b16 %v653, %v650
      %v798 = vpack.c.b16 %v654, %v651
      %v799 = vpack.c.b16 %v655, %v652
      %v800 = vpack.c.b16 %v659, %v656
      %v801 = vpack.c.b16 %v660, %v657
      %v802 = vpack.c.b16 %v661, %v658
      %v803 = vpack.c.b16 %v665, %v662
      %v804 = vpack.c.b16 %v666, %v663
      %v805 = vpack.c.b16 %v667, %v664
      %v806 = vpack.c.b16 %v671, %v668
      %v807 = vpack.c.b16 %v672, %v669
      %v808 = vpack.c.b16 %v673, %v670
      %v809 = vpack.c.b16 %v677, %v674
      %v810 = vpack.c.b16 %v678, %v675
      %v811 = vpack.c.b16 %v679, %v676
      %v812 = vpack.c.b16 %v683, %v680
      %v813 = vpack.c.b16 %v684, %v681
      %v814 = vpack.c.b16 %v685, %v682
      %v815 = vpack.c.b16 %v689, %v686
      %v816 = vpack.c.b16 %v690, %v687
      %v817 = vpack.c.b16 %v691, %v688
      %v818 = vpack.c.b16 %v695, %v692
      %v819 = vpack.c.b16 %v696, %v693
      %v820 = vpack.c.b16 %v697, %v694
      %v821 = vpack.c.b16 %v701, %v698
      %v822 = vpack.c.b16 %v702, %v699
      %v823 = vpack.c.b16 %v703, %v700
      %v824 = vpack.c.b16 %v707, %v704
      %v825 = vpack.c.b16 %v708, %v705
      %v826 = vpack.c.b16 %v709, %v706
      %v827 = vpack.c.b16 %v713, %v710
      %v828 = vpack.c.b16 %v714, %v711
      %v829 = vpack.c.b16 %v715, %v712
      %v830 = vpack.c.b16 %v719, %v716
      %v831 = vpack.c.b16 %v720, %v717
      %v832 = vpack.c.b16 %v721, %v718
      %v833 = vpack.c.b16 %v725, %v722
      %v834 = vpack.c.b16 %v726, %v723
      %v835 = vpack.c.b16 %v727, %v724
      %v836 = vpack.c.b16 %v731, %v728
      %v837 = vpack.c.b16 %v732, %v729
      %v838 = vpack.c.b16 %v733, %v730
      %v839 = vpack.c.b16 %v737, %v734
      %v840 = vpack.c.b16 %v738, %v735
      %v841 = vpack.c.b16 %v739, %v736
      %v842 = vpack.c.b16 %v743, %v740
      %v843 = vpack.c.b16 %v744, %v741
      %v844 = vpack.c.b16 %v745, %v742
      %v845 = vpack.c.b16 %v749, %v746
      %v846 = vpack.c.b16 %v750, %v747
      %v847 = vpack.c.b16 %v751, %v748
      %944 = vmatpush.bf16.msra.mxu0 %v773
      %945 = vmatpush.bf16.msra.mxu0 %v770
      %946 = vmatpush.bf16.msra.mxu0 %v767
      %947 = vmatpush.bf16.msra.mxu0 %v764
      %948 = vmatpush.bf16.msra.mxu0 %v761
      %949 = vmatpush.bf16.msra.mxu0 %v758
      %950 = vmatpush.bf16.msra.mxu0 %v755
      %951 = vmatpush.bf16.msra.mxu0 %v752
      %952 = vmatmul.bf16.gmra.mxu0 %v424
      %v953 = vpop.f32.mrf.mxu0
      %v954 = vadd.f32 0.0, %v953
      %v955 = vpop.f32.mrf.mxu0
      %956 = vdwg.mxu0
      %957 = vmatpush.bf16.msra.mxu0 %v797
      %958 = vmatpush.bf16.msra.mxu0 %v794
      %959 = vmatpush.bf16.msra.mxu0 %v791
      %960 = vmatpush.bf16.msra.mxu0 %v788
      %961 = vmatpush.bf16.msra.mxu0 %v785
      %962 = vmatpush.bf16.msra.mxu0 %v782
      %963 = vmatpush.bf16.msra.mxu0 %v779
      %964 = vmatpush.bf16.msra.mxu0 %v776
      %965 = vmatmul.bf16.gmra.mxu0 %v425
      %v966 = vpop.f32.mrf.mxu0
      %v967 = vadd.f32 %v954, %v966
      %v968 = vpop.f32.mrf.mxu0
      %969 = vdwg.mxu0
      %970 = vmatpush.bf16.msra.mxu0 %v821
      %971 = vmatpush.bf16.msra.mxu0 %v818
      %972 = vmatpush.bf16.msra.mxu0 %v815
      %973 = vmatpush.bf16.msra.mxu0 %v812
      %974 = vmatpush.bf16.msra.mxu0 %v809
      %975 = vmatpush.bf16.msra.mxu0 %v806
      %976 = vmatpush.bf16.msra.mxu0 %v803
      %977 = vmatpush.bf16.msra.mxu0 %v800
      %978 = vmatmul.bf16.gmra.mxu0 %v426
      %v979 = vpop.f32.mrf.mxu0
      %v980 = vadd.f32 %v967, %v979
      %v981 = vpop.f32.mrf.mxu0
      %982 = vdwg.mxu0
      %983 = vmatpush.bf16.msra.mxu0 %v845
      %984 = vmatpush.bf16.msra.mxu0 %v842
      %985 = vmatpush.bf16.msra.mxu0 %v839
      %986 = vmatpush.bf16.msra.mxu0 %v836
      %987 = vmatpush.bf16.msra.mxu0 %v833
      %988 = vmatpush.bf16.msra.mxu0 %v830
      %989 = vmatpush.bf16.msra.mxu0 %v827
      %990 = vmatpush.bf16.msra.mxu0 %v824
      %991 = vmatmul.bf16.gmra.mxu0 %v427
      %v992 = vpop.f32.mrf.mxu0
      %v993 = vadd.f32 %v980, %v992
      %v994 = vpop.f32.mrf.mxu0
      %995 = vdwg.mxu0
      %996 = vmatpush.bf16.msra.mxu0 %v774
      %997 = vmatpush.bf16.msra.mxu0 %v771
      %998 = vmatpush.bf16.msra.mxu0 %v768
      %999 = vmatpush.bf16.msra.mxu0 %v765
      %1000 = vmatpush.bf16.msra.mxu0 %v762
      %1001 = vmatpush.bf16.msra.mxu0 %v759
      %1002 = vmatpush.bf16.msra.mxu0 %v756
      %1003 = vmatpush.bf16.msra.mxu0 %v753
      %1004 = vmatmul.bf16.gmra.mxu0 %v424
      %v1005 = vpop.f32.mrf.mxu0
      %v1006 = vadd.f32 0.0, %v1005
      %v1007 = vpop.f32.mrf.mxu0
      %1008 = vdwg.mxu0
      %1009 = vmatpush.bf16.msra.mxu0 %v798
      %1010 = vmatpush.bf16.msra.mxu0 %v795
      %1011 = vmatpush.bf16.msra.mxu0 %v792
      %1012 = vmatpush.bf16.msra.mxu0 %v789
      %1013 = vmatpush.bf16.msra.mxu0 %v786
      %1014 = vmatpush.bf16.msra.mxu0 %v783
      %1015 = vmatpush.bf16.msra.mxu0 %v780
      %1016 = vmatpush.bf16.msra.mxu0 %v777
      %1017 = vmatmul.bf16.gmra.mxu0 %v425
      %v1018 = vpop.f32.mrf.mxu0
      %v1019 = vadd.f32 %v1006, %v1018
      %v1020 = vpop.f32.mrf.mxu0
      %1021 = vdwg.mxu0
      %1022 = vmatpush.bf16.msra.mxu0 %v822
      %1023 = vmatpush.bf16.msra.mxu0 %v819
      %1024 = vmatpush.bf16.msra.mxu0 %v816
      %1025 = vmatpush.bf16.msra.mxu0 %v813
      %1026 = vmatpush.bf16.msra.mxu0 %v810
      %1027 = vmatpush.bf16.msra.mxu0 %v807
      %1028 = vmatpush.bf16.msra.mxu0 %v804
      %1029 = vmatpush.bf16.msra.mxu0 %v801
      %1030 = vmatmul.bf16.gmra.mxu0 %v426
      %v1031 = vpop.f32.mrf.mxu0
      %v1032 = vadd.f32 %v1019, %v1031
      %v1033 = vpop.f32.mrf.mxu0
      %1034 = vdwg.mxu0
      %1035 = vmatpush.bf16.msra.mxu0 %v846
      %1036 = vmatpush.bf16.msra.mxu0 %v843
      %1037 = vmatpush.bf16.msra.mxu0 %v840
      %1038 = vmatpush.bf16.msra.mxu0 %v837
      %1039 = vmatpush.bf16.msra.mxu0 %v834
      %1040 = vmatpush.bf16.msra.mxu0 %v831
      %1041 = vmatpush.bf16.msra.mxu0 %v828
      %1042 = vmatpush.bf16.msra.mxu0 %v825
      %1043 = vmatmul.bf16.gmra.mxu0 %v427
      %v1044 = vpop.f32.mrf.mxu0
      %v1045 = vadd.f32 %v1032, %v1044
      %v1046 = vpop.f32.mrf.mxu0
      %1047 = vdwg.mxu0
      %1048 = vmatpush.bf16.msra.mxu0 %v775
      %1049 = vmatpush.bf16.msra.mxu0 %v772
      %1050 = vmatpush.bf16.msra.mxu0 %v769
      %1051 = vmatpush.bf16.msra.mxu0 %v766
      %1052 = vmatpush.bf16.msra.mxu0 %v763
      %1053 = vmatpush.bf16.msra.mxu0 %v760
      %1054 = vmatpush.bf16.msra.mxu0 %v757
      %1055 = vmatpush.bf16.msra.mxu0 %v754
      %1056 = vmatmul.bf16.gmra.mxu0 %v424
      %v1057 = vpop.f32.mrf.mxu0
      %v1058 = vadd.f32 0.0, %v1057
      %v1059 = vpop.f32.mrf.mxu0
      %1060 = vdwg.mxu0
      %1061 = vmatpush.bf16.msra.mxu0 %v799
      %1062 = vmatpush.bf16.msra.mxu0 %v796
      %1063 = vmatpush.bf16.msra.mxu0 %v793
      %1064 = vmatpush.bf16.msra.mxu0 %v790
      %1065 = vmatpush.bf16.msra.mxu0 %v787
      %1066 = vmatpush.bf16.msra.mxu0 %v784
      %1067 = vmatpush.bf16.msra.mxu0 %v781
      %1068 = vmatpush.bf16.msra.mxu0 %v778
      %1069 = vmatmul.bf16.gmra.mxu0 %v425
      %v1070 = vpop.f32.mrf.mxu0
      %v1071 = vadd.f32 %v1058, %v1070
      %v1072 = vpop.f32.mrf.mxu0
      %1073 = vdwg.mxu0
      %1074 = vmatpush.bf16.msra.mxu0 %v823
      %1075 = vmatpush.bf16.msra.mxu0 %v820
      %1076 = vmatpush.bf16.msra.mxu0 %v817
      %1077 = vmatpush.bf16.msra.mxu0 %v814
      %1078 = vmatpush.bf16.msra.mxu0 %v811
      %1079 = vmatpush.bf16.msra.mxu0 %v808
      %1080 = vmatpush.bf16.msra.mxu0 %v805
      %1081 = vmatpush.bf16.msra.mxu0 %v802
      %1082 = vmatmul.bf16.gmra.mxu0 %v426
      %v1083 = vpop.f32.mrf.mxu0
      %v1084 = vadd.f32 %v1071, %v1083
      %v1085 = vpop.f32.mrf.mxu0
      %1086 = vdwg.mxu0
      %1087 = vmatpush.bf16.msra.mxu0 %v847
      %1088 = vmatpush.bf16.msra.mxu0 %v844
      %1089 = vmatpush.bf16.msra.mxu0 %v841
      %1090 = vmatpush.bf16.msra.mxu0 %v838
      %1091 = vmatpush.bf16.msra.mxu0 %v835
      %1092 = vmatpush.bf16.msra.mxu0 %v832
      %1093 = vmatpush.bf16.msra.mxu0 %v829
      %1094 = vmatpush.bf16.msra.mxu0 %v826
      %1095 = vmatmul.bf16.gmra.mxu0 %v427
      %v1096 = vpop.f32.mrf.mxu0
      %v1097 = vadd.f32 %v1084, %v1096
      %v1098 = vpop.f32.mrf.mxu0
      %1099 = vdwg.mxu0
      %v1100 = vadd.f32 %v285, %v993
      %v1101 = vadd.f32 %v286, %v1045
      %v1102 = vadd.f32 %v287, %v1097
      %1103 = vst [vmem:[#allocation2] sm:$0xff] %v1100
      %1104 = vst [vmem:[#allocation2 + $0x8] sm:$0xff] %v1101
      %1105 = vst [vmem:[#allocation2 + $0x10] sm:$0xff] %v1102
      %p1106 = scmp.eq.s32.totalorder %s21, 7
      // Predicated region
      $region45: #{rep_forward.3} parent=39 // pred_check
        %p1107 = pneg %p1106
      $region46: #{rep_forward.3} parent=39 // pred_check_branch
        %1109 = sbr.rel (%p1107) target = $region48
      $region47: #{rep_forward.3} parent=39 // pred_region
        %v1110 = vld [vmem:[#allocation2] sm:$0xff]
        %v1111 = vld [vmem:[#allocation2 + $0x8] sm:$0xff]
        %v1112 = vld [vmem:[#allocation2 + $0x10] sm:$0xff]
        %v1113 = vld [vmem:[%s2] sm:$0x7]
        %v1115 = vperm.slane %v1113, 0
        %v1116 = vperm.slane %v1113, 1
        %v1117 = vperm.slane %v1113, 2
        %v1121 = vadd.f32 %v1110, %v1115
        %v1122 = vadd.f32 %v1111, %v1116
        %v1123 = vadd.f32 %v1112, %v1117
        %v1124 = vmax.f32 %v1121, 0.0
        %v1125 = vmax.f32 %v1122, 0.0
        %v1126 = vmax.f32 %v1123, 0.0
        %v1127 = vpack.c.bf16 %v1124, %v1124
        %v1128 = vpack.c.bf16 %v1125, %v1125
        %v1129 = vpack.c.bf16 %v1126, %v1126
        %v1130 = vld [vmem:[%s3] sm:$0xff]
        %v1131 = vld [vmem:[%s3 + $0x8] sm:$0xff]
        %v1132 = vld [vmem:[%s3 + $0x10] sm:$0xff]
        %v1133 = vld [vmem:[%s3 + $0x18] sm:$0xff]
        %v1134 = vld [vmem:[%s3 + $0x20] sm:$0xff]
        %v1135 = vld [vmem:[%s3 + $0x28] sm:$0xff]
        %v1136 = vld [vmem:[%s3 + $0x30] sm:$0xff]
        %v1137 = vld [vmem:[%s3 + $0x38] sm:$0xff]
        %v1138 = vld [vmem:[%s3 + $0x40] sm:$0xff]
        %v1139 = vld [vmem:[%s3 + $0x48] sm:$0xff]
        %v1140 = vld [vmem:[%s3 + $0x50] sm:$0xff]
        %v1141 = vld [vmem:[%s3 + $0x58] sm:$0xff]
        %v1142 = vld [vmem:[%s3 + $0x60] sm:$0xff]
        %v1143 = vld [vmem:[%s3 + $0x68] sm:$0xff]
        %v1144 = vld [vmem:[%s3 + $0x70] sm:$0xff]
        %v1145 = vld [vmem:[%s3 + $0x78] sm:$0xff]
        %v1146 = vld [vmem:[%s3 + $0x80] sm:$0xff]
        %v1147 = vld [vmem:[%s3 + $0x88] sm:$0xff]
        %v1148 = vld [vmem:[%s3 + $0x90] sm:$0xff]
        %v1149 = vld [vmem:[%s3 + $0x98] sm:$0xff]
        %v1150 = vld [vmem:[%s3 + $0xa0] sm:$0xff]
        %v1151 = vld [vmem:[%s3 + $0xa8] sm:$0xff]
        %v1152 = vld [vmem:[%s3 + $0xb0] sm:$0xff]
        %v1153 = vld [vmem:[%s3 + $0xb8] sm:$0xff]
        %v1154 = vld [vmem:[%s3 + $0xc0] sm:$0xff]
        %v1155 = vld [vmem:[%s3 + $0xc8] sm:$0xff]
        %v1156 = vld [vmem:[%s3 + $0xd0] sm:$0xff]
        %v1157 = vld [vmem:[%s3 + $0xd8] sm:$0xff]
        %v1158 = vld [vmem:[%s3 + $0xe0] sm:$0xff]
        %v1159 = vld [vmem:[%s3 + $0xe8] sm:$0xff]
        %v1160 = vld [vmem:[%s3 + $0xf0] sm:$0xff]
        %v1161 = vld [vmem:[%s3 + $0xf8] sm:$0xff]
        %v1162 = vld [vmem:[%s3 + $0x100] sm:$0xff]
        %v1163 = vld [vmem:[%s3 + $0x108] sm:$0xff]
        %v1164 = vld [vmem:[%s3 + $0x110] sm:$0xff]
        %v1165 = vld [vmem:[%s3 + $0x118] sm:$0xff]
        %v1166 = vld [vmem:[%s3 + $0x120] sm:$0xff]
        %v1167 = vld [vmem:[%s3 + $0x128] sm:$0xff]
        %v1168 = vld [vmem:[%s3 + $0x130] sm:$0xff]
        %v1169 = vld [vmem:[%s3 + $0x138] sm:$0xff]
        %v1170 = vld [vmem:[%s3 + $0x140] sm:$0xff]
        %v1171 = vld [vmem:[%s3 + $0x148] sm:$0xff]
        %v1172 = vld [vmem:[%s3 + $0x150] sm:$0xff]
        %v1173 = vld [vmem:[%s3 + $0x158] sm:$0xff]
        %v1174 = vld [vmem:[%s3 + $0x160] sm:$0xff]
        %v1175 = vld [vmem:[%s3 + $0x168] sm:$0xff]
        %v1176 = vld [vmem:[%s3 + $0x170] sm:$0xff]
        %v1177 = vld [vmem:[%s3 + $0x178] sm:$0xff]
        %v1178 = vld [vmem:[%s4] sm:$0x3]
        %v1180 = vperm.slane %v1178, 0
        %v1181 = vperm.slane %v1178, 1
        %v1232 = vunpack.c.l.b16 %v1130
        %v1233 = vunpack.c.h.b16 %v1130
        %v1234 = vunpack.c.l.b16 %v1131
        %v1235 = vunpack.c.h.b16 %v1131
        %v1236 = vunpack.c.l.b16 %v1132
        %v1237 = vunpack.c.h.b16 %v1132
        %v1238 = vunpack.c.l.b16 %v1133
        %v1239 = vunpack.c.h.b16 %v1133
        %v1240 = vunpack.c.l.b16 %v1134
        %v1241 = vunpack.c.h.b16 %v1134
        %v1242 = vunpack.c.l.b16 %v1135
        %v1243 = vunpack.c.h.b16 %v1135
        %v1244 = vunpack.c.l.b16 %v1136
        %v1245 = vunpack.c.h.b16 %v1136
        %v1246 = vunpack.c.l.b16 %v1137
        %v1247 = vunpack.c.h.b16 %v1137
        %v1248 = vunpack.c.l.b16 %v1138
        %v1249 = vunpack.c.h.b16 %v1138
        %v1250 = vunpack.c.l.b16 %v1139
        %v1251 = vunpack.c.h.b16 %v1139
        %v1252 = vunpack.c.l.b16 %v1140
        %v1253 = vunpack.c.h.b16 %v1140
        %v1254 = vunpack.c.l.b16 %v1141
        %v1255 = vunpack.c.h.b16 %v1141
        %v1256 = vunpack.c.l.b16 %v1142
        %v1257 = vunpack.c.h.b16 %v1142
        %v1258 = vunpack.c.l.b16 %v1143
        %v1259 = vunpack.c.h.b16 %v1143
        %v1260 = vunpack.c.l.b16 %v1144
        %v1261 = vunpack.c.h.b16 %v1144
        %v1262 = vunpack.c.l.b16 %v1145
        %v1263 = vunpack.c.h.b16 %v1145
        %v1264 = vunpack.c.l.b16 %v1146
        %v1265 = vunpack.c.h.b16 %v1146
        %v1266 = vunpack.c.l.b16 %v1147
        %v1267 = vunpack.c.h.b16 %v1147
        %v1268 = vunpack.c.l.b16 %v1148
        %v1269 = vunpack.c.h.b16 %v1148
        %v1270 = vunpack.c.l.b16 %v1149
        %v1271 = vunpack.c.h.b16 %v1149
        %v1272 = vunpack.c.l.b16 %v1150
        %v1273 = vunpack.c.h.b16 %v1150
        %v1274 = vunpack.c.l.b16 %v1151
        %v1275 = vunpack.c.h.b16 %v1151
        %v1276 = vunpack.c.l.b16 %v1152
        %v1277 = vunpack.c.h.b16 %v1152
        %v1278 = vunpack.c.l.b16 %v1153
        %v1279 = vunpack.c.h.b16 %v1153
        %v1280 = vunpack.c.l.b16 %v1154
        %v1281 = vunpack.c.h.b16 %v1154
        %v1282 = vunpack.c.l.b16 %v1155
        %v1283 = vunpack.c.h.b16 %v1155
        %v1284 = vunpack.c.l.b16 %v1156
        %v1285 = vunpack.c.h.b16 %v1156
        %v1286 = vunpack.c.l.b16 %v1157
        %v1287 = vunpack.c.h.b16 %v1157
        %v1288 = vunpack.c.l.b16 %v1158
        %v1289 = vunpack.c.h.b16 %v1158
        %v1290 = vunpack.c.l.b16 %v1159
        %v1291 = vunpack.c.h.b16 %v1159
        %v1292 = vunpack.c.l.b16 %v1160
        %v1293 = vunpack.c.h.b16 %v1160
        %v1294 = vunpack.c.l.b16 %v1161
        %v1295 = vunpack.c.h.b16 %v1161
        %v1296 = vunpack.c.l.b16 %v1162
        %v1297 = vunpack.c.h.b16 %v1162
        %v1298 = vunpack.c.l.b16 %v1163
        %v1299 = vunpack.c.h.b16 %v1163
        %v1300 = vunpack.c.l.b16 %v1164
        %v1301 = vunpack.c.h.b16 %v1164
        %v1302 = vunpack.c.l.b16 %v1165
        %v1303 = vunpack.c.h.b16 %v1165
        %v1304 = vunpack.c.l.b16 %v1166
        %v1305 = vunpack.c.h.b16 %v1166
        %v1306 = vunpack.c.l.b16 %v1167
        %v1307 = vunpack.c.h.b16 %v1167
        %v1308 = vunpack.c.l.b16 %v1168
        %v1309 = vunpack.c.h.b16 %v1168
        %v1310 = vunpack.c.l.b16 %v1169
        %v1311 = vunpack.c.h.b16 %v1169
        %v1312 = vunpack.c.l.b16 %v1170
        %v1313 = vunpack.c.h.b16 %v1170
        %v1314 = vunpack.c.l.b16 %v1171
        %v1315 = vunpack.c.h.b16 %v1171
        %v1316 = vunpack.c.l.b16 %v1172
        %v1317 = vunpack.c.h.b16 %v1172
        %v1318 = vunpack.c.l.b16 %v1173
        %v1319 = vunpack.c.h.b16 %v1173
        %v1320 = vunpack.c.l.b16 %v1174
        %v1321 = vunpack.c.h.b16 %v1174
        %v1322 = vunpack.c.l.b16 %v1175
        %v1323 = vunpack.c.h.b16 %v1175
        %v1324 = vunpack.c.l.b16 %v1176
        %v1325 = vunpack.c.h.b16 %v1176
        %v1326 = vunpack.c.l.b16 %v1177
        %v1327 = vunpack.c.h.b16 %v1177
        %v1328 = vpack.c.b16 %v1234, %v1232
        %v1329 = vpack.c.b16 %v1235, %v1233
        %v1330 = vpack.c.b16 %v1238, %v1236
        %v1331 = vpack.c.b16 %v1239, %v1237
        %v1332 = vpack.c.b16 %v1242, %v1240
        %v1333 = vpack.c.b16 %v1243, %v1241
        %v1334 = vpack.c.b16 %v1246, %v1244
        %v1335 = vpack.c.b16 %v1247, %v1245
        %v1336 = vpack.c.b16 %v1250, %v1248
        %v1337 = vpack.c.b16 %v1251, %v1249
        %v1338 = vpack.c.b16 %v1254, %v1252
        %v1339 = vpack.c.b16 %v1255, %v1253
        %v1340 = vpack.c.b16 %v1258, %v1256
        %v1341 = vpack.c.b16 %v1259, %v1257
        %v1342 = vpack.c.b16 %v1262, %v1260
        %v1343 = vpack.c.b16 %v1263, %v1261
        %v1344 = vpack.c.b16 %v1266, %v1264
        %v1345 = vpack.c.b16 %v1267, %v1265
        %v1346 = vpack.c.b16 %v1270, %v1268
        %v1347 = vpack.c.b16 %v1271, %v1269
        %v1348 = vpack.c.b16 %v1274, %v1272
        %v1349 = vpack.c.b16 %v1275, %v1273
        %v1350 = vpack.c.b16 %v1278, %v1276
        %v1351 = vpack.c.b16 %v1279, %v1277
        %v1352 = vpack.c.b16 %v1282, %v1280
        %v1353 = vpack.c.b16 %v1283, %v1281
        %v1354 = vpack.c.b16 %v1286, %v1284
        %v1355 = vpack.c.b16 %v1287, %v1285
        %v1356 = vpack.c.b16 %v1290, %v1288
        %v1357 = vpack.c.b16 %v1291, %v1289
        %v1358 = vpack.c.b16 %v1294, %v1292
        %v1359 = vpack.c.b16 %v1295, %v1293
        %v1360 = vpack.c.b16 %v1298, %v1296
        %v1361 = vpack.c.b16 %v1299, %v1297
        %v1362 = vpack.c.b16 %v1302, %v1300
        %v1363 = vpack.c.b16 %v1303, %v1301
        %v1364 = vpack.c.b16 %v1306, %v1304
        %v1365 = vpack.c.b16 %v1307, %v1305
        %v1366 = vpack.c.b16 %v1310, %v1308
        %v1367 = vpack.c.b16 %v1311, %v1309
        %v1368 = vpack.c.b16 %v1314, %v1312
        %v1369 = vpack.c.b16 %v1315, %v1313
        %v1370 = vpack.c.b16 %v1318, %v1316
        %v1371 = vpack.c.b16 %v1319, %v1317
        %v1372 = vpack.c.b16 %v1322, %v1320
        %v1373 = vpack.c.b16 %v1323, %v1321
        %v1374 = vpack.c.b16 %v1326, %v1324
        %v1375 = vpack.c.b16 %v1327, %v1325
        %1424 = vmatpush.bf16.msra.mxu0 %v1342
        %1425 = vmatpush.bf16.msra.mxu0 %v1340
        %1426 = vmatpush.bf16.msra.mxu0 %v1338
        %1427 = vmatpush.bf16.msra.mxu0 %v1336
        %1428 = vmatpush.bf16.msra.mxu0 %v1334
        %1429 = vmatpush.bf16.msra.mxu0 %v1332
        %1430 = vmatpush.bf16.msra.mxu0 %v1330
        %1431 = vmatpush.bf16.msra.mxu0 %v1328
        %1432 = vmatmul.bf16.gmra.mxu0 %v1127
        %v1433 = vpop.f32.mrf.mxu0
        %v1434 = vadd.f32 %v1180, %v1433
        %v1435 = vpop.f32.mrf.mxu0
        %1436 = vdwg.mxu0
        %1437 = vmatpush.bf16.msra.mxu0 %v1358
        %1438 = vmatpush.bf16.msra.mxu0 %v1356
        %1439 = vmatpush.bf16.msra.mxu0 %v1354
        %1440 = vmatpush.bf16.msra.mxu0 %v1352
        %1441 = vmatpush.bf16.msra.mxu0 %v1350
        %1442 = vmatpush.bf16.msra.mxu0 %v1348
        %1443 = vmatpush.bf16.msra.mxu0 %v1346
        %1444 = vmatpush.bf16.msra.mxu0 %v1344
        %1445 = vmatmul.bf16.gmra.mxu0 %v1128
        %v1446 = vpop.f32.mrf.mxu0
        %v1447 = vadd.f32 %v1434, %v1446
        %v1448 = vpop.f32.mrf.mxu0
        %1449 = vdwg.mxu0
        %1450 = vmatpush.bf16.msra.mxu0 %v1374
        %1451 = vmatpush.bf16.msra.mxu0 %v1372
        %1452 = vmatpush.bf16.msra.mxu0 %v1370
        %1453 = vmatpush.bf16.msra.mxu0 %v1368
        %1454 = vmatpush.bf16.msra.mxu0 %v1366
        %1455 = vmatpush.bf16.msra.mxu0 %v1364
        %1456 = vmatpush.bf16.msra.mxu0 %v1362
        %1457 = vmatpush.bf16.msra.mxu0 %v1360
        %1458 = vmatmul.bf16.gmra.mxu0 %v1129
        %v1459 = vpop.f32.mrf.mxu0
        %v1460 = vadd.f32 %v1447, %v1459
        %v1461 = vpop.f32.mrf.mxu0
        %1462 = vdwg.mxu0
        %1463 = vmatpush.bf16.msra.mxu0 %v1343
        %1464 = vmatpush.bf16.msra.mxu0 %v1341
        %1465 = vmatpush.bf16.msra.mxu0 %v1339
        %1466 = vmatpush.bf16.msra.mxu0 %v1337
        %1467 = vmatpush.bf16.msra.mxu0 %v1335
        %1468 = vmatpush.bf16.msra.mxu0 %v1333
        %1469 = vmatpush.bf16.msra.mxu0 %v1331
        %1470 = vmatpush.bf16.msra.mxu0 %v1329
        %1471 = vmatmul.bf16.gmra.mxu0 %v1127
        %v1472 = vpop.f32.mrf.mxu0
        %v1473 = vadd.f32 %v1181, %v1472
        %v1474 = vpop.f32.mrf.mxu0
        %1475 = vdwg.mxu0
        %1476 = vmatpush.bf16.msra.mxu0 %v1359
        %1477 = vmatpush.bf16.msra.mxu0 %v1357
        %1478 = vmatpush.bf16.msra.mxu0 %v1355
        %1479 = vmatpush.bf16.msra.mxu0 %v1353
        %1480 = vmatpush.bf16.msra.mxu0 %v1351
        %1481 = vmatpush.bf16.msra.mxu0 %v1349
        %1482 = vmatpush.bf16.msra.mxu0 %v1347
        %1483 = vmatpush.bf16.msra.mxu0 %v1345
        %1484 = vmatmul.bf16.gmra.mxu0 %v1128
        %v1485 = vpop.f32.mrf.mxu0
        %v1486 = vadd.f32 %v1473, %v1485
        %v1487 = vpop.f32.mrf.mxu0
        %1488 = vdwg.mxu0
        %1489 = vmatpush.bf16.msra.mxu0 %v1375
        %1490 = vmatpush.bf16.msra.mxu0 %v1373
        %1491 = vmatpush.bf16.msra.mxu0 %v1371
        %1492 = vmatpush.bf16.msra.mxu0 %v1369
        %1493 = vmatpush.bf16.msra.mxu0 %v1367
        %1494 = vmatpush.bf16.msra.mxu0 %v1365
        %1495 = vmatpush.bf16.msra.mxu0 %v1363
        %1496 = vmatpush.bf16.msra.mxu0 %v1361
        %1497 = vmatmul.bf16.gmra.mxu0 %v1129
        %v1498 = vpop.f32.mrf.mxu0
        %v1499 = vadd.f32 %v1486, %v1498
        %v1500 = vpop.f32.mrf.mxu0
        %1501 = vdwg.mxu0
        %v1502 = vmax.f32 %v1460, 0.0
        %v1503 = vmax.f32 %v1499, 0.0
        %1504 = vst [vmem:[%s277] sm:$0xff] %v1502
        %vm1505 = vcmask 523264
        %1506 = vst.msk [vmem:[%s277 + $0x8] sm:$0xff] %vm1505, %v1503
      $region48: #{rep_forward.3} parent=39 // pred_fallthru
        _
      %p1507 = scmp.lt.s32.totalorder %s20, 0
      %s1508 = scalar_select %p1507, %s20, 0
      %s1509 = smul.addr %s1508, 2
      %s1510 = smul.addr %s1509, 8
      %s1511 = scalar_lea.vmem %s5, %s1510
      // Predicated region
      $region49: #{rep_forward.3} parent=39 // pred_check
        %p1512 = pneg %p163
      $region50: #{rep_forward.3} parent=39 // pred_check_branch
        %1514 = sbr.rel (%p1512) target = $region52
      $region51: #{rep_forward.3} parent=39 // pred_region
        _
      $region52: #{rep_forward.3} parent=39 // pred_fallthru
        _
      // Predicated region
      $region53: #{rep_forward.3} parent=39 // pred_check
        %p1515 = pneg %p163
      $region54: #{rep_forward.3} parent=39 // pred_check_branch
        %1517 = sbr.rel (%p1515) target = $region56
      $region55: #{rep_forward.3} parent=39 // pred_region
        %p1518 = scmp.lt.s32.totalorder %s20, 0
        %s1519 = scalar_select %p1518, %s20, 0
        %s1520 = smul.addr %s1519, 2
        %s1521 = smul.addr %s1520, 8
        %s1522 = scalar_lea.vmem %s5, %s1521
      $region56: #{rep_forward.3} parent=39 // pred_fallthru
        _
    $region40: #{rep_forward.3} parent=5 // pred_fallthru
      _
    %p1523 = scmp.le.s32.totalorder 2, %s11
    // Predicated region
    $region57: #{rep_forward.3} parent=5 // pred_check
      %p1524 = pneg %p1523
    $region58: #{rep_forward.3} parent=5 // pred_check_branch
      %1526 = sbr.rel (%p1524) target = $region60
    $region59: #{rep_forward.3} parent=5 // pred_region
      %s1527 = ssub.s32 %s11, 2
    $region60: #{rep_forward.3} parent=5 // pred_fallthru
      _
  $region6: #{rep_forward.3} parent=0 // loop_footer
    %s15 = sadd.s32 1, %s11
  $region7: #{rep_forward.3} parent=0 // loop_footer_branch
    %10 = sbr.rel target = $region3
  $region8: #{rep_forward.3} parent=0 // loop_exit
    _

// kernel: rep_forward.2
$region0: #{rep_forward.2}
  #allocation0 [shape = 'u32[]', space=smem, size = 0x4, offset = 0x4, fixed_abs, tag = 'smem constant byte address 0x4 - core index']
  #allocation1 [shape = 'u32[72,128]{1,0:T(1,128)}', space=vmem, size = 0x9000, scoped, tag = 'internal scratch']
  #allocation2 [shape = 'f32[18,18,64]{2,1,0:T(8,128)}', space=vmem, size = 0x36000, scoped, tag = 'scratch operand']
  #allocation3 [shape = 'f32[16,16,64]{2,1,0:T(8,128)}', space=vmem, size = 0x20000, scoped, tag = 'scratch operand']
  %s0 = inlined_call_operand.vmem [shape: bf16[2,1024,27], index: 0, kind: input, shape index: {}]
  %s1 = inlined_call_operand.vmem [shape: bf16[27,64], index: 1, kind: input, shape index: {}]
  %s2 = inlined_call_operand.vmem [shape: f32[1,64], index: 2, kind: input, shape index: {}]
  %s3 = inlined_call_operand.vmem [shape: bf16[3,192,64], index: 3, kind: input, shape index: {}]
  %s4 = inlined_call_operand.vmem [shape: f32[1,64], index: 4, kind: input, shape index: {}]
  %s5 = inlined_call_operand.vmem [shape: bf16[2,8,512], index: 5, kind: output, shape index: {}]
  %s6 = sld [smem:[#allocation0]]
  $region53: #{rep_forward.2} parent=0
    _
  %s8 = ssub.s32 1, %s6
  %s9 = scalar_select 0, %s8, %s6
  loop: start=0, step=1, limit=4
  $region2: #{rep_forward.2} parent=0 // loop_pre_header
    _
  $region3: #{rep_forward.2} parent=0 // loop_header
    %s11 = sphi 0, %s15
    %p12 = scmp.ge.s32.totalorder %s11, 4
    %s21 = sphi 0, %s23
    %s24 = sphi 0, %s21
    %s25 = sphi 0, %s24
    %s41 = sphi 0, %s25
    %s45 = sphi 0, %s45
    %s47 = sphi 0, %s45
    %s48 = sphi 0, %s47
    %s62 = sphi 0, %s48
    %s66 = sphi 0, %s66
    %s68 = sphi 0, %s66
    %s69 = sphi 0, %s68
    %s83 = sphi 0, %s69
    %s87 = sphi 0, %s87
    %s89 = sphi 0, %s87
    %s90 = sphi 0, %s89
    %s104 = sphi 0, %s90
    %s108 = sphi 0, %s108
    %s110 = sphi 0, %s108
    %s111 = sphi 0, %s110
    %s125 = sphi 0, %s111
    %s131 = sphi 0, %s133
    %s134 = sphi 0, %s131
    %s135 = sphi 0, %s134
    %s151 = sphi 0, %s135
  $region4: #{rep_forward.2} parent=0 // loop_header_branch
    %14 = sbr.rel (%p12) target = $region8
  $region5: #{rep_forward.2} parent=0 // loop_body
    %s16 = ssub.s32 %s11, 1
    %s17 = ssub.s32 %s11, 2
    %s18 = sadd.s32 %s11, 1
    %s19 = ssub.s32 %s11, %s18
    %p20 = scmp.eq.s32.totalorder %s19, 0
    %s22 = sadd.s32 %s21, 1
    %s23 = scalar_select %p20, %s21, %s22
    %p26 = pneg %p20
    %p27 = scmp.eq.s32.totalorder %s11, 1
    %p28 = por %p26, %p27
    %p29 = scmp.ne.s32.totalorder %s21, %s24
    %p30 = scmp.eq.s32.totalorder %s11, 0
    %p31 = por %p29, %p30
    %p32 = scmp.ne.s32.totalorder %s21, %s24
    %p33 = scmp.eq.s32.totalorder %s16, 1
    %p34 = por %p32, %p33
    %p35 = scmp.ne.s32.totalorder %s24, %s25
    %p36 = scmp.eq.s32.totalorder %s16, 0
    %p37 = por %p35, %p36
    %p38 = scmp.ne.s32.totalorder %s24, %s25
    %p39 = scmp.eq.s32.totalorder %s17, 1
    %p40 = por %p38, %p39
    %p42 = scmp.ne.s32.totalorder %s25, %s41
    %p43 = scmp.eq.s32.totalorder %s17, 0
    %p44 = por %p42, %p43
    %s46 = sadd.s32 %s45, 1
    %p49 = scmp.eq.s32.totalorder %s11, 1
    %p50 = scmp.ne.s32.totalorder %s45, %s47
    %p51 = scmp.eq.s32.totalorder %s11, 0
    %p52 = por %p50, %p51
    %p53 = scmp.ne.s32.totalorder %s45, %s47
    %p54 = scmp.eq.s32.totalorder %s16, 1
    %p55 = por %p53, %p54
    %p56 = scmp.ne.s32.totalorder %s47, %s48
    %p57 = scmp.eq.s32.totalorder %s16, 0
    %p58 = por %p56, %p57
    %p59 = scmp.ne.s32.totalorder %s47, %s48
    %p60 = scmp.eq.s32.totalorder %s17, 1
    %p61 = por %p59, %p60
    %p63 = scmp.ne.s32.totalorder %s48, %s62
    %p64 = scmp.eq.s32.totalorder %s17, 0
    %p65 = por %p63, %p64
    %s67 = sadd.s32 %s66, 1
    %p70 = scmp.eq.s32.totalorder %s11, 1
    %p71 = scmp.ne.s32.totalorder %s66, %s68
    %p72 = scmp.eq.s32.totalorder %s11, 0
    %p73 = por %p71, %p72
    %p74 = scmp.ne.s32.totalorder %s66, %s68
    %p75 = scmp.eq.s32.totalorder %s16, 1
    %p76 = por %p74, %p75
    %p77 = scmp.ne.s32.totalorder %s68, %s69
    %p78 = scmp.eq.s32.totalorder %s16, 0
    %p79 = por %p77, %p78
    %p80 = scmp.ne.s32.totalorder %s68, %s69
    %p81 = scmp.eq.s32.totalorder %s17, 1
    %p82 = por %p80, %p81
    %p84 = scmp.ne.s32.totalorder %s69, %s83
    %p85 = scmp.eq.s32.totalorder %s17, 0
    %p86 = por %p84, %p85
    %s88 = sadd.s32 %s87, 1
    %p91 = scmp.eq.s32.totalorder %s11, 1
    %p92 = scmp.ne.s32.totalorder %s87, %s89
    %p93 = scmp.eq.s32.totalorder %s11, 0
    %p94 = por %p92, %p93
    %p95 = scmp.ne.s32.totalorder %s87, %s89
    %p96 = scmp.eq.s32.totalorder %s16, 1
    %p97 = por %p95, %p96
    %p98 = scmp.ne.s32.totalorder %s89, %s90
    %p99 = scmp.eq.s32.totalorder %s16, 0
    %p100 = por %p98, %p99
    %p101 = scmp.ne.s32.totalorder %s89, %s90
    %p102 = scmp.eq.s32.totalorder %s17, 1
    %p103 = por %p101, %p102
    %p105 = scmp.ne.s32.totalorder %s90, %s104
    %p106 = scmp.eq.s32.totalorder %s17, 0
    %p107 = por %p105, %p106
    %s109 = sadd.s32 %s108, 1
    %p112 = scmp.eq.s32.totalorder %s11, 1
    %p113 = scmp.ne.s32.totalorder %s108, %s110
    %p114 = scmp.eq.s32.totalorder %s11, 0
    %p115 = por %p113, %p114
    %p116 = scmp.ne.s32.totalorder %s108, %s110
    %p117 = scmp.eq.s32.totalorder %s16, 1
    %p118 = por %p116, %p117
    %p119 = scmp.ne.s32.totalorder %s110, %s111
    %p120 = scmp.eq.s32.totalorder %s16, 0
    %p121 = por %p119, %p120
    %p122 = scmp.ne.s32.totalorder %s110, %s111
    %p123 = scmp.eq.s32.totalorder %s17, 1
    %p124 = por %p122, %p123
    %p126 = scmp.ne.s32.totalorder %s111, %s125
    %p127 = scmp.eq.s32.totalorder %s17, 0
    %p128 = por %p126, %p127
    %s129 = ssub.s32 %s11, %s18
    %p130 = scmp.eq.s32.totalorder %s129, 0
    %s132 = sadd.s32 %s131, 1
    %s133 = scalar_select %p130, %s131, %s132
    %p136 = pneg %p130
    %p137 = scmp.eq.s32.totalorder %s11, 1
    %p138 = por %p136, %p137
    %p139 = scmp.ne.s32.totalorder %s131, %s134
    %p140 = scmp.eq.s32.totalorder %s11, 0
    %p141 = por %p139, %p140
    %p142 = scmp.ne.s32.totalorder %s131, %s134
    %p143 = scmp.eq.s32.totalorder %s16, 1
    %p144 = por %p142, %p143
    %p145 = scmp.ne.s32.totalorder %s134, %s135
    %p146 = scmp.eq.s32.totalorder %s16, 0
    %p147 = por %p145, %p146
    %p148 = scmp.ne.s32.totalorder %s134, %s135
    %p149 = scmp.eq.s32.totalorder %s17, 1
    %p150 = por %p148, %p149
    %p152 = scmp.ne.s32.totalorder %s135, %s151
    %p153 = scmp.eq.s32.totalorder %s17, 0
    %p154 = por %p152, %p153
    %p155 = scmp.le.s32.totalorder 1, %s11
    %p156 = scmp.lt.s32.totalorder %s11, 3
    %p157 = pnand %p155, %p156
    %p158 = pneg %p157
    // Predicated region
    $region9: #{rep_forward.2} parent=5 // pred_check
      _
    $region10: #{rep_forward.2} parent=5 // pred_check_branch
      %160 = sbr.rel (%p157) target = $region12
    $region11: #{rep_forward.2} parent=5 // pred_region
      %s161 = ssub.s32 %s11, 1
      // Predicated region
      $region13: #{rep_forward.2} parent=11 // pred_check
        %p162 = pneg %p58
      $region14: #{rep_forward.2} parent=11 // pred_check_branch
        %164 = sbr.rel (%p162) target = $region16
      $region15: #{rep_forward.2} parent=11 // pred_region
        _
      $region16: #{rep_forward.2} parent=11 // pred_fallthru
        _
      // Predicated region
      $region17: #{rep_forward.2} parent=11 // pred_check
        %p165 = pneg %p79
      $region18: #{rep_forward.2} parent=11 // pred_check_branch
        %167 = sbr.rel (%p165) target = $region20
      $region19: #{rep_forward.2} parent=11 // pred_region
        _
      $region20: #{rep_forward.2} parent=11 // pred_fallthru
        _
      // Predicated region
      $region21: #{rep_forward.2} parent=11 // pred_check
        %p168 = pneg %p100
      $region22: #{rep_forward.2} parent=11 // pred_check_branch
        %170 = sbr.rel (%p168) target = $region24
      $region23: #{rep_forward.2} parent=11 // pred_region
        _
      $region24: #{rep_forward.2} parent=11 // pred_fallthru
        _
      // Predicated region
      $region25: #{rep_forward.2} parent=11 // pred_check
        %p171 = pneg %p121
      $region26: #{rep_forward.2} parent=11 // pred_check_branch
        %173 = sbr.rel (%p171) target = $region28
      $region27: #{rep_forward.2} parent=11 // pred_region
        _
      $region28: #{rep_forward.2} parent=11 // pred_fallthru
        _
    $region12: #{rep_forward.2} parent=5 // pred_fallthru
      _
    %p174 = scmp.lt.s32.totalorder %s11, 2
    // Predicated region
    $region29: #{rep_forward.2} parent=5 // pred_check
      %p175 = pneg %p174
    $region30: #{rep_forward.2} parent=5 // pred_check_branch
      %177 = sbr.rel (%p175) target = $region32
    $region31: #{rep_forward.2} parent=5 // pred_region
      // Predicated region
      $region33: #{rep_forward.2} parent=31 // pred_check
        %p178 = pneg %p31
      $region34: #{rep_forward.2} parent=31 // pred_check_branch
        %180 = sbr.rel (%p178) target = $region36
      $region35: #{rep_forward.2} parent=31 // pred_region
        %p181 = scmp.lt.s32.totalorder %s11, 1
        %s182 = scalar_select %p181, %s11, 1
        %s183 = smul.addr %s182, 128
        %s184 = smul.addr %s183, 4
        %s185 = scalar_lea.vmem %s0, %s184
      $region36: #{rep_forward.2} parent=31 // pred_fallthru
        _
    $region32: #{rep_forward.2} parent=5 // pred_fallthru
      _
    %p186 = scmp.le.s32.totalorder 1, %s11
    %p187 = scmp.lt.s32.totalorder %s11, 3
    %p188 = pnand %p186, %p187
    %p189 = pneg %p188
    // Predicated region
    $region37: #{rep_forward.2} parent=5 // pred_check
      _
    $region38: #{rep_forward.2} parent=5 // pred_check_branch
      %191 = sbr.rel (%p188) target = $region40
    $region39: #{rep_forward.2} parent=5 // pred_region
      %s192 = ssub.s32 %s11, 1
      %p193 = scmp.lt.s32.totalorder %s16, 1
      %s194 = scalar_select %p193, %s16, 1
      %s195 = smul.addr %s194, 128
      %s196 = smul.addr %s195, 4
      %s197 = scalar_lea.vmem %s0, %s196
      %p198 = pneg %p37
      %p199 = pneg %p34
      %p200 = pneg %p58
      %p201 = pneg %p55
      %p202 = pneg %p79
      %p203 = pneg %p76
      %p204 = pneg %p100
      %p205 = pneg %p97
      %p206 = pneg %p121
      %p207 = pneg %p118
      %p208 = pneg %p147
      %p209 = pneg %p144
      %p210 = scmp.lt.s32.totalorder %s16, 1
      %s211 = scalar_select %p210, %s16, 1
      %s212 = smul.addr %s211, 4
      %s213 = smul.addr %s212, 4
      %s214 = scalar_lea.vmem %s5, %s213
      %p215 = scmp.lt.s32.totalorder %s16, 1
      %s216 = scalar_select %p215, %s16, 1
      %s217 = smul.addr %s216, 128
      %s218 = smul.addr %s217, 4
      %s219 = scalar_lea.vmem %s0, %s218
      %p220 = scmp.lt.s32.totalorder %s16, 1
      %s221 = scalar_select %p220, %s16, 1
      %s222 = smul.addr %s221, 4
      %s223 = smul.addr %s222, 4
      %s224 = scalar_lea.vmem %s5, %s223
      %vm226 = vcmask 523264
      %227 = vst.msk [vmem:[#allocation2] sm:$0xff] %vm226, 0.0
      %228 = vst.msk [vmem:[#allocation2 + $0x8] sm:$0xff] %vm226, 0.0
      %vm229 = vcmask 517120
      %230 = vst.msk [vmem:[#allocation2 + $0x10] sm:$0x3] %vm229, 0.0
      %s231 = scalar_lea.vmem [#allocation2], 408
      %232 = vst.msk [vmem:[%s231] sm:$0xff] %vm226, 0.0
      %233 = vst.msk [vmem:[%s231 + $0x8] sm:$0xff] %vm226, 0.0
      %234 = vst.msk [vmem:[%s231 + $0x10] sm:$0x3] %vm229, 0.0
      %vm235 = vcmask 516096
      %236 = vst.msk [vmem:[#allocation2] sm:$0x1] %vm235, 0.0
      %237 = vst.msk [vmem:[#allocation2 + $0x18] sm:$0x1] %vm235, 0.0
      %238 = vst.msk [vmem:[#allocation2 + $0x30] sm:$0x1] %vm235, 0.0
      %239 = vst.msk [vmem:[#allocation2 + $0x48] sm:$0x1] %vm235, 0.0
      %240 = vst.msk [vmem:[#allocation2 + $0x60] sm:$0x1] %vm235, 0.0
      %241 = vst.msk [vmem:[#allocation2 + $0x78] sm:$0x1] %vm235, 0.0
      %242 = vst.msk [vmem:[#allocation2 + $0x90] sm:$0x1] %vm235, 0.0
      %243 = vst.msk [vmem:[#allocation2 + $0xa8] sm:$0x1] %vm235, 0.0
      %244 = vst.msk [vmem:[#allocation2 + $0xc0] sm:$0x1] %vm235, 0.0
      %245 = vst.msk [vmem:[#allocation2 + $0xd8] sm:$0x1] %vm235, 0.0
      %246 = vst.msk [vmem:[#allocation2 + $0xf0] sm:$0x1] %vm235, 0.0
      %247 = vst.msk [vmem:[#allocation2 + $0x108] sm:$0x1] %vm235, 0.0
      %248 = vst.msk [vmem:[#allocation2 + $0x120] sm:$0x1] %vm235, 0.0
      %249 = vst.msk [vmem:[#allocation2 + $0x138] sm:$0x1] %vm235, 0.0
      %250 = vst.msk [vmem:[#allocation2 + $0x150] sm:$0x1] %vm235, 0.0
      %251 = vst.msk [vmem:[#allocation2 + $0x168] sm:$0x1] %vm235, 0.0
      %252 = vst.msk [vmem:[#allocation2 + $0x180] sm:$0x1] %vm235, 0.0
      %253 = vst.msk [vmem:[#allocation2 + $0x198] sm:$0x1] %vm235, 0.0
      %254 = vst.msk [vmem:[#allocation2 + $0x11] sm:$0x1] %vm235, 0.0
      %255 = vst.msk [vmem:[#allocation2 + $0x29] sm:$0x1] %vm235, 0.0
      %256 = vst.msk [vmem:[#allocation2 + $0x41] sm:$0x1] %vm235, 0.0
      %257 = vst.msk [vmem:[#allocation2 + $0x59] sm:$0x1] %vm235, 0.0
      %258 = vst.msk [vmem:[#allocation2 + $0x71] sm:$0x1] %vm235, 0.0
      %259 = vst.msk [vmem:[#allocation2 + $0x89] sm:$0x1] %vm235, 0.0
      %260 = vst.msk [vmem:[#allocation2 + $0xa1] sm:$0x1] %vm235, 0.0
      %261 = vst.msk [vmem:[#allocation2 + $0xb9] sm:$0x1] %vm235, 0.0
      %262 = vst.msk [vmem:[#allocation2 + $0xd1] sm:$0x1] %vm235, 0.0
      %263 = vst.msk [vmem:[#allocation2 + $0xe9] sm:$0x1] %vm235, 0.0
      %264 = vst.msk [vmem:[#allocation2 + $0x101] sm:$0x1] %vm235, 0.0
      %265 = vst.msk [vmem:[#allocation2 + $0x119] sm:$0x1] %vm235, 0.0
      %266 = vst.msk [vmem:[#allocation2 + $0x131] sm:$0x1] %vm235, 0.0
      %267 = vst.msk [vmem:[#allocation2 + $0x149] sm:$0x1] %vm235, 0.0
      %268 = vst.msk [vmem:[#allocation2 + $0x161] sm:$0x1] %vm235, 0.0
      %269 = vst.msk [vmem:[#allocation2 + $0x179] sm:$0x1] %vm235, 0.0
      %270 = vst.msk [vmem:[#allocation2 + $0x191] sm:$0x1] %vm235, 0.0
      %271 = vst.msk [vmem:[#allocation2 + $0x1a9] sm:$0x1] %vm235, 0.0
      %v272 = vld [vmem:[%s1] sm:$0xf]
      %v273 = vld [vmem:[%s1 + $0x4] sm:$0xf]
      %v274 = vld [vmem:[%s1 + $0x8] sm:$0xf]
      %v275 = vld [vmem:[%s1 + $0xc] sm:$0x3]
      %v276 = vld [vmem:[%s2] sm:$0x1]
      %v277 = vld [vmem:[%s4] sm:$0x1]
      %v278 = vld [vmem:[%s219] sm:$0xf]
      %v279 = vld [vmem:[%s219 + $0x4] sm:$0xf]
      %v280 = vld [vmem:[%s219 + $0x8] sm:$0xf]
      %v281 = vld [vmem:[%s219 + $0xc] sm:$0xf]
      %v282 = vld [vmem:[%s219 + $0x10] sm:$0xf]
      %v283 = vld [vmem:[%s219 + $0x14] sm:$0xf]
      %v284 = vld [vmem:[%s219 + $0x18] sm:$0xf]
      %v285 = vld [vmem:[%s219 + $0x1c] sm:$0xf]
      %v286 = vld [vmem:[%s219 + $0x20] sm:$0xf]
      %v287 = vld [vmem:[%s219 + $0x24] sm:$0xf]
      %v288 = vld [vmem:[%s219 + $0x28] sm:$0xf]
      %v289 = vld [vmem:[%s219 + $0x2c] sm:$0xf]
      %v290 = vld [vmem:[%s219 + $0x30] sm:$0xf]
      %v291 = vld [vmem:[%s219 + $0x34] sm:$0xf]
      %v292 = vld [vmem:[%s219 + $0x38] sm:$0xf]
      %v293 = vld [vmem:[%s219 + $0x3c] sm:$0xf]
      %v294 = vld [vmem:[%s219 + $0x40] sm:$0xf]
      %v295 = vld [vmem:[%s219 + $0x44] sm:$0xf]
      %v296 = vld [vmem:[%s219 + $0x48] sm:$0xf]
      %v297 = vld [vmem:[%s219 + $0x4c] sm:$0xf]
      %v298 = vld [vmem:[%s219 + $0x50] sm:$0xf]
      %v299 = vld [vmem:[%s219 + $0x54] sm:$0xf]
      %v300 = vld [vmem:[%s219 + $0x58] sm:$0xf]
      %v301 = vld [vmem:[%s219 + $0x5c] sm:$0xf]
      %v302 = vld [vmem:[%s219 + $0x60] sm:$0xf]
      %v303 = vld [vmem:[%s219 + $0x64] sm:$0xf]
      %v304 = vld [vmem:[%s219 + $0x68] sm:$0xf]
      %v305 = vld [vmem:[%s219 + $0x6c] sm:$0xf]
      %v306 = vld [vmem:[%s219 + $0x70] sm:$0xf]
      %v307 = vld [vmem:[%s219 + $0x74] sm:$0xf]
      %v308 = vld [vmem:[%s219 + $0x78] sm:$0xf]
      %v309 = vld [vmem:[%s219 + $0x7c] sm:$0xf]
      %v311 = vperm.slane %v276, 0
      %v345 = vunpack.c.l.b16 %v278
      %v346 = vunpack.c.l.b16 %v279
      %v347 = vunpack.c.l.b16 %v280
      %v348 = vunpack.c.l.b16 %v281
      %v349 = vunpack.c.l.b16 %v282
      %v350 = vunpack.c.l.b16 %v283
      %v351 = vunpack.c.l.b16 %v284
      %v352 = vunpack.c.l.b16 %v285
      %v353 = vunpack.c.l.b16 %v286
      %v354 = vunpack.c.l.b16 %v287
      %v355 = vunpack.c.l.b16 %v288
      %v356 = vunpack.c.l.b16 %v289
      %v357 = vunpack.c.l.b16 %v290
      %v358 = vunpack.c.l.b16 %v291
      %v359 = vunpack.c.l.b16 %v292
      %v360 = vunpack.c.l.b16 %v293
      %v361 = vunpack.c.l.b16 %v294
      %v362 = vunpack.c.l.b16 %v295
      %v363 = vunpack.c.l.b16 %v296
      %v364 = vunpack.c.l.b16 %v297
      %v365 = vunpack.c.l.b16 %v298
      %v366 = vunpack.c.l.b16 %v299
      %v367 = vunpack.c.l.b16 %v300
      %v368 = vunpack.c.l.b16 %v301
      %v369 = vunpack.c.l.b16 %v302
      %v370 = vunpack.c.l.b16 %v303
      %v371 = vunpack.c.l.b16 %v304
      %v372 = vunpack.c.l.b16 %v305
      %v373 = vunpack.c.l.b16 %v306
      %v374 = vunpack.c.l.b16 %v307
      %v375 = vunpack.c.l.b16 %v308
      %v376 = vunpack.c.l.b16 %v309
      %v377 = vpack.c.b16 %v346, %v345
      %v378 = vpack.c.b16 %v348, %v347
      %v379 = vpack.c.b16 %v350, %v349
      %v380 = vpack.c.b16 %v352, %v351
      %v381 = vpack.c.b16 %v354, %v353
      %v382 = vpack.c.b16 %v356, %v355
      %v383 = vpack.c.b16 %v358, %v357
      %v384 = vpack.c.b16 %v360, %v359
      %v385 = vpack.c.b16 %v362, %v361
      %v386 = vpack.c.b16 %v364, %v363
      %v387 = vpack.c.b16 %v366, %v365
      %v388 = vpack.c.b16 %v368, %v367
      %v389 = vpack.c.b16 %v370, %v369
      %v390 = vpack.c.b16 %v372, %v371
      %v391 = vpack.c.b16 %v374, %v373
      %v392 = vpack.c.b16 %v376, %v375
      %v397 = vunpack.c.l.b16 %v272
      %v398 = vunpack.c.l.b16 %v273
      %v399 = vunpack.c.l.b16 %v274
      %v400 = vunpack.c.l.b16 %v275
      %v401 = vpack.c.b16 %v398, %v397
      %v402 = vpack.c.b16 %v400, %v399
      %vm404 = vcmask 220160
      %v406 = vsel %vm404, %v377, 0
      %v409 = vsel %vm404, %v378, 0
      %v412 = vsel %vm404, %v379, 0
      %v415 = vsel %vm404, %v380, 0
      %v418 = vsel %vm404, %v381, 0
      %v421 = vsel %vm404, %v382, 0
      %v424 = vsel %vm404, %v383, 0
      %v427 = vsel %vm404, %v384, 0
      %v430 = vsel %vm404, %v385, 0
      %v433 = vsel %vm404, %v386, 0
      %v436 = vsel %vm404, %v387, 0
      %v439 = vsel %vm404, %v388, 0
      %v442 = vsel %vm404, %v389, 0
      %v445 = vsel %vm404, %v390, 0
      %v448 = vsel %vm404, %v391, 0
      %v451 = vsel %vm404, %v392, 0
      %vm453 = vcmask 1044480
      %vm454 = vcmask 1045504
      %v455 = vsel %vm453, 4294967295, 65535
      %v456 = vsel %vm454, %v455, 0
      %v458 = vand.u32 %v402, %v456
      %460 = vmatpush.bf16.msra.mxu0 0
      %461 = vmatpush.bf16.msra.mxu0 0
      %462 = vmatpush.bf16.msra.mxu0 0
      %463 = vmatpush.bf16.msra.mxu0 0
      %464 = vmatpush.bf16.msra.mxu0 0
      %465 = vmatpush.bf16.msra.mxu0 0
      %466 = vmatpush.bf16.msra.mxu0 %v458
      %467 = vmatpush.bf16.msra.mxu0 %v401
      %468 = vmatmul.bf16.gmra.mxu0 %v406
      %v469 = vpop.f32.mrf.mxu0
      %v470 = vadd.f32 %v311, %v469
      %v471 = vpop.f32.mrf.mxu0
      %v472 = vadd.f32 %v311, %v471
      %473 = vmatmul.bf16.gmra.mxu0 %v409
      %v474 = vpop.f32.mrf.mxu0
      %v475 = vadd.f32 %v311, %v474
      %v476 = vpop.f32.mrf.mxu0
      %v477 = vadd.f32 %v311, %v476
      %478 = vmatmul.bf16.gmra.mxu0 %v412
      %v479 = vpop.f32.mrf.mxu0
      %v480 = vadd.f32 %v311, %v479
      %v481 = vpop.f32.mrf.mxu0
      %v482 = vadd.f32 %v311, %v481
      %483 = vmatmul.bf16.gmra.mxu0 %v415
      %v484 = vpop.f32.mrf.mxu0
      %v485 = vadd.f32 %v311, %v484
      %v486 = vpop.f32.mrf.mxu0
      %v487 = vadd.f32 %v311, %v486
      %488 = vmatmul.bf16.gmra.mxu0 %v418
      %v489 = vpop.f32.mrf.mxu0
      %v490 = vadd.f32 %v311, %v489
      %v491 = vpop.f32.mrf.mxu0
      %v492 = vadd.f32 %v311, %v491
      %493 = vmatmul.bf16.gmra.mxu0 %v421
      %v494 = vpop.f32.mrf.mxu0
      %v495 = vadd.f32 %v311, %v494
      %v496 = vpop.f32.mrf.mxu0
      %v497 = vadd.f32 %v311, %v496
      %498 = vmatmul.bf16.gmra.mxu0 %v424
      %v499 = vpop.f32.mrf.mxu0
      %v500 = vadd.f32 %v311, %v499
      %v501 = vpop.f32.mrf.mxu0
      %v502 = vadd.f32 %v311, %v501
      %503 = vmatmul.bf16.gmra.mxu0 %v427
      %v504 = vpop.f32.mrf.mxu0
      %v505 = vadd.f32 %v311, %v504
      %v506 = vpop.f32.mrf.mxu0
      %v507 = vadd.f32 %v311, %v506
      %508 = vmatmul.bf16.gmra.mxu0 %v430
      %v509 = vpop.f32.mrf.mxu0
      %v510 = vadd.f32 %v311, %v509
      %v511 = vpop.f32.mrf.mxu0
      %v512 = vadd.f32 %v311, %v511
      %513 = vmatmul.bf16.gmra.mxu0 %v433
      %v514 = vpop.f32.mrf.mxu0
      %v515 = vadd.f32 %v311, %v514
      %v516 = vpop.f32.mrf.mxu0
      %v517 = vadd.f32 %v311, %v516
      %518 = vmatmul.bf16.gmra.mxu0 %v436
      %v519 = vpop.f32.mrf.mxu0
      %v520 = vadd.f32 %v311, %v519
      %v521 = vpop.f32.mrf.mxu0
      %v522 = vadd.f32 %v311, %v521
      %523 = vmatmul.bf16.gmra.mxu0 %v439
      %v524 = vpop.f32.mrf.mxu0
      %v525 = vadd.f32 %v311, %v524
      %v526 = vpop.f32.mrf.mxu0
      %v527 = vadd.f32 %v311, %v526
      %528 = vmatmul.bf16.gmra.mxu0 %v442
      %v529 = vpop.f32.mrf.mxu0
      %v530 = vadd.f32 %v311, %v529
      %v531 = vpop.f32.mrf.mxu0
      %v532 = vadd.f32 %v311, %v531
      %533 = vmatmul.bf16.gmra.mxu0 %v445
      %v534 = vpop.f32.mrf.mxu0
      %v535 = vadd.f32 %v311, %v534
      %v536 = vpop.f32.mrf.mxu0
      %v537 = vadd.f32 %v311, %v536
      %538 = vmatmul.bf16.gmra.mxu0 %v448
      %v539 = vpop.f32.mrf.mxu0
      %v540 = vadd.f32 %v311, %v539
      %v541 = vpop.f32.mrf.mxu0
      %v542 = vadd.f32 %v311, %v541
      %543 = vmatmul.bf16.gmra.mxu0 %v451
      %v544 = vpop.f32.mrf.mxu0
      %v545 = vadd.f32 %v311, %v544
      %v546 = vpop.f32.mrf.mxu0
      %v547 = vadd.f32 %v311, %v546
      %548 = vdwg.mxu0
      %v549 = vmax.f32 %v470, 0.0
      %v550 = vmax.f32 %v472, 0.0
      %v551 = vmax.f32 %v475, 0.0
      %v552 = vmax.f32 %v477, 0.0
      %v553 = vmax.f32 %v480, 0.0
      %v554 = vmax.f32 %v482, 0.0
      %v555 = vmax.f32 %v485, 0.0
      %v556 = vmax.f32 %v487, 0.0
      %v557 = vmax.f32 %v490, 0.0
      %v558 = vmax.f32 %v492, 0.0
      %v559 = vmax.f32 %v495, 0.0
      %v560 = vmax.f32 %v497, 0.0
      %v561 = vmax.f32 %v500, 0.0
      %v562 = vmax.f32 %v502, 0.0
      %v563 = vmax.f32 %v505, 0.0
      %v564 = vmax.f32 %v507, 0.0
      %v565 = vmax.f32 %v510, 0.0
      %v566 = vmax.f32 %v512, 0.0
      %v567 = vmax.f32 %v515, 0.0
      %v568 = vmax.f32 %v517, 0.0
      %v569 = vmax.f32 %v520, 0.0
      %v570 = vmax.f32 %v522, 0.0
      %v571 = vmax.f32 %v525, 0.0
      %v572 = vmax.f32 %v527, 0.0
      %v573 = vmax.f32 %v530, 0.0
      %v574 = vmax.f32 %v532, 0.0
      %v575 = vmax.f32 %v535, 0.0
      %v576 = vmax.f32 %v537, 0.0
      %v577 = vmax.f32 %v540, 0.0
      %v578 = vmax.f32 %v542, 0.0
      %v579 = vmax.f32 %v545, 0.0
      %v580 = vmax.f32 %v547, 0.0
      %v581 = vmax.f32 %v549, %v565
      %v582 = vmax.f32 %v550, %v566
      %v583 = vmax.f32 %v551, %v567
      %v584 = vmax.f32 %v552, %v568
      %v585 = vmax.f32 %v553, %v569
      %v586 = vmax.f32 %v554, %v570
      %v587 = vmax.f32 %v555, %v571
      %v588 = vmax.f32 %v556, %v572
      %v589 = vmax.f32 %v557, %v573
      %v590 = vmax.f32 %v558, %v574
      %v591 = vmax.f32 %v559, %v575
      %v592 = vmax.f32 %v560, %v576
      %v593 = vmax.f32 %v561, %v577
      %v594 = vmax.f32 %v562, %v578
      %v595 = vmax.f32 %v563, %v579
      %v596 = vmax.f32 %v564, %v580
      %v597 = vmax.f32 %v581, %v583
      %v598 = vmax.f32 %v582, %v584
      %v599 = vmax.f32 %v585, %v587
      %v600 = vmax.f32 %v586, %v588
      %v601 = vmax.f32 %v589, %v591
      %v602 = vmax.f32 %v590, %v592
      %v603 = vmax.f32 %v593, %v595
      %v604 = vmax.f32 %v594, %v596
      %s605 = scalar_lea.vmem [#allocation2], 24
      %606 = vst.msk [vmem:[%s605 + $0x1] sm:$0xff] %vm226, %v597
      %607 = vst.msk [vmem:[%s605 + $0x9] sm:$0xff] %vm226, %v598
      %608 = vst.msk [vmem:[%s605 + $0x19] sm:$0xff] %vm226, %v599
      %609 = vst.msk [vmem:[%s605 + $0x21] sm:$0xff] %vm226, %v600
      %610 = vst.msk [vmem:[%s605 + $0x31] sm:$0xff] %vm226, %v601
      %611 = vst.msk [vmem:[%s605 + $0x39] sm:$0xff] %vm226, %v602
      %612 = vst.msk [vmem:[%s605 + $0x49] sm:$0xff] %vm226, %v603
      %613 = vst.msk [vmem:[%s605 + $0x51] sm:$0xff] %vm226, %v604
      %v614 = vld [vmem:[%s219 + $0x80] sm:$0xf]
      %v615 = vld [vmem:[%s219 + $0x84] sm:$0xf]
      %v616 = vld [vmem:[%s219 + $0x88] sm:$0xf]
      %v617 = vld [vmem:[%s219 + $0x8c] sm:$0xf]
      %v618 = vld [vmem:[%s219 + $0x90] sm:$0xf]
      %v619 = vld [vmem:[%s219 + $0x94] sm:$0xf]
      %v620 = vld [vmem:[%s219 + $0x98] sm:$0xf]
      %v621 = vld [vmem:[%s219 + $0x9c] sm:$0xf]
      %v622 = vld [vmem:[%s219 + $0xa0] sm:$0xf]
      %v623 = vld [vmem:[%s219 + $0xa4] sm:$0xf]
      %v624 = vld [vmem:[%s219 + $0xa8] sm:$0xf]
      %v625 = vld [vmem:[%s219 + $0xac] sm:$0xf]
      %v626 = vld [vmem:[%s219 + $0xb0] sm:$0xf]
      %v627 = vld [vmem:[%s219 + $0xb4] sm:$0xf]
      %v628 = vld [vmem:[%s219 + $0xb8] sm:$0xf]
      %v629 = vld [vmem:[%s219 + $0xbc] sm:$0xf]
      %v630 = vld [vmem:[%s219 + $0xc0] sm:$0xf]
      %v631 = vld [vmem:[%s219 + $0xc4] sm:$0xf]
      %v632 = vld [vmem:[%s219 + $0xc8] sm:$0xf]
      %v633 = vld [vmem:[%s219 + $0xcc] sm:$0xf]
      %v634 = vld [vmem:[%s219 + $0xd0] sm:$0xf]
      %v635 = vld [vmem:[%s219 + $0xd4] sm:$0xf]
      %v636 = vld [vmem:[%s219 + $0xd8] sm:$0xf]
      %v637 = vld [vmem:[%s219 + $0xdc] sm:$0xf]
      %v638 = vld [vmem:[%s219 + $0xe0] sm:$0xf]
      %v639 = vld [vmem:[%s219 + $0xe4] sm:$0xf]
      %v640 = vld [vmem:[%s219 + $0xe8] sm:$0xf]
      %v641 = vld [vmem:[%s219 + $0xec] sm:$0xf]
      %v642 = vld [vmem:[%s219 + $0xf0] sm:$0xf]
      %v643 = vld [vmem:[%s219 + $0xf4] sm:$0xf]
      %v644 = vld [vmem:[%s219 + $0xf8] sm:$0xf]
      %v645 = vld [vmem:[%s219 + $0xfc] sm:$0xf]
      %v678 = vunpack.c.l.b16 %v614
      %v679 = vunpack.c.l.b16 %v615
      %v680 = vunpack.c.l.b16 %v616
      %v681 = vunpack.c.l.b16 %v617
      %v682 = vunpack.c.l.b16 %v618
      %v683 = vunpack.c.l.b16 %v619
      %v684 = vunpack.c.l.b16 %v620
      %v685 = vunpack.c.l.b16 %v621
      %v686 = vunpack.c.l.b16 %v622
      %v687 = vunpack.c.l.b16 %v623
      %v688 = vunpack.c.l.b16 %v624
      %v689 = vunpack.c.l.b16 %v625
      %v690 = vunpack.c.l.b16 %v626
      %v691 = vunpack.c.l.b16 %v627
      %v692 = vunpack.c.l.b16 %v628
      %v693 = vunpack.c.l.b16 %v629
      %v694 = vunpack.c.l.b16 %v630
      %v695 = vunpack.c.l.b16 %v631
      %v696 = vunpack.c.l.b16 %v632
      %v697 = vunpack.c.l.b16 %v633
      %v698 = vunpack.c.l.b16 %v634
      %v699 = vunpack.c.l.b16 %v635
      %v700 = vunpack.c.l.b16 %v636
      %v701 = vunpack.c.l.b16 %v637
      %v702 = vunpack.c.l.b16 %v638
      %v703 = vunpack.c.l.b16 %v639
      %v704 = vunpack.c.l.b16 %v640
      %v705 = vunpack.c.l.b16 %v641
      %v706 = vunpack.c.l.b16 %v642
      %v707 = vunpack.c.l.b16 %v643
      %v708 = vunpack.c.l.b16 %v644
      %v709 = vunpack.c.l.b16 %v645
      %v710 = vpack.c.b16 %v679, %v678
      %v711 = vpack.c.b16 %v681, %v680
      %v712 = vpack.c.b16 %v683, %v682
      %v713 = vpack.c.b16 %v685, %v684
      %v714 = vpack.c.b16 %v687, %v686
      %v715 = vpack.c.b16 %v689, %v688
      %v716 = vpack.c.b16 %v691, %v690
      %v717 = vpack.c.b16 %v693, %v692
      %v718 = vpack.c.b16 %v695, %v694
      %v719 = vpack.c.b16 %v697, %v696
      %v720 = vpack.c.b16 %v699, %v698
      %v721 = vpack.c.b16 %v701, %v700
      %v722 = vpack.c.b16 %v703, %v702
      %v723 = vpack.c.b16 %v705, %v704
      %v724 = vpack.c.b16 %v707, %v706
      %v725 = vpack.c.b16 %v709, %v708
      %v727 = vsel %vm404, %v710, 0
      %v730 = vsel %vm404, %v711, 0
      %v733 = vsel %vm404, %v712, 0
      %v736 = vsel %vm404, %v713, 0
      %v739 = vsel %vm404, %v714, 0
      %v742 = vsel %vm404, %v715, 0
      %v745 = vsel %vm404, %v716, 0
      %v748 = vsel %vm404, %v717, 0
      %v751 = vsel %vm404, %v718, 0
      %v754 = vsel %vm404, %v719, 0
      %v757 = vsel %vm404, %v720, 0
      %v760 = vsel %vm404, %v721, 0
      %v763 = vsel %vm404, %v722, 0
      %v766 = vsel %vm404, %v723, 0
      %v769 = vsel %vm404, %v724, 0
      %v772 = vsel %vm404, %v725, 0
      %774 = vmatpush.bf16.msra.mxu0 0
      %775 = vmatpush.bf16.msra.mxu0 0
      %776 = vmatpush.bf16.msra.mxu0 0
      %777 = vmatpush.bf16.msra.mxu0 0
      %778 = vmatpush.bf16.msra.mxu0 0
      %779 = vmatpush.bf16.msra.mxu0 0
      %780 = vmatpush.bf16.msra.mxu0 %v458
      %781 = vmatpush.bf16.msra.mxu0 %v401
      %782 = vmatmul.bf16.gmra.mxu0 %v727
      %v783 = vpop.f32.mrf.mxu0
      %v784 = vadd.f32 %v311, %v783
      %v785 = vpop.f32.mrf.mxu0
      %v786 = vadd.f32 %v311, %v785
      %787 = vmatmul.bf16.gmra.mxu0 %v730
      %v788 = vpop.f32.mrf.mxu0
      %v789 = vadd.f32 %v311, %v788
      %v790 = vpop.f32.mrf.mxu0
      %v791 = vadd.f32 %v311, %v790
      %792 = vmatmul.bf16.gmra.mxu0 %v733
      %v793 = vpop.f32.mrf.mxu0
      %v794 = vadd.f32 %v311, %v793
      %v795 = vpop.f32.mrf.mxu0
      %v796 = vadd.f32 %v311, %v795
      %797 = vmatmul.bf16.gmra.mxu0 %v736
      %v798 = vpop.f32.mrf.mxu0
      %v799 = vadd.f32 %v311, %v798
      %v800 = vpop.f32.mrf.mxu0
      %v801 = vadd.f32 %v311, %v800
      %802 = vmatmul.bf16.gmra.mxu0 %v739
      %v803 = vpop.f32.mrf.mxu0
      %v804 = vadd.f32 %v311, %v803
      %v805 = vpop.f32.mrf.mxu0
      %v806 = vadd.f32 %v311, %v805
      %807 = vmatmul.bf16.gmra.mxu0 %v742
      %v808 = vpop.f32.mrf.mxu0
      %v809 = vadd.f32 %v311, %v808
      %v810 = vpop.f32.mrf.mxu0
      %v811 = vadd.f32 %v311, %v810
      %812 = vmatmul.bf16.gmra.mxu0 %v745
      %v813 = vpop.f32.mrf.mxu0
      %v814 = vadd.f32 %v311, %v813
      %v815 = vpop.f32.mrf.mxu0
      %v816 = vadd.f32 %v311, %v815
      %817 = vmatmul.bf16.gmra.mxu0 %v748
      %v818 = vpop.f32.mrf.mxu0
      %v819 = vadd.f32 %v311, %v818
      %v820 = vpop.f32.mrf.mxu0
      %v821 = vadd.f32 %v311, %v820
      %822 = vmatmul.bf16.gmra.mxu0 %v751
      %v823 = vpop.f32.mrf.mxu0
      %v824 = vadd.f32 %v311, %v823
      %v825 = vpop.f32.mrf.mxu0
      %v826 = vadd.f32 %v311, %v825
      %827 = vmatmul.bf16.gmra.mxu0 %v754
      %v828 = vpop.f32.mrf.mxu0
      %v829 = vadd.f32 %v311, %v828
      %v830 = vpop.f32.mrf.mxu0
      %v831 = vadd.f32 %v311, %v830
      %832 = vmatmul.bf16.gmra.mxu0 %v757
      %v833 = vpop.f32.mrf.mxu0
      %v834 = vadd.f32 %v311, %v833
      %v835 = vpop.f32.mrf.mxu0
      %v836 = vadd.f32 %v311, %v835
      %837 = vmatmul.bf16.gmra.mxu0 %v760
      %v838 = vpop.f32.mrf.mxu0
      %v839 = vadd.f32 %v311, %v838
      %v840 = vpop.f32.mrf.mxu0
      %v841 = vadd.f32 %v311, %v840
      %842 = vmatmul.bf16.gmra.mxu0 %v763
      %v843 = vpop.f32.mrf.mxu0
      %v844 = vadd.f32 %v311, %v843
      %v845 = vpop.f32.mrf.mxu0
      %v846 = vadd.f32 %v311, %v845
      %847 = vmatmul.bf16.gmra.mxu0 %v766
      %v848 = vpop.f32.mrf.mxu0
      %v849 = vadd.f32 %v311, %v848
      %v850 = vpop.f32.mrf.mxu0
      %v851 = vadd.f32 %v311, %v850
      %852 = vmatmul.bf16.gmra.mxu0 %v769
      %v853 = vpop.f32.mrf.mxu0
      %v854 = vadd.f32 %v311, %v853
      %v855 = vpop.f32.mrf.mxu0
      %v856 = vadd.f32 %v311, %v855
      %857 = vmatmul.bf16.gmra.mxu0 %v772
      %v858 = vpop.f32.mrf.mxu0
      %v859 = vadd.f32 %v311, %v858
      %v860 = vpop.f32.mrf.mxu0
      %v861 = vadd.f32 %v311, %v860
      %862 = vdwg.mxu0
      %v863 = vmax.f32 %v784, 0.0
      %v864 = vmax.f32 %v786, 0.0
      %v865 = vmax.f32 %v789, 0.0
      %v866 = vmax.f32 %v791, 0.0
      %v867 = vmax.f32 %v794, 0.0
      %v868 = vmax.f32 %v796, 0.0
      %v869 = vmax.f32 %v799, 0.0
      %v870 = vmax.f32 %v801, 0.0
      %v871 = vmax.f32 %v804, 0.0
      %v872 = vmax.f32 %v806, 0.0
      %v873 = vmax.f32 %v809, 0.0
      %v874 = vmax.f32 %v811, 0.0
      %v875 = vmax.f32 %v814, 0.0
      %v876 = vmax.f32 %v816, 0.0
      %v877 = vmax.f32 %v819, 0.0
      %v878 = vmax.f32 %v821, 0.0
      %v879 = vmax.f32 %v824, 0.0
      %v880 = vmax.f32 %v826, 0.0
      %v881 = vmax.f32 %v829, 0.0
      %v882 = vmax.f32 %v831, 0.0
      %v883 = vmax.f32 %v834, 0.0
      %v884 = vmax.f32 %v836, 0.0
      %v885 = vmax.f32 %v839, 0.0
      %v886 = vmax.f32 %v841, 0.0
      %v887 = vmax.f32 %v844, 0.0
      %v888 = vmax.f32 %v846, 0.0
      %v889 = vmax.f32 %v849, 0.0
      %v890 = vmax.f32 %v851, 0.0
      %v891 = vmax.f32 %v854, 0.0
      %v892 = vmax.f32 %v856, 0.0
      %v893 = vmax.f32 %v859, 0.0
      %v894 = vmax.f32 %v861, 0.0
      %v895 = vmax.f32 %v863, %v879
      %v896 = vmax.f32 %v864, %v880
      %v897 = vmax.f32 %v865, %v881
      %v898 = vmax.f32 %v866, %v882
      %v899 = vmax.f32 %v867, %v883
      %v900 = vmax.f32 %v868, %v884
      %v901 = vmax.f32 %v869, %v885
      %v902 = vmax.f32 %v870, %v886
      %v903 = vmax.f32 %v871, %v887
      %v904 = vmax.f32 %v872, %v888
      %v905 = vmax.f32 %v873, %v889
      %v906 = vmax.f32 %v874, %v890
      %v907 = vmax.f32 %v875, %v891
      %v908 = vmax.f32 %v876, %v892
      %v909 = vmax.f32 %v877, %v893
      %v910 = vmax.f32 %v878, %v894
      %v911 = vmax.f32 %v895, %v897
      %v912 = vmax.f32 %v896, %v898
      %v913 = vmax.f32 %v899, %v901
      %v914 = vmax.f32 %v900, %v902
      %v915 = vmax.f32 %v903, %v905
      %v916 = vmax.f32 %v904, %v906
      %v917 = vmax.f32 %v907, %v909
      %v918 = vmax.f32 %v908, %v910
      %s919 = scalar_lea.vmem [#allocation2], 120
      %920 = vst.msk [vmem:[%s919 + $0x1] sm:$0xff] %vm226, %v911
      %921 = vst.msk [vmem:[%s919 + $0x9] sm:$0xff] %vm226, %v912
      %922 = vst.msk [vmem:[%s919 + $0x19] sm:$0xff] %vm226, %v913
      %923 = vst.msk [vmem:[%s919 + $0x21] sm:$0xff] %vm226, %v914
      %924 = vst.msk [vmem:[%s919 + $0x31] sm:$0xff] %vm226, %v915
      %925 = vst.msk [vmem:[%s919 + $0x39] sm:$0xff] %vm226, %v916
      %926 = vst.msk [vmem:[%s919 + $0x49] sm:$0xff] %vm226, %v917
      %927 = vst.msk [vmem:[%s919 + $0x51] sm:$0xff] %vm226, %v918
      %v928 = vld [vmem:[%s219 + $0x100] sm:$0xf]
      %v929 = vld [vmem:[%s219 + $0x104] sm:$0xf]
      %v930 = vld [vmem:[%s219 + $0x108] sm:$0xf]
      %v931 = vld [vmem:[%s219 + $0x10c] sm:$0xf]
      %v932 = vld [vmem:[%s219 + $0x110] sm:$0xf]
      %v933 = vld [vmem:[%s219 + $0x114] sm:$0xf]
      %v934 = vld [vmem:[%s219 + $0x118] sm:$0xf]
      %v935 = vld [vmem:[%s219 + $0x11c] sm:$0xf]
      %v936 = vld [vmem:[%s219 + $0x120] sm:$0xf]
      %v937 = vld [vmem:[%s219 + $0x124] sm:$0xf]
      %v938 = vld [vmem:[%s219 + $0x128] sm:$0xf]
      %v939 = vld [vmem:[%s219 + $0x12c] sm:$0xf]
      %v940 = vld [vmem:[%s219 + $0x130] sm:$0xf]
      %v941 = vld [vmem:[%s219 + $0x134] sm:$0xf]
      %v942 = vld [vmem:[%s219 + $0x138] sm:$0xf]
      %v943 = vld [vmem:[%s219 + $0x13c] sm:$0xf]
      %v944 = vld [vmem:[%s219 + $0x140] sm:$0xf]
      %v945 = vld [vmem:[%s219 + $0x144] sm:$0xf]
      %v946 = vld [vmem:[%s219 + $0x148] sm:$0xf]
      %v947 = vld [vmem:[%s219 + $0x14c] sm:$0xf]
      %v948 = vld [vmem:[%s219 + $0x150] sm:$0xf]
      %v949 = vld [vmem:[%s219 + $0x154] sm:$0xf]
      %v950 = vld [vmem:[%s219 + $0x158] sm:$0xf]
      %v951 = vld [vmem:[%s219 + $0x15c] sm:$0xf]
      %v952 = vld [vmem:[%s219 + $0x160] sm:$0xf]
      %v953 = vld [vmem:[%s219 + $0x164] sm:$0xf]
      %v954 = vld [vmem:[%s219 + $0x168] sm:$0xf]
      %v955 = vld [vmem:[%s219 + $0x16c] sm:$0xf]
      %v956 = vld [vmem:[%s219 + $0x170] sm:$0xf]
      %v957 = vld [vmem:[%s219 + $0x174] sm:$0xf]
      %v958 = vld [vmem:[%s219 + $0x178] sm:$0xf]
      %v959 = vld [vmem:[%s219 + $0x17c] sm:$0xf]
      %v992 = vunpack.c.l.b16 %v928
      %v993 = vunpack.c.l.b16 %v929
      %v994 = vunpack.c.l.b16 %v930
      %v995 = vunpack.c.l.b16 %v931
      %v996 = vunpack.c.l.b16 %v932
      %v997 = vunpack.c.l.b16 %v933
      %v998 = vunpack.c.l.b16 %v934
      %v999 = vunpack.c.l.b16 %v935
      %v1000 = vunpack.c.l.b16 %v936
      %v1001 = vunpack.c.l.b16 %v937
      %v1002 = vunpack.c.l.b16 %v938
      %v1003 = vunpack.c.l.b16 %v939
      %v1004 = vunpack.c.l.b16 %v940
      %v1005 = vunpack.c.l.b16 %v941
      %v1006 = vunpack.c.l.b16 %v942
      %v1007 = vunpack.c.l.b16 %v943
      %v1008 = vunpack.c.l.b16 %v944
      %v1009 = vunpack.c.l.b16 %v945
      %v1010 = vunpack.c.l.b16 %v946
      %v1011 = vunpack.c.l.b16 %v947
      %v1012 = vunpack.c.l.b16 %v948
      %v1013 = vunpack.c.l.b16 %v949
      %v1014 = vunpack.c.l.b16 %v950
      %v1015 = vunpack.c.l.b16 %v951
      %v1016 = vunpack.c.l.b16 %v952
      %v1017 = vunpack.c.l.b16 %v953
      %v1018 = vunpack.c.l.b16 %v954
      %v1019 = vunpack.c.l.b16 %v955
      %v1020 = vunpack.c.l.b16 %v956
      %v1021 = vunpack.c.l.b16 %v957
      %v1022 = vunpack.c.l.b16 %v958
      %v1023 = vunpack.c.l.b16 %v959
      %v1024 = vpack.c.b16 %v993, %v992
      %v1025 = vpack.c.b16 %v995, %v994
      %v1026 = vpack.c.b16 %v997, %v996
      %v1027 = vpack.c.b16 %v999, %v998
      %v1028 = vpack.c.b16 %v1001, %v1000
      %v1029 = vpack.c.b16 %v1003, %v1002
      %v1030 = vpack.c.b16 %v1005, %v1004
      %v1031 = vpack.c.b16 %v1007, %v1006
      %v1032 = vpack.c.b16 %v1009, %v1008
      %v1033 = vpack.c.b16 %v1011, %v1010
      %v1034 = vpack.c.b16 %v1013, %v1012
      %v1035 = vpack.c.b16 %v1015, %v1014
      %v1036 = vpack.c.b16 %v1017, %v1016
      %v1037 = vpack.c.b16 %v1019, %v1018
      %v1038 = vpack.c.b16 %v1021, %v1020
      %v1039 = vpack.c.b16 %v1023, %v1022
      %v1041 = vsel %vm404, %v1024, 0
      %v1044 = vsel %vm404, %v1025, 0
      %v1047 = vsel %vm404, %v1026, 0
      %v1050 = vsel %vm404, %v1027, 0
      %v1053 = vsel %vm404, %v1028, 0
      %v1056 = vsel %vm404, %v1029, 0
      %v1059 = vsel %vm404, %v1030, 0
      %v1062 = vsel %vm404, %v1031, 0
      %v1065 = vsel %vm404, %v1032, 0
      %v1068 = vsel %vm404, %v1033, 0
      %v1071 = vsel %vm404, %v1034, 0
      %v1074 = vsel %vm404, %v1035, 0
      %v1077 = vsel %vm404, %v1036, 0
      %v1080 = vsel %vm404, %v1037, 0
      %v1083 = vsel %vm404, %v1038, 0
      %v1086 = vsel %vm404, %v1039, 0
      %1088 = vmatpush.bf16.msra.mxu0 0
      %1089 = vmatpush.bf16.msra.mxu0 0
      %1090 = vmatpush.bf16.msra.mxu0 0
      %1091 = vmatpush.bf16.msra.mxu0 0
      %1092 = vmatpush.bf16.msra.mxu0 0
      %1093 = vmatpush.bf16.msra.mxu0 0
      %1094 = vmatpush.bf16.msra.mxu0 %v458
      %1095 = vmatpush.bf16.msra.mxu0 %v401
      %1096 = vmatmul.bf16.gmra.mxu0 %v1041
      %v1097 = vpop.f32.mrf.mxu0
      %v1098 = vadd.f32 %v311, %v1097
      %v1099 = vpop.f32.mrf.mxu0
      %v1100 = vadd.f32 %v311, %v1099
      %1101 = vmatmul.bf16.gmra.mxu0 %v1044
      %v1102 = vpop.f32.mrf.mxu0
      %v1103 = vadd.f32 %v311, %v1102
      %v1104 = vpop.f32.mrf.mxu0
      %v1105 = vadd.f32 %v311, %v1104
      %1106 = vmatmul.bf16.gmra.mxu0 %v1047
      %v1107 = vpop.f32.mrf.mxu0
      %v1108 = vadd.f32 %v311, %v1107
      %v1109 = vpop.f32.mrf.mxu0
      %v1110 = vadd.f32 %v311, %v1109
      %1111 = vmatmul.bf16.gmra.mxu0 %v1050
      %v1112 = vpop.f32.mrf.mxu0
      %v1113 = vadd.f32 %v311, %v1112
      %v1114 = vpop.f32.mrf.mxu0
      %v1115 = vadd.f32 %v311, %v1114
      %1116 = vmatmul.bf16.gmra.mxu0 %v1053
      %v1117 = vpop.f32.mrf.mxu0
      %v1118 = vadd.f32 %v311, %v1117
      %v1119 = vpop.f32.mrf.mxu0
      %v1120 = vadd.f32 %v311, %v1119
      %1121 = vmatmul.bf16.gmra.mxu0 %v1056
      %v1122 = vpop.f32.mrf.mxu0
      %v1123 = vadd.f32 %v311, %v1122
      %v1124 = vpop.f32.mrf.mxu0
      %v1125 = vadd.f32 %v311, %v1124
      %1126 = vmatmul.bf16.gmra.mxu0 %v1059
      %v1127 = vpop.f32.mrf.mxu0
      %v1128 = vadd.f32 %v311, %v1127
      %v1129 = vpop.f32.mrf.mxu0
      %v1130 = vadd.f32 %v311, %v1129
      %1131 = vmatmul.bf16.gmra.mxu0 %v1062
      %v1132 = vpop.f32.mrf.mxu0
      %v1133 = vadd.f32 %v311, %v1132
      %v1134 = vpop.f32.mrf.mxu0
      %v1135 = vadd.f32 %v311, %v1134
      %1136 = vmatmul.bf16.gmra.mxu0 %v1065
      %v1137 = vpop.f32.mrf.mxu0
      %v1138 = vadd.f32 %v311, %v1137
      %v1139 = vpop.f32.mrf.mxu0
      %v1140 = vadd.f32 %v311, %v1139
      %1141 = vmatmul.bf16.gmra.mxu0 %v1068
      %v1142 = vpop.f32.mrf.mxu0
      %v1143 = vadd.f32 %v311, %v1142
      %v1144 = vpop.f32.mrf.mxu0
      %v1145 = vadd.f32 %v311, %v1144
      %1146 = vmatmul.bf16.gmra.mxu0 %v1071
      %v1147 = vpop.f32.mrf.mxu0
      %v1148 = vadd.f32 %v311, %v1147
      %v1149 = vpop.f32.mrf.mxu0
      %v1150 = vadd.f32 %v311, %v1149
      %1151 = vmatmul.bf16.gmra.mxu0 %v1074
      %v1152 = vpop.f32.mrf.mxu0
      %v1153 = vadd.f32 %v311, %v1152
      %v1154 = vpop.f32.mrf.mxu0
      %v1155 = vadd.f32 %v311, %v1154
      %1156 = vmatmul.bf16.gmra.mxu0 %v1077
      %v1157 = vpop.f32.mrf.mxu0
      %v1158 = vadd.f32 %v311, %v1157
      %v1159 = vpop.f32.mrf.mxu0
      %v1160 = vadd.f32 %v311, %v1159
      %1161 = vmatmul.bf16.gmra.mxu0 %v1080
      %v1162 = vpop.f32.mrf.mxu0
      %v1163 = vadd.f32 %v311, %v1162
      %v1164 = vpop.f32.mrf.mxu0
      %v1165 = vadd.f32 %v311, %v1164
      %1166 = vmatmul.bf16.gmra.mxu0 %v1083
      %v1167 = vpop.f32.mrf.mxu0
      %v1168 = vadd.f32 %v311, %v1167
      %v1169 = vpop.f32.mrf.mxu0
      %v1170 = vadd.f32 %v311, %v1169
      %1171 = vmatmul.bf16.gmra.mxu0 %v1086
      %v1172 = vpop.f32.mrf.mxu0
      %v1173 = vadd.f32 %v311, %v1172
      %v1174 = vpop.f32.mrf.mxu0
      %v1175 = vadd.f32 %v311, %v1174
      %1176 = vdwg.mxu0
      %v1177 = vmax.f32 %v1098, 0.0
      %v1178 = vmax.f32 %v1100, 0.0
      %v1179 = vmax.f32 %v1103, 0.0
      %v1180 = vmax.f32 %v1105, 0.0
      %v1181 = vmax.f32 %v1108, 0.0
      %v1182 = vmax.f32 %v1110, 0.0
      %v1183 = vmax.f32 %v1113, 0.0
      %v1184 = vmax.f32 %v1115, 0.0
      %v1185 = vmax.f32 %v1118, 0.0
      %v1186 = vmax.f32 %v1120, 0.0
      %v1187 = vmax.f32 %v1123, 0.0
      %v1188 = vmax.f32 %v1125, 0.0
      %v1189 = vmax.f32 %v1128, 0.0
      %v1190 = vmax.f32 %v1130, 0.0
      %v1191 = vmax.f32 %v1133, 0.0
      %v1192 = vmax.f32 %v1135, 0.0
      %v1193 = vmax.f32 %v1138, 0.0
      %v1194 = vmax.f32 %v1140, 0.0
      %v1195 = vmax.f32 %v1143, 0.0
      %v1196 = vmax.f32 %v1145, 0.0
      %v1197 = vmax.f32 %v1148, 0.0
      %v1198 = vmax.f32 %v1150, 0.0
      %v1199 = vmax.f32 %v1153, 0.0
      %v1200 = vmax.f32 %v1155, 0.0
      %v1201 = vmax.f32 %v1158, 0.0
      %v1202 = vmax.f32 %v1160, 0.0
      %v1203 = vmax.f32 %v1163, 0.0
      %v1204 = vmax.f32 %v1165, 0.0
      %v1205 = vmax.f32 %v1168, 0.0
      %v1206 = vmax.f32 %v1170, 0.0
      %v1207 = vmax.f32 %v1173, 0.0
      %v1208 = vmax.f32 %v1175, 0.0
      %v1209 = vmax.f32 %v1177, %v1193
      %v1210 = vmax.f32 %v1178, %v1194
      %v1211 = vmax.f32 %v1179, %v1195
      %v1212 = vmax.f32 %v1180, %v1196
      %v1213 = vmax.f32 %v1181, %v1197
      %v1214 = vmax.f32 %v1182, %v1198
      %v1215 = vmax.f32 %v1183, %v1199
      %v1216 = vmax.f32 %v1184, %v1200
      %v1217 = vmax.f32 %v1185, %v1201
      %v1218 = vmax.f32 %v1186, %v1202
      %v1219 = vmax.f32 %v1187, %v1203
      %v1220 = vmax.f32 %v1188, %v1204
      %v1221 = vmax.f32 %v1189, %v1205
      %v1222 = vmax.f32 %v1190, %v1206
      %v1223 = vmax.f32 %v1191, %v1207
      %v1224 = vmax.f32 %v1192, %v1208
      %v1225 = vmax.f32 %v1209, %v1211
      %v1226 = vmax.f32 %v1210, %v1212
      %v1227 = vmax.f32 %v1213, %v1215
      %v1228 = vmax.f32 %v1214, %v1216
      %v1229 = vmax.f32 %v1217, %v1219
      %v1230 = vmax.f32 %v1218, %v1220
      %v1231 = vmax.f32 %v1221, %v1223
      %v1232 = vmax.f32 %v1222, %v1224
      %s1233 = scalar_lea.vmem [#allocation2], 216
      %1234 = vst.msk [vmem:[%s1233 + $0x1] sm:$0xff] %vm226, %v1225
      %1235 = vst.msk [vmem:[%s1233 + $0x9] sm:$0xff] %vm226, %v1226
      %1236 = vst.msk [vmem:[%s1233 + $0x19] sm:$0xff] %vm226, %v1227
      %1237 = vst.msk [vmem:[%s1233 + $0x21] sm:$0xff] %vm226, %v1228
      %1238 = vst.msk [vmem:[%s1233 + $0x31] sm:$0xff] %vm226, %v1229
      %1239 = vst.msk [vmem:[%s1233 + $0x39] sm:$0xff] %vm226, %v1230
      %1240 = vst.msk [vmem:[%s1233 + $0x49] sm:$0xff] %vm226, %v1231
      %1241 = vst.msk [vmem:[%s1233 + $0x51] sm:$0xff] %vm226, %v1232
      %v1242 = vld [vmem:[%s219 + $0x180] sm:$0xf]
      %v1243 = vld [vmem:[%s219 + $0x184] sm:$0xf]
      %v1244 = vld [vmem:[%s219 + $0x188] sm:$0xf]
      %v1245 = vld [vmem:[%s219 + $0x18c] sm:$0xf]
      %v1246 = vld [vmem:[%s219 + $0x190] sm:$0xf]
      %v1247 = vld [vmem:[%s219 + $0x194] sm:$0xf]
      %v1248 = vld [vmem:[%s219 + $0x198] sm:$0xf]
      %v1249 = vld [vmem:[%s219 + $0x19c] sm:$0xf]
      %v1250 = vld [vmem:[%s219 + $0x1a0] sm:$0xf]
      %v1251 = vld [vmem:[%s219 + $0x1a4] sm:$0xf]
      %v1252 = vld [vmem:[%s219 + $0x1a8] sm:$0xf]
      %v1253 = vld [vmem:[%s219 + $0x1ac] sm:$0xf]
      %v1254 = vld [vmem:[%s219 + $0x1b0] sm:$0xf]
      %v1255 = vld [vmem:[%s219 + $0x1b4] sm:$0xf]
      %v1256 = vld [vmem:[%s219 + $0x1b8] sm:$0xf]
      %v1257 = vld [vmem:[%s219 + $0x1bc] sm:$0xf]
      %v1258 = vld [vmem:[%s219 + $0x1c0] sm:$0xf]
      %v1259 = vld [vmem:[%s219 + $0x1c4] sm:$0xf]
      %v1260 = vld [vmem:[%s219 + $0x1c8] sm:$0xf]
      %v1261 = vld [vmem:[%s219 + $0x1cc] sm:$0xf]
      %v1262 = vld [vmem:[%s219 + $0x1d0] sm:$0xf]
      %v1263 = vld [vmem:[%s219 + $0x1d4] sm:$0xf]
      %v1264 = vld [vmem:[%s219 + $0x1d8] sm:$0xf]
      %v1265 = vld [vmem:[%s219 + $0x1dc] sm:$0xf]
      %v1266 = vld [vmem:[%s219 + $0x1e0] sm:$0xf]
      %v1267 = vld [vmem:[%s219 + $0x1e4] sm:$0xf]
      %v1268 = vld [vmem:[%s219 + $0x1e8] sm:$0xf]
      %v1269 = vld [vmem:[%s219 + $0x1ec] sm:$0xf]
      %v1270 = vld [vmem:[%s219 + $0x1f0] sm:$0xf]
      %v1271 = vld [vmem:[%s219 + $0x1f4] sm:$0xf]
      %v1272 = vld [vmem:[%s219 + $0x1f8] sm:$0xf]
      %v1273 = vld [vmem:[%s219 + $0x1fc] sm:$0xf]
      %v1306 = vunpack.c.l.b16 %v1242
      %v1307 = vunpack.c.l.b16 %v1243
      %v1308 = vunpack.c.l.b16 %v1244
      %v1309 = vunpack.c.l.b16 %v1245
      %v1310 = vunpack.c.l.b16 %v1246
      %v1311 = vunpack.c.l.b16 %v1247
      %v1312 = vunpack.c.l.b16 %v1248
      %v1313 = vunpack.c.l.b16 %v1249
      %v1314 = vunpack.c.l.b16 %v1250
      %v1315 = vunpack.c.l.b16 %v1251
      %v1316 = vunpack.c.l.b16 %v1252
      %v1317 = vunpack.c.l.b16 %v1253
      %v1318 = vunpack.c.l.b16 %v1254
      %v1319 = vunpack.c.l.b16 %v1255
      %v1320 = vunpack.c.l.b16 %v1256
      %v1321 = vunpack.c.l.b16 %v1257
      %v1322 = vunpack.c.l.b16 %v1258
      %v1323 = vunpack.c.l.b16 %v1259
      %v1324 = vunpack.c.l.b16 %v1260
      %v1325 = vunpack.c.l.b16 %v1261
      %v1326 = vunpack.c.l.b16 %v1262
      %v1327 = vunpack.c.l.b16 %v1263
      %v1328 = vunpack.c.l.b16 %v1264
      %v1329 = vunpack.c.l.b16 %v1265
      %v1330 = vunpack.c.l.b16 %v1266
      %v1331 = vunpack.c.l.b16 %v1267
      %v1332 = vunpack.c.l.b16 %v1268
      %v1333 = vunpack.c.l.b16 %v1269
      %v1334 = vunpack.c.l.b16 %v1270
      %v1335 = vunpack.c.l.b16 %v1271
      %v1336 = vunpack.c.l.b16 %v1272
      %v1337 = vunpack.c.l.b16 %v1273
      %v1338 = vpack.c.b16 %v1307, %v1306
      %v1339 = vpack.c.b16 %v1309, %v1308
      %v1340 = vpack.c.b16 %v1311, %v1310
      %v1341 = vpack.c.b16 %v1313, %v1312
      %v1342 = vpack.c.b16 %v1315, %v1314
      %v1343 = vpack.c.b16 %v1317, %v1316
      %v1344 = vpack.c.b16 %v1319, %v1318
      %v1345 = vpack.c.b16 %v1321, %v1320
      %v1346 = vpack.c.b16 %v1323, %v1322
      %v1347 = vpack.c.b16 %v1325, %v1324
      %v1348 = vpack.c.b16 %v1327, %v1326
      %v1349 = vpack.c.b16 %v1329, %v1328
      %v1350 = vpack.c.b16 %v1331, %v1330
      %v1351 = vpack.c.b16 %v1333, %v1332
      %v1352 = vpack.c.b16 %v1335, %v1334
      %v1353 = vpack.c.b16 %v1337, %v1336
      %v1355 = vsel %vm404, %v1338, 0
      %v1358 = vsel %vm404, %v1339, 0
      %v1361 = vsel %vm404, %v1340, 0
      %v1364 = vsel %vm404, %v1341, 0
      %v1367 = vsel %vm404, %v1342, 0
      %v1370 = vsel %vm404, %v1343, 0
      %v1373 = vsel %vm404, %v1344, 0
      %v1376 = vsel %vm404, %v1345, 0
      %v1379 = vsel %vm404, %v1346, 0
      %v1382 = vsel %vm404, %v1347, 0
      %v1385 = vsel %vm404, %v1348, 0
      %v1388 = vsel %vm404, %v1349, 0
      %v1391 = vsel %vm404, %v1350, 0
      %v1394 = vsel %vm404, %v1351, 0
      %v1397 = vsel %vm404, %v1352, 0
      %v1400 = vsel %vm404, %v1353, 0
      %1402 = vmatpush.bf16.msra.mxu0 0
      %1403 = vmatpush.bf16.msra.mxu0 0
      %1404 = vmatpush.bf16.msra.mxu0 0
      %1405 = vmatpush.bf16.msra.mxu0 0
      %1406 = vmatpush.bf16.msra.mxu0 0
      %1407 = vmatpush.bf16.msra.mxu0 0
      %1408 = vmatpush.bf16.msra.mxu0 %v458
      %1409 = vmatpush.bf16.msra.mxu0 %v401
      %1410 = vmatmul.bf16.gmra.mxu0 %v1355
      %v1411 = vpop.f32.mrf.mxu0
      %v1412 = vadd.f32 %v311, %v1411
      %v1413 = vpop.f32.mrf.mxu0
      %v1414 = vadd.f32 %v311, %v1413
      %1415 = vmatmul.bf16.gmra.mxu0 %v1358
      %v1416 = vpop.f32.mrf.mxu0
      %v1417 = vadd.f32 %v311, %v1416
      %v1418 = vpop.f32.mrf.mxu0
      %v1419 = vadd.f32 %v311, %v1418
      %1420 = vmatmul.bf16.gmra.mxu0 %v1361
      %v1421 = vpop.f32.mrf.mxu0
      %v1422 = vadd.f32 %v311, %v1421
      %v1423 = vpop.f32.mrf.mxu0
      %v1424 = vadd.f32 %v311, %v1423
      %1425 = vmatmul.bf16.gmra.mxu0 %v1364
      %v1426 = vpop.f32.mrf.mxu0
      %v1427 = vadd.f32 %v311, %v1426
      %v1428 = vpop.f32.mrf.mxu0
      %v1429 = vadd.f32 %v311, %v1428
      %1430 = vmatmul.bf16.gmra.mxu0 %v1367
      %v1431 = vpop.f32.mrf.mxu0
      %v1432 = vadd.f32 %v311, %v1431
      %v1433 = vpop.f32.mrf.mxu0
      %v1434 = vadd.f32 %v311, %v1433
      %1435 = vmatmul.bf16.gmra.mxu0 %v1370
      %v1436 = vpop.f32.mrf.mxu0
      %v1437 = vadd.f32 %v311, %v1436
      %v1438 = vpop.f32.mrf.mxu0
      %v1439 = vadd.f32 %v311, %v1438
      %1440 = vmatmul.bf16.gmra.mxu0 %v1373
      %v1441 = vpop.f32.mrf.mxu0
      %v1442 = vadd.f32 %v311, %v1441
      %v1443 = vpop.f32.mrf.mxu0
      %v1444 = vadd.f32 %v311, %v1443
      %1445 = vmatmul.bf16.gmra.mxu0 %v1376
      %v1446 = vpop.f32.mrf.mxu0
      %v1447 = vadd.f32 %v311, %v1446
      %v1448 = vpop.f32.mrf.mxu0
      %v1449 = vadd.f32 %v311, %v1448
      %1450 = vmatmul.bf16.gmra.mxu0 %v1379
      %v1451 = vpop.f32.mrf.mxu0
      %v1452 = vadd.f32 %v311, %v1451
      %v1453 = vpop.f32.mrf.mxu0
      %v1454 = vadd.f32 %v311, %v1453
      %1455 = vmatmul.bf16.gmra.mxu0 %v1382
      %v1456 = vpop.f32.mrf.mxu0
      %v1457 = vadd.f32 %v311, %v1456
      %v1458 = vpop.f32.mrf.mxu0
      %v1459 = vadd.f32 %v311, %v1458
      %1460 = vmatmul.bf16.gmra.mxu0 %v1385
      %v1461 = vpop.f32.mrf.mxu0
      %v1462 = vadd.f32 %v311, %v1461
      %v1463 = vpop.f32.mrf.mxu0
      %v1464 = vadd.f32 %v311, %v1463
      %1465 = vmatmul.bf16.gmra.mxu0 %v1388
      %v1466 = vpop.f32.mrf.mxu0
      %v1467 = vadd.f32 %v311, %v1466
      %v1468 = vpop.f32.mrf.mxu0
      %v1469 = vadd.f32 %v311, %v1468
      %1470 = vmatmul.bf16.gmra.mxu0 %v1391
      %v1471 = vpop.f32.mrf.mxu0
      %v1472 = vadd.f32 %v311, %v1471
      %v1473 = vpop.f32.mrf.mxu0
      %v1474 = vadd.f32 %v311, %v1473
      %1475 = vmatmul.bf16.gmra.mxu0 %v1394
      %v1476 = vpop.f32.mrf.mxu0
      %v1477 = vadd.f32 %v311, %v1476
      %v1478 = vpop.f32.mrf.mxu0
      %v1479 = vadd.f32 %v311, %v1478
      %1480 = vmatmul.bf16.gmra.mxu0 %v1397
      %v1481 = vpop.f32.mrf.mxu0
      %v1482 = vadd.f32 %v311, %v1481
      %v1483 = vpop.f32.mrf.mxu0
      %v1484 = vadd.f32 %v311, %v1483
      %1485 = vmatmul.bf16.gmra.mxu0 %v1400
      %v1486 = vpop.f32.mrf.mxu0
      %v1487 = vadd.f32 %v311, %v1486
      %v1488 = vpop.f32.mrf.mxu0
      %v1489 = vadd.f32 %v311, %v1488
      %1490 = vdwg.mxu0
      %v1491 = vmax.f32 %v1412, 0.0
      %v1492 = vmax.f32 %v1414, 0.0
      %v1493 = vmax.f32 %v1417, 0.0
      %v1494 = vmax.f32 %v1419, 0.0
      %v1495 = vmax.f32 %v1422, 0.0
      %v1496 = vmax.f32 %v1424, 0.0
      %v1497 = vmax.f32 %v1427, 0.0
      %v1498 = vmax.f32 %v1429, 0.0
      %v1499 = vmax.f32 %v1432, 0.0
      %v1500 = vmax.f32 %v1434, 0.0
      %v1501 = vmax.f32 %v1437, 0.0
      %v1502 = vmax.f32 %v1439, 0.0
      %v1503 = vmax.f32 %v1442, 0.0
      %v1504 = vmax.f32 %v1444, 0.0
      %v1505 = vmax.f32 %v1447, 0.0
      %v1506 = vmax.f32 %v1449, 0.0
      %v1507 = vmax.f32 %v1452, 0.0
      %v1508 = vmax.f32 %v1454, 0.0
      %v1509 = vmax.f32 %v1457, 0.0
      %v1510 = vmax.f32 %v1459, 0.0
      %v1511 = vmax.f32 %v1462, 0.0
      %v1512 = vmax.f32 %v1464, 0.0
      %v1513 = vmax.f32 %v1467, 0.0
      %v1514 = vmax.f32 %v1469, 0.0
      %v1515 = vmax.f32 %v1472, 0.0
      %v1516 = vmax.f32 %v1474, 0.0
      %v1517 = vmax.f32 %v1477, 0.0
      %v1518 = vmax.f32 %v1479, 0.0
      %v1519 = vmax.f32 %v1482, 0.0
      %v1520 = vmax.f32 %v1484, 0.0
      %v1521 = vmax.f32 %v1487, 0.0
      %v1522 = vmax.f32 %v1489, 0.0
      %v1523 = vmax.f32 %v1491, %v1507
      %v1524 = vmax.f32 %v1492, %v1508
      %v1525 = vmax.f32 %v1493, %v1509
      %v1526 = vmax.f32 %v1494, %v1510
      %v1527 = vmax.f32 %v1495, %v1511
      %v1528 = vmax.f32 %v1496, %v1512
      %v1529 = vmax.f32 %v1497, %v1513
      %v1530 = vmax.f32 %v1498, %v1514
      %v1531 = vmax.f32 %v1499, %v1515
      %v1532 = vmax.f32 %v1500, %v1516
      %v1533 = vmax.f32 %v1501, %v1517
      %v1534 = vmax.f32 %v1502, %v1518
      %v1535 = vmax.f32 %v1503, %v1519
      %v1536 = vmax.f32 %v1504, %v1520
      %v1537 = vmax.f32 %v1505, %v1521
      %v1538 = vmax.f32 %v1506, %v1522
      %v1539 = vmax.f32 %v1523, %v1525
      %v1540 = vmax.f32 %v1524, %v1526
      %v1541 = vmax.f32 %v1527, %v1529
      %v1542 = vmax.f32 %v1528, %v1530
      %v1543 = vmax.f32 %v1531, %v1533
      %v1544 = vmax.f32 %v1532, %v1534
      %v1545 = vmax.f32 %v1535, %v1537
      %v1546 = vmax.f32 %v1536, %v1538
      %s1547 = scalar_lea.vmem [#allocation2], 312
      %1548 = vst.msk [vmem:[%s1547 + $0x1] sm:$0xff] %vm226, %v1539
      %1549 = vst.msk [vmem:[%s1547 + $0x9] sm:$0xff] %vm226, %v1540
      %1550 = vst.msk [vmem:[%s1547 + $0x19] sm:$0xff] %vm226, %v1541
      %1551 = vst.msk [vmem:[%s1547 + $0x21] sm:$0xff] %vm226, %v1542
      %1552 = vst.msk [vmem:[%s1547 + $0x31] sm:$0xff] %vm226, %v1543
      %1553 = vst.msk [vmem:[%s1547 + $0x39] sm:$0xff] %vm226, %v1544
      %1554 = vst.msk [vmem:[%s1547 + $0x49] sm:$0xff] %vm226, %v1545
      %1555 = vst.msk [vmem:[%s1547 + $0x51] sm:$0xff] %vm226, %v1546
      %v1556 = vld [vmem:[#allocation2] sm:$0xff]
      %v1557 = vld [vmem:[#allocation2 + $0x8] sm:$0xff]
      %v1558 = vld [vmem:[#allocation2 + $0x18] sm:$0xff]
      %v1559 = vld [vmem:[#allocation2 + $0x20] sm:$0xff]
      %v1560 = vld [vmem:[#allocation2 + $0x30] sm:$0xff]
      %v1561 = vld [vmem:[#allocation2 + $0x38] sm:$0xff]
      %v1562 = vld [vmem:[#allocation2 + $0x48] sm:$0xff]
      %v1563 = vld [vmem:[#allocation2 + $0x50] sm:$0xff]
      %v1564 = vld [vmem:[#allocation2 + $0x60] sm:$0xff]
      %v1565 = vld [vmem:[#allocation2 + $0x68] sm:$0xff]
      %v1566 = vld [vmem:[#allocation2 + $0x78] sm:$0xff]
      %v1567 = vld [vmem:[#allocation2 + $0x80] sm:$0xff]
      %v1568 = vld [vmem:[#allocation2 + $0x90] sm:$0xff]
      %v1569 = vld [vmem:[#allocation2 + $0x98] sm:$0xff]
      %v1570 = vld [vmem:[#allocation2 + $0xa8] sm:$0xff]
      %v1571 = vld [vmem:[#allocation2 + $0xb0] sm:$0xff]
      %v1572 = vld [vmem:[#allocation2 + $0xc0] sm:$0xff]
      %v1573 = vld [vmem:[#allocation2 + $0xc8] sm:$0xff]
      %v1574 = vld [vmem:[#allocation2 + $0xd8] sm:$0xff]
      %v1575 = vld [vmem:[#allocation2 + $0xe0] sm:$0xff]
      %v1576 = vld [vmem:[#allocation2 + $0xf0] sm:$0xff]
      %v1577 = vld [vmem:[#allocation2 + $0xf8] sm:$0xff]
      %v1578 = vld [vmem:[#allocation2 + $0x108] sm:$0xff]
      %v1579 = vld [vmem:[#allocation2 + $0x110] sm:$0xff]
      %v1580 = vld [vmem:[#allocation2 + $0x120] sm:$0xff]
      %v1581 = vld [vmem:[#allocation2 + $0x128] sm:$0xff]
      %v1582 = vld [vmem:[#allocation2 + $0x138] sm:$0xff]
      %v1583 = vld [vmem:[#allocation2 + $0x140] sm:$0xff]
      %v1584 = vld [vmem:[#allocation2 + $0x150] sm:$0xff]
      %v1585 = vld [vmem:[#allocation2 + $0x158] sm:$0xff]
      %v1586 = vld [vmem:[#allocation2 + $0x168] sm:$0xff]
      %v1587 = vld [vmem:[#allocation2 + $0x170] sm:$0xff]
      %v1588 = vld [vmem:[#allocation2 + $0x1] sm:$0xff]
      %v1589 = vld [vmem:[#allocation2 + $0x9] sm:$0xff]
      %v1590 = vld [vmem:[#allocation2 + $0x19] sm:$0xff]
      %v1591 = vld [vmem:[#allocation2 + $0x21] sm:$0xff]
      %v1592 = vld [vmem:[#allocation2 + $0x31] sm:$0xff]
      %v1593 = vld [vmem:[#allocation2 + $0x39] sm:$0xff]
      %v1594 = vld [vmem:[#allocation2 + $0x49] sm:$0xff]
      %v1595 = vld [vmem:[#allocation2 + $0x51] sm:$0xff]
      %v1596 = vld [vmem:[#allocation2 + $0x61] sm:$0xff]
      %v1597 = vld [vmem:[#allocation2 + $0x69] sm:$0xff]
      %v1598 = vld [vmem:[#allocation2 + $0x79] sm:$0xff]
      %v1599 = vld [vmem:[#allocation2 + $0x81] sm:$0xff]
      %v1600 = vld [vmem:[#allocation2 + $0x91] sm:$0xff]
      %v1601 = vld [vmem:[#allocation2 + $0x99] sm:$0xff]
      %v1602 = vld [vmem:[#allocation2 + $0xa9] sm:$0xff]
      %v1603 = vld [vmem:[#allocation2 + $0xb1] sm:$0xff]
      %v1604 = vld [vmem:[#allocation2 + $0xc1] sm:$0xff]
      %v1605 = vld [vmem:[#allocation2 + $0xc9] sm:$0xff]
      %v1606 = vld [vmem:[#allocation2 + $0xd9] sm:$0xff]
      %v1607 = vld [vmem:[#allocation2 + $0xe1] sm:$0xff]
      %v1608 = vld [vmem:[#allocation2 + $0xf1] sm:$0xff]
      %v1609 = vld [vmem:[#allocation2 + $0xf9] sm:$0xff]
      %v1610 = vld [vmem:[#allocation2 + $0x109] sm:$0xff]
      %v1611 = vld [vmem:[#allocation2 + $0x111] sm:$0xff]
      %v1612 = vld [vmem:[#allocation2 + $0x121] sm:$0xff]
      %v1613 = vld [vmem:[#allocation2 + $0x129] sm:$0xff]
      %v1614 = vld [vmem:[#allocation2 + $0x139] sm:$0xff]
      %v1615 = vld [vmem:[#allocation2 + $0x141] sm:$0xff]
      %v1616 = vld [vmem:[#allocation2 + $0x151] sm:$0xff]
      %v1617 = vld [vmem:[#allocation2 + $0x159] sm:$0xff]
      %v1618 = vld [vmem:[#allocation2 + $0x169] sm:$0xff]
      %v1619 = vld [vmem:[#allocation2 + $0x171] sm:$0xff]
      %v1620 = vld [vmem:[#allocation2 + $0x2] sm:$0xff]
      %v1621 = vld [vmem:[#allocation2 + $0xa] sm:$0xff]
      %v1622 = vld [vmem:[#allocation2 + $0x1a] sm:$0xff]
      %v1623 = vld [vmem:[#allocation2 + $0x22] sm:$0xff]
      %v1624 = vld [vmem:[#allocation2 + $0x32] sm:$0xff]
      %v1625 = vld [vmem:[#allocation2 + $0x3a] sm:$0xff]
      %v1626 = vld [vmem:[#allocation2 + $0x4a] sm:$0xff]
      %v1627 = vld [vmem:[#allocation2 + $0x52] sm:$0xff]
      %v1628 = vld [vmem:[#allocation2 + $0x62] sm:$0xff]
      %v1629 = vld [vmem:[#allocation2 + $0x6a] sm:$0xff]
      %v1630 = vld [vmem:[#allocation2 + $0x7a] sm:$0xff]
      %v1631 = vld [vmem:[#allocation2 + $0x82] sm:$0xff]
      %v1632 = vld [vmem:[#allocation2 + $0x92] sm:$0xff]
      %v1633 = vld [vmem:[#allocation2 + $0x9a] sm:$0xff]
      %v1634 = vld [vmem:[#allocation2 + $0xaa] sm:$0xff]
      %v1635 = vld [vmem:[#allocation2 + $0xb2] sm:$0xff]
      %v1636 = vld [vmem:[#allocation2 + $0xc2] sm:$0xff]
      %v1637 = vld [vmem:[#allocation2 + $0xca] sm:$0xff]
      %v1638 = vld [vmem:[#allocation2 + $0xda] sm:$0xff]
      %v1639 = vld [vmem:[#allocation2 + $0xe2] sm:$0xff]
      %v1640 = vld [vmem:[#allocation2 + $0xf2] sm:$0xff]
      %v1641 = vld [vmem:[#allocation2 + $0xfa] sm:$0xff]
      %v1642 = vld [vmem:[#allocation2 + $0x10a] sm:$0xff]
      %v1643 = vld [vmem:[#allocation2 + $0x112] sm:$0xff]
      %v1644 = vld [vmem:[#allocation2 + $0x122] sm:$0xff]
      %v1645 = vld [vmem:[#allocation2 + $0x12a] sm:$0xff]
      %v1646 = vld [vmem:[#allocation2 + $0x13a] sm:$0xff]
      %v1647 = vld [vmem:[#allocation2 + $0x142] sm:$0xff]
      %v1648 = vld [vmem:[#allocation2 + $0x152] sm:$0xff]
      %v1649 = vld [vmem:[#allocation2 + $0x15a] sm:$0xff]
      %v1650 = vld [vmem:[#allocation2 + $0x16a] sm:$0xff]
      %v1651 = vld [vmem:[#allocation2 + $0x172] sm:$0xff]
      %1684 = vrot.lane.b32.xlu0 %v1588, 64
      %v1685 = vpop.permute.xlu0 %1684
      %1686 = vrot.lane.b32.xlu0 %v1589, 64
      %v1687 = vpop.permute.xlu0 %1686
      %1688 = vrot.lane.b32.xlu0 %v1590, 64
      %v1689 = vpop.permute.xlu0 %1688
      %1690 = vrot.lane.b32.xlu0 %v1591, 64
      %v1691 = vpop.permute.xlu0 %1690
      %1692 = vrot.lane.b32.xlu0 %v1592, 64
      %v1693 = vpop.permute.xlu0 %1692
      %1694 = vrot.lane.b32.xlu0 %v1593, 64
      %v1695 = vpop.permute.xlu0 %1694
      %1696 = vrot.lane.b32.xlu0 %v1594, 64
      %v1697 = vpop.permute.xlu0 %1696
      %1698 = vrot.lane.b32.xlu0 %v1595, 64
      %v1699 = vpop.permute.xlu0 %1698
      %1700 = vrot.lane.b32.xlu0 %v1596, 64
      %v1701 = vpop.permute.xlu0 %1700
      %1702 = vrot.lane.b32.xlu0 %v1597, 64
      %v1703 = vpop.permute.xlu0 %1702
      %1704 = vrot.lane.b32.xlu0 %v1598, 64
      %v1705 = vpop.permute.xlu0 %1704
      %1706 = vrot.lane.b32.xlu0 %v1599, 64
      %v1707 = vpop.permute.xlu0 %1706
      %1708 = vrot.lane.b32.xlu0 %v1600, 64
      %v1709 = vpop.permute.xlu0 %1708
      %1710 = vrot.lane.b32.xlu0 %v1601, 64
      %v1711 = vpop.permute.xlu0 %1710
      %1712 = vrot.lane.b32.xlu0 %v1602, 64
      %v1713 = vpop.permute.xlu0 %1712
      %1714 = vrot.lane.b32.xlu0 %v1603, 64
      %v1715 = vpop.permute.xlu0 %1714
      %1716 = vrot.lane.b32.xlu0 %v1604, 64
      %v1717 = vpop.permute.xlu0 %1716
      %1718 = vrot.lane.b32.xlu0 %v1605, 64
      %v1719 = vpop.permute.xlu0 %1718
      %1720 = vrot.lane.b32.xlu0 %v1606, 64
      %v1721 = vpop.permute.xlu0 %1720
      %1722 = vrot.lane.b32.xlu0 %v1607, 64
      %v1723 = vpop.permute.xlu0 %1722
      %1724 = vrot.lane.b32.xlu0 %v1608, 64
      %v1725 = vpop.permute.xlu0 %1724
      %1726 = vrot.lane.b32.xlu0 %v1609, 64
      %v1727 = vpop.permute.xlu0 %1726
      %1728 = vrot.lane.b32.xlu0 %v1610, 64
      %v1729 = vpop.permute.xlu0 %1728
      %1730 = vrot.lane.b32.xlu0 %v1611, 64
      %v1731 = vpop.permute.xlu0 %1730
      %1732 = vrot.lane.b32.xlu0 %v1612, 64
      %v1733 = vpop.permute.xlu0 %1732
      %1734 = vrot.lane.b32.xlu0 %v1613, 64
      %v1735 = vpop.permute.xlu0 %1734
      %1736 = vrot.lane.b32.xlu0 %v1614, 64
      %v1737 = vpop.permute.xlu0 %1736
      %1738 = vrot.lane.b32.xlu0 %v1615, 64
      %v1739 = vpop.permute.xlu0 %1738
      %1740 = vrot.lane.b32.xlu0 %v1616, 64
      %v1741 = vpop.permute.xlu0 %1740
      %1742 = vrot.lane.b32.xlu0 %v1617, 64
      %v1743 = vpop.permute.xlu0 %1742
      %1744 = vrot.lane.b32.xlu0 %v1618, 64
      %v1745 = vpop.permute.xlu0 %1744
      %1746 = vrot.lane.b32.xlu0 %v1619, 64
      %v1747 = vpop.permute.xlu0 %1746
      %v1780 = vsel %vm226, %v1556, %v1685
      %v1781 = vsel %vm226, %v1557, %v1687
      %v1782 = vsel %vm226, %v1558, %v1689
      %v1783 = vsel %vm226, %v1559, %v1691
      %v1784 = vsel %vm226, %v1560, %v1693
      %v1785 = vsel %vm226, %v1561, %v1695
      %v1786 = vsel %vm226, %v1562, %v1697
      %v1787 = vsel %vm226, %v1563, %v1699
      %v1788 = vsel %vm226, %v1564, %v1701
      %v1789 = vsel %vm226, %v1565, %v1703
      %v1790 = vsel %vm226, %v1566, %v1705
      %v1791 = vsel %vm226, %v1567, %v1707
      %v1792 = vsel %vm226, %v1568, %v1709
      %v1793 = vsel %vm226, %v1569, %v1711
      %v1794 = vsel %vm226, %v1570, %v1713
      %v1795 = vsel %vm226, %v1571, %v1715
      %v1796 = vsel %vm226, %v1572, %v1717
      %v1797 = vsel %vm226, %v1573, %v1719
      %v1798 = vsel %vm226, %v1574, %v1721
      %v1799 = vsel %vm226, %v1575, %v1723
      %v1800 = vsel %vm226, %v1576, %v1725
      %v1801 = vsel %vm226, %v1577, %v1727
      %v1802 = vsel %vm226, %v1578, %v1729
      %v1803 = vsel %vm226, %v1579, %v1731
      %v1804 = vsel %vm226, %v1580, %v1733
      %v1805 = vsel %vm226, %v1581, %v1735
      %v1806 = vsel %vm226, %v1582, %v1737
      %v1807 = vsel %vm226, %v1583, %v1739
      %v1808 = vsel %vm226, %v1584, %v1741
      %v1809 = vsel %vm226, %v1585, %v1743
      %v1810 = vsel %vm226, %v1586, %v1745
      %v1811 = vsel %vm226, %v1587, %v1747
      %v1812 = vpack.c.bf16 %v1781, %v1780
      %v1813 = vpack.c.bf16 %v1621, %v1620
      %v1814 = vpack.c.bf16 %v1783, %v1782
      %v1815 = vpack.c.bf16 %v1623, %v1622
      %v1816 = vpack.c.bf16 %v1785, %v1784
      %v1817 = vpack.c.bf16 %v1625, %v1624
      %v1818 = vpack.c.bf16 %v1787, %v1786
      %v1819 = vpack.c.bf16 %v1627, %v1626
      %v1820 = vpack.c.bf16 %v1789, %v1788
      %v1821 = vpack.c.bf16 %v1629, %v1628
      %v1822 = vpack.c.bf16 %v1791, %v1790
      %v1823 = vpack.c.bf16 %v1631, %v1630
      %v1824 = vpack.c.bf16 %v1793, %v1792
      %v1825 = vpack.c.bf16 %v1633, %v1632
      %v1826 = vpack.c.bf16 %v1795, %v1794
      %v1827 = vpack.c.bf16 %v1635, %v1634
      %v1828 = vpack.c.bf16 %v1797, %v1796
      %v1829 = vpack.c.bf16 %v1637, %v1636
      %v1830 = vpack.c.bf16 %v1799, %v1798
      %v1831 = vpack.c.bf16 %v1639, %v1638
      %v1832 = vpack.c.bf16 %v1801, %v1800
      %v1833 = vpack.c.bf16 %v1641, %v1640
      %v1834 = vpack.c.bf16 %v1803, %v1802
      %v1835 = vpack.c.bf16 %v1643, %v1642
      %v1836 = vpack.c.bf16 %v1805, %v1804
      %v1837 = vpack.c.bf16 %v1645, %v1644
      %v1838 = vpack.c.bf16 %v1807, %v1806
      %v1839 = vpack.c.bf16 %v1647, %v1646
      %v1840 = vpack.c.bf16 %v1809, %v1808
      %v1841 = vpack.c.bf16 %v1649, %v1648
      %v1842 = vpack.c.bf16 %v1811, %v1810
      %v1843 = vpack.c.bf16 %v1651, %v1650
      %v1844 = vld [vmem:[%s3] sm:$0xf]
      %v1845 = vld [vmem:[%s3 + $0x4] sm:$0xf]
      %v1846 = vld [vmem:[%s3 + $0x8] sm:$0xf]
      %v1847 = vld [vmem:[%s3 + $0xc] sm:$0xf]
      %v1848 = vld [vmem:[%s3 + $0x10] sm:$0xf]
      %v1849 = vld [vmem:[%s3 + $0x14] sm:$0xf]
      %v1850 = vld [vmem:[%s3 + $0x18] sm:$0xf]
      %v1851 = vld [vmem:[%s3 + $0x1c] sm:$0xf]
      %v1852 = vld [vmem:[%s3 + $0x20] sm:$0xf]
      %v1853 = vld [vmem:[%s3 + $0x24] sm:$0xf]
      %v1854 = vld [vmem:[%s3 + $0x28] sm:$0xf]
      %v1855 = vld [vmem:[%s3 + $0x2c] sm:$0xf]
      %v1856 = vld [vmem:[%s3 + $0x30] sm:$0xf]
      %v1857 = vld [vmem:[%s3 + $0x34] sm:$0xf]
      %v1858 = vld [vmem:[%s3 + $0x38] sm:$0xf]
      %v1859 = vld [vmem:[%s3 + $0x3c] sm:$0xf]
      %v1860 = vld [vmem:[%s3 + $0x40] sm:$0xf]
      %v1861 = vld [vmem:[%s3 + $0x44] sm:$0xf]
      %v1862 = vld [vmem:[%s3 + $0x48] sm:$0xf]
      %v1863 = vld [vmem:[%s3 + $0x4c] sm:$0xf]
      %v1864 = vld [vmem:[%s3 + $0x50] sm:$0xf]
      %v1865 = vld [vmem:[%s3 + $0x54] sm:$0xf]
      %v1866 = vld [vmem:[%s3 + $0x58] sm:$0xf]
      %v1867 = vld [vmem:[%s3 + $0x5c] sm:$0xf]
      %v1868 = vld [vmem:[%s605] sm:$0xff]
      %v1869 = vld [vmem:[%s605 + $0x8] sm:$0xff]
      %v1870 = vld [vmem:[%s605 + $0x18] sm:$0xff]
      %v1871 = vld [vmem:[%s605 + $0x20] sm:$0xff]
      %v1872 = vld [vmem:[%s605 + $0x30] sm:$0xff]
      %v1873 = vld [vmem:[%s605 + $0x38] sm:$0xff]
      %v1874 = vld [vmem:[%s605 + $0x48] sm:$0xff]
      %v1875 = vld [vmem:[%s605 + $0x50] sm:$0xff]
      %v1876 = vld [vmem:[%s605 + $0x60] sm:$0xff]
      %v1877 = vld [vmem:[%s605 + $0x68] sm:$0xff]
      %v1878 = vld [vmem:[%s605 + $0x78] sm:$0xff]
      %v1879 = vld [vmem:[%s605 + $0x80] sm:$0xff]
      %v1880 = vld [vmem:[%s605 + $0x90] sm:$0xff]
      %v1881 = vld [vmem:[%s605 + $0x98] sm:$0xff]
      %v1882 = vld [vmem:[%s605 + $0xa8] sm:$0xff]
      %v1883 = vld [vmem:[%s605 + $0xb0] sm:$0xff]
      %v1884 = vld [vmem:[%s605 + $0xc0] sm:$0xff]
      %v1885 = vld [vmem:[%s605 + $0xc8] sm:$0xff]
      %v1886 = vld [vmem:[%s605 + $0xd8] sm:$0xff]
      %v1887 = vld [vmem:[%s605 + $0xe0] sm:$0xff]
      %v1888 = vld [vmem:[%s605 + $0xf0] sm:$0xff]
      %v1889 = vld [vmem:[%s605 + $0xf8] sm:$0xff]
      %v1890 = vld [vmem:[%s605 + $0x108] sm:$0xff]
      %v1891 = vld [vmem:[%s605 + $0x110] sm:$0xff]
      %v1892 = vld [vmem:[%s605 + $0x120] sm:$0xff]
      %v1893 = vld [vmem:[%s605 + $0x128] sm:$0xff]
      %v1894 = vld [vmem:[%s605 + $0x138] sm:$0xff]
      %v1895 = vld [vmem:[%s605 + $0x140] sm:$0xff]
      %v1896 = vld [vmem:[%s605 + $0x150] sm:$0xff]
      %v1897 = vld [vmem:[%s605 + $0x158] sm:$0xff]
      %v1898 = vld [vmem:[%s605 + $0x168] sm:$0xff]
      %v1899 = vld [vmem:[%s605 + $0x170] sm:$0xff]
      %v1900 = vld [vmem:[%s605 + $0x1] sm:$0xff]
      %v1901 = vld [vmem:[%s605 + $0x9] sm:$0xff]
      %v1902 = vld [vmem:[%s605 + $0x19] sm:$0xff]
      %v1903 = vld [vmem:[%s605 + $0x21] sm:$0xff]
      %v1904 = vld [vmem:[%s605 + $0x31] sm:$0xff]
      %v1905 = vld [vmem:[%s605 + $0x39] sm:$0xff]
      %v1906 = vld [vmem:[%s605 + $0x49] sm:$0xff]
      %v1907 = vld [vmem:[%s605 + $0x51] sm:$0xff]
      %v1908 = vld [vmem:[%s605 + $0x61] sm:$0xff]
      %v1909 = vld [vmem:[%s605 + $0x69] sm:$0xff]
      %v1910 = vld [vmem:[%s605 + $0x79] sm:$0xff]
      %v1911 = vld [vmem:[%s605 + $0x81] sm:$0xff]
      %v1912 = vld [vmem:[%s605 + $0x91] sm:$0xff]
      %v1913 = vld [vmem:[%s605 + $0x99] sm:$0xff]
      %v1914 = vld [vmem:[%s605 + $0xa9] sm:$0xff]
      %v1915 = vld [vmem:[%s605 + $0xb1] sm:$0xff]
      %v1916 = vld [vmem:[%s605 + $0xc1] sm:$0xff]
      %v1917 = vld [vmem:[%s605 + $0xc9] sm:$0xff]
      %v1918 = vld [vmem:[%s605 + $0xd9] sm:$0xff]
      %v1919 = vld [vmem:[%s605 + $0xe1] sm:$0xff]
      %v1920 = vld [vmem:[%s605 + $0xf1] sm:$0xff]
      %v1921 = vld [vmem:[%s605 + $0xf9] sm:$0xff]
      %v1922 = vld [vmem:[%s605 + $0x109] sm:$0xff]
      %v1923 = vld [vmem:[%s605 + $0x111] sm:$0xff]
      %v1924 = vld [vmem:[%s605 + $0x121] sm:$0xff]
      %v1925 = vld [vmem:[%s605 + $0x129] sm:$0xff]
      %v1926 = vld [vmem:[%s605 + $0x139] sm:$0xff]
      %v1927 = vld [vmem:[%s605 + $0x141] sm:$0xff]
      %v1928 = vld [vmem:[%s605 + $0x151] sm:$0xff]
      %v1929 = vld [vmem:[%s605 + $0x159] sm:$0xff]
      %v1930 = vld [vmem:[%s605 + $0x169] sm:$0xff]
      %v1931 = vld [vmem:[%s605 + $0x171] sm:$0xff]
      %v1932 = vld [vmem:[%s605 + $0x2] sm:$0xff]
      %v1933 = vld [vmem:[%s605 + $0xa] sm:$0xff]
      %v1934 = vld [vmem:[%s605 + $0x1a] sm:$0xff]
      %v1935 = vld [vmem:[%s605 + $0x22] sm:$0xff]
      %v1936 = vld [vmem:[%s605 + $0x32] sm:$0xff]
      %v1937 = vld [vmem:[%s605 + $0x3a] sm:$0xff]
      %v1938 = vld [vmem:[%s605 + $0x4a] sm:$0xff]
      %v1939 = vld [vmem:[%s605 + $0x52] sm:$0xff]
      %v1940 = vld [vmem:[%s605 + $0x62] sm:$0xff]
      %v1941 = vld [vmem:[%s605 + $0x6a] sm:$0xff]
      %v1942 = vld [vmem:[%s605 + $0x7a] sm:$0xff]
      %v1943 = vld [vmem:[%s605 + $0x82] sm:$0xff]
      %v1944 = vld [vmem:[%s605 + $0x92] sm:$0xff]
      %v1945 = vld [vmem:[%s605 + $0x9a] sm:$0xff]
      %v1946 = vld [vmem:[%s605 + $0xaa] sm:$0xff]
      %v1947 = vld [vmem:[%s605 + $0xb2] sm:$0xff]
      %v1948 = vld [vmem:[%s605 + $0xc2] sm:$0xff]
      %v1949 = vld [vmem:[%s605 + $0xca] sm:$0xff]
      %v1950 = vld [vmem:[%s605 + $0xda] sm:$0xff]
      %v1951 = vld [vmem:[%s605 + $0xe2] sm:$0xff]
      %v1952 = vld [vmem:[%s605 + $0xf2] sm:$0xff]
      %v1953 = vld [vmem:[%s605 + $0xfa] sm:$0xff]
      %v1954 = vld [vmem:[%s605 + $0x10a] sm:$0xff]
      %v1955 = vld [vmem:[%s605 + $0x112] sm:$0xff]
      %v1956 = vld [vmem:[%s605 + $0x122] sm:$0xff]
      %v1957 = vld [vmem:[%s605 + $0x12a] sm:$0xff]
      %v1958 = vld [vmem:[%s605 + $0x13a] sm:$0xff]
      %v1959 = vld [vmem:[%s605 + $0x142] sm:$0xff]
      %v1960 = vld [vmem:[%s605 + $0x152] sm:$0xff]
      %v1961 = vld [vmem:[%s605 + $0x15a] sm:$0xff]
      %v1962 = vld [vmem:[%s605 + $0x16a] sm:$0xff]
      %v1963 = vld [vmem:[%s605 + $0x172] sm:$0xff]
      %1996 = vrot.lane.b32.xlu0 %v1900, 64
      %v1997 = vpop.permute.xlu0 %1996
      %1998 = vrot.lane.b32.xlu0 %v1901, 64
      %v1999 = vpop.permute.xlu0 %1998
      %2000 = vrot.lane.b32.xlu0 %v1902, 64
      %v2001 = vpop.permute.xlu0 %2000
      %2002 = vrot.lane.b32.xlu0 %v1903, 64
      %v2003 = vpop.permute.xlu0 %2002
      %2004 = vrot.lane.b32.xlu0 %v1904, 64
      %v2005 = vpop.permute.xlu0 %2004
      %2006 = vrot.lane.b32.xlu0 %v1905, 64
      %v2007 = vpop.permute.xlu0 %2006
      %2008 = vrot.lane.b32.xlu0 %v1906, 64
      %v2009 = vpop.permute.xlu0 %2008
      %2010 = vrot.lane.b32.xlu0 %v1907, 64
      %v2011 = vpop.permute.xlu0 %2010
      %2012 = vrot.lane.b32.xlu0 %v1908, 64
      %v2013 = vpop.permute.xlu0 %2012
      %2014 = vrot.lane.b32.xlu0 %v1909, 64
      %v2015 = vpop.permute.xlu0 %2014
      %2016 = vrot.lane.b32.xlu0 %v1910, 64
      %v2017 = vpop.permute.xlu0 %2016
      %2018 = vrot.lane.b32.xlu0 %v1911, 64
      %v2019 = vpop.permute.xlu0 %2018
      %2020 = vrot.lane.b32.xlu0 %v1912, 64
      %v2021 = vpop.permute.xlu0 %2020
      %2022 = vrot.lane.b32.xlu0 %v1913, 64
      %v2023 = vpop.permute.xlu0 %2022
      %2024 = vrot.lane.b32.xlu0 %v1914, 64
      %v2025 = vpop.permute.xlu0 %2024
      %2026 = vrot.lane.b32.xlu0 %v1915, 64
      %v2027 = vpop.permute.xlu0 %2026
      %2028 = vrot.lane.b32.xlu0 %v1916, 64
      %v2029 = vpop.permute.xlu0 %2028
      %2030 = vrot.lane.b32.xlu0 %v1917, 64
      %v2031 = vpop.permute.xlu0 %2030
      %2032 = vrot.lane.b32.xlu0 %v1918, 64
      %v2033 = vpop.permute.xlu0 %2032
      %2034 = vrot.lane.b32.xlu0 %v1919, 64
      %v2035 = vpop.permute.xlu0 %2034
      %2036 = vrot.lane.b32.xlu0 %v1920, 64
      %v2037 = vpop.permute.xlu0 %2036
      %2038 = vrot.lane.b32.xlu0 %v1921, 64
      %v2039 = vpop.permute.xlu0 %2038
      %2040 = vrot.lane.b32.xlu0 %v1922, 64
      %v2041 = vpop.permute.xlu0 %2040
      %2042 = vrot.lane.b32.xlu0 %v1923, 64
      %v2043 = vpop.permute.xlu0 %2042
      %2044 = vrot.lane.b32.xlu0 %v1924, 64
      %v2045 = vpop.permute.xlu0 %2044
      %2046 = vrot.lane.b32.xlu0 %v1925, 64
      %v2047 = vpop.permute.xlu0 %2046
      %2048 = vrot.lane.b32.xlu0 %v1926, 64
      %v2049 = vpop.permute.xlu0 %2048
      %2050 = vrot.lane.b32.xlu0 %v1927, 64
      %v2051 = vpop.permute.xlu0 %2050
      %2052 = vrot.lane.b32.xlu0 %v1928, 64
      %v2053 = vpop.permute.xlu0 %2052
      %2054 = vrot.lane.b32.xlu0 %v1929, 64
      %v2055 = vpop.permute.xlu0 %2054
      %2056 = vrot.lane.b32.xlu0 %v1930, 64
      %v2057 = vpop.permute.xlu0 %2056
      %2058 = vrot.lane.b32.xlu0 %v1931, 64
      %v2059 = vpop.permute.xlu0 %2058
      %v2092 = vsel %vm226, %v1868, %v1997
      %v2093 = vsel %vm226, %v1869, %v1999
      %v2094 = vsel %vm226, %v1870, %v2001
      %v2095 = vsel %vm226, %v1871, %v2003
      %v2096 = vsel %vm226, %v1872, %v2005
      %v2097 = vsel %vm226, %v1873, %v2007
      %v2098 = vsel %vm226, %v1874, %v2009
      %v2099 = vsel %vm226, %v1875, %v2011
      %v2100 = vsel %vm226, %v1876, %v2013
      %v2101 = vsel %vm226, %v1877, %v2015
      %v2102 = vsel %vm226, %v1878, %v2017
      %v2103 = vsel %vm226, %v1879, %v2019
      %v2104 = vsel %vm226, %v1880, %v2021
      %v2105 = vsel %vm226, %v1881, %v2023
      %v2106 = vsel %vm226, %v1882, %v2025
      %v2107 = vsel %vm226, %v1883, %v2027
      %v2108 = vsel %vm226, %v1884, %v2029
      %v2109 = vsel %vm226, %v1885, %v2031
      %v2110 = vsel %vm226, %v1886, %v2033
      %v2111 = vsel %vm226, %v1887, %v2035
      %v2112 = vsel %vm226, %v1888, %v2037
      %v2113 = vsel %vm226, %v1889, %v2039
      %v2114 = vsel %vm226, %v1890, %v2041
      %v2115 = vsel %vm226, %v1891, %v2043
      %v2116 = vsel %vm226, %v1892, %v2045
      %v2117 = vsel %vm226, %v1893, %v2047
      %v2118 = vsel %vm226, %v1894, %v2049
      %v2119 = vsel %vm226, %v1895, %v2051
      %v2120 = vsel %vm226, %v1896, %v2053
      %v2121 = vsel %vm226, %v1897, %v2055
      %v2122 = vsel %vm226, %v1898, %v2057
      %v2123 = vsel %vm226, %v1899, %v2059
      %v2124 = vpack.c.bf16 %v2093, %v2092
      %v2125 = vpack.c.bf16 %v1933, %v1932
      %v2126 = vpack.c.bf16 %v2095, %v2094
      %v2127 = vpack.c.bf16 %v1935, %v1934
      %v2128 = vpack.c.bf16 %v2097, %v2096
      %v2129 = vpack.c.bf16 %v1937, %v1936
      %v2130 = vpack.c.bf16 %v2099, %v2098
      %v2131 = vpack.c.bf16 %v1939, %v1938
      %v2132 = vpack.c.bf16 %v2101, %v2100
      %v2133 = vpack.c.bf16 %v1941, %v1940
      %v2134 = vpack.c.bf16 %v2103, %v2102
      %v2135 = vpack.c.bf16 %v1943, %v1942
      %v2136 = vpack.c.bf16 %v2105, %v2104
      %v2137 = vpack.c.bf16 %v1945, %v1944
      %v2138 = vpack.c.bf16 %v2107, %v2106
      %v2139 = vpack.c.bf16 %v1947, %v1946
      %v2140 = vpack.c.bf16 %v2109, %v2108
      %v2141 = vpack.c.bf16 %v1949, %v1948
      %v2142 = vpack.c.bf16 %v2111, %v2110
      %v2143 = vpack.c.bf16 %v1951, %v1950
      %v2144 = vpack.c.bf16 %v2113, %v2112
      %v2145 = vpack.c.bf16 %v1953, %v1952
      %v2146 = vpack.c.bf16 %v2115, %v2114
      %v2147 = vpack.c.bf16 %v1955, %v1954
      %v2148 = vpack.c.bf16 %v2117, %v2116
      %v2149 = vpack.c.bf16 %v1957, %v1956
      %v2150 = vpack.c.bf16 %v2119, %v2118
      %v2151 = vpack.c.bf16 %v1959, %v1958
      %v2152 = vpack.c.bf16 %v2121, %v2120
      %v2153 = vpack.c.bf16 %v1961, %v1960
      %v2154 = vpack.c.bf16 %v2123, %v2122
      %v2155 = vpack.c.bf16 %v1963, %v1962
      %s2156 = scalar_lea.vmem %s3, 96
      %v2157 = vld [vmem:[%s2156] sm:$0xf]
      %v2158 = vld [vmem:[%s2156 + $0x4] sm:$0xf]
      %v2159 = vld [vmem:[%s2156 + $0x8] sm:$0xf]
      %v2160 = vld [vmem:[%s2156 + $0xc] sm:$0xf]
      %v2161 = vld [vmem:[%s2156 + $0x10] sm:$0xf]
      %v2162 = vld [vmem:[%s2156 + $0x14] sm:$0xf]
      %v2163 = vld [vmem:[%s2156 + $0x18] sm:$0xf]
      %v2164 = vld [vmem:[%s2156 + $0x1c] sm:$0xf]
      %v2165 = vld [vmem:[%s2156 + $0x20] sm:$0xf]
      %v2166 = vld [vmem:[%s2156 + $0x24] sm:$0xf]
      %v2167 = vld [vmem:[%s2156 + $0x28] sm:$0xf]
      %v2168 = vld [vmem:[%s2156 + $0x2c] sm:$0xf]
      %v2169 = vld [vmem:[%s2156 + $0x30] sm:$0xf]
      %v2170 = vld [vmem:[%s2156 + $0x34] sm:$0xf]
      %v2171 = vld [vmem:[%s2156 + $0x38] sm:$0xf]
      %v2172 = vld [vmem:[%s2156 + $0x3c] sm:$0xf]
      %v2173 = vld [vmem:[%s2156 + $0x40] sm:$0xf]
      %v2174 = vld [vmem:[%s2156 + $0x44] sm:$0xf]
      %v2175 = vld [vmem:[%s2156 + $0x48] sm:$0xf]
      %v2176 = vld [vmem:[%s2156 + $0x4c] sm:$0xf]
      %v2177 = vld [vmem:[%s2156 + $0x50] sm:$0xf]
      %v2178 = vld [vmem:[%s2156 + $0x54] sm:$0xf]
      %v2179 = vld [vmem:[%s2156 + $0x58] sm:$0xf]
      %v2180 = vld [vmem:[%s2156 + $0x5c] sm:$0xf]
      %v2205 = vunpack.c.l.b16 %v2157
      %v2206 = vunpack.c.l.b16 %v2158
      %v2207 = vunpack.c.l.b16 %v2159
      %v2208 = vunpack.c.l.b16 %v2160
      %v2209 = vunpack.c.l.b16 %v2161
      %v2210 = vunpack.c.l.b16 %v2162
      %v2211 = vunpack.c.l.b16 %v2163
      %v2212 = vunpack.c.l.b16 %v2164
      %v2213 = vunpack.c.l.b16 %v2165
      %v2214 = vunpack.c.l.b16 %v2166
      %v2215 = vunpack.c.l.b16 %v2167
      %v2216 = vunpack.c.l.b16 %v2168
      %v2217 = vunpack.c.l.b16 %v2169
      %v2218 = vunpack.c.l.b16 %v2170
      %v2219 = vunpack.c.l.b16 %v2171
      %v2220 = vunpack.c.l.b16 %v2172
      %v2221 = vunpack.c.l.b16 %v2173
      %v2222 = vunpack.c.l.b16 %v2174
      %v2223 = vunpack.c.l.b16 %v2175
      %v2224 = vunpack.c.l.b16 %v2176
      %v2225 = vunpack.c.l.b16 %v2177
      %v2226 = vunpack.c.l.b16 %v2178
      %v2227 = vunpack.c.l.b16 %v2179
      %v2228 = vunpack.c.l.b16 %v2180
      %v2229 = vpack.c.b16 %v2206, %v2205
      %v2230 = vpack.c.b16 %v2208, %v2207
      %v2231 = vpack.c.b16 %v2210, %v2209
      %v2232 = vpack.c.b16 %v2212, %v2211
      %v2233 = vpack.c.b16 %v2214, %v2213
      %v2234 = vpack.c.b16 %v2216, %v2215
      %v2235 = vpack.c.b16 %v2218, %v2217
      %v2236 = vpack.c.b16 %v2220, %v2219
      %v2237 = vpack.c.b16 %v2222, %v2221
      %v2238 = vpack.c.b16 %v2224, %v2223
      %v2239 = vpack.c.b16 %v2226, %v2225
      %v2240 = vpack.c.b16 %v2228, %v2227
      %v2254 = vsel %vm226, %v2125, 0
      %v2257 = vsel %vm226, %v2127, 0
      %v2260 = vsel %vm226, %v2129, 0
      %v2263 = vsel %vm226, %v2131, 0
      %v2266 = vsel %vm226, %v2133, 0
      %v2269 = vsel %vm226, %v2135, 0
      %v2272 = vsel %vm226, %v2137, 0
      %v2275 = vsel %vm226, %v2139, 0
      %v2278 = vsel %vm226, %v2141, 0
      %v2281 = vsel %vm226, %v2143, 0
      %v2284 = vsel %vm226, %v2145, 0
      %v2287 = vsel %vm226, %v2147, 0
      %v2290 = vsel %vm226, %v2149, 0
      %v2293 = vsel %vm226, %v2151, 0
      %v2296 = vsel %vm226, %v2153, 0
      %v2299 = vsel %vm226, %v2155, 0
      %2301 = vmatpush.bf16.msra.mxu0 %v2236
      %2302 = vmatpush.bf16.msra.mxu0 %v2235
      %2303 = vmatpush.bf16.msra.mxu0 %v2234
      %2304 = vmatpush.bf16.msra.mxu0 %v2233
      %2305 = vmatpush.bf16.msra.mxu0 %v2232
      %2306 = vmatpush.bf16.msra.mxu0 %v2231
      %2307 = vmatpush.bf16.msra.mxu0 %v2230
      %2308 = vmatpush.bf16.msra.mxu0 %v2229
      %2309 = vmatmul.bf16.gmra.mxu0 %v2124
      %v2310 = vpop.f32.mrf.mxu0
      %v2311 = vadd.f32 0.0, %v2310
      %v2312 = vpop.f32.mrf.mxu0
      %v2313 = vadd.f32 0.0, %v2312
      %2314 = vmatmul.bf16.gmra.mxu0 %v2126
      %v2315 = vpop.f32.mrf.mxu0
      %v2316 = vadd.f32 0.0, %v2315
      %v2317 = vpop.f32.mrf.mxu0
      %v2318 = vadd.f32 0.0, %v2317
      %2319 = vmatmul.bf16.gmra.mxu0 %v2128
      %v2320 = vpop.f32.mrf.mxu0
      %v2321 = vadd.f32 0.0, %v2320
      %v2322 = vpop.f32.mrf.mxu0
      %v2323 = vadd.f32 0.0, %v2322
      %2324 = vmatmul.bf16.gmra.mxu0 %v2130
      %v2325 = vpop.f32.mrf.mxu0
      %v2326 = vadd.f32 0.0, %v2325
      %v2327 = vpop.f32.mrf.mxu0
      %v2328 = vadd.f32 0.0, %v2327
      %2329 = vmatmul.bf16.gmra.mxu0 %v2132
      %v2330 = vpop.f32.mrf.mxu0
      %v2331 = vadd.f32 0.0, %v2330
      %v2332 = vpop.f32.mrf.mxu0
      %v2333 = vadd.f32 0.0, %v2332
      %2334 = vmatmul.bf16.gmra.mxu0 %v2134
      %v2335 = vpop.f32.mrf.mxu0
      %v2336 = vadd.f32 0.0, %v2335
      %v2337 = vpop.f32.mrf.mxu0
      %v2338 = vadd.f32 0.0, %v2337
      %2339 = vmatmul.bf16.gmra.mxu0 %v2136
      %v2340 = vpop.f32.mrf.mxu0
      %v2341 = vadd.f32 0.0, %v2340
      %v2342 = vpop.f32.mrf.mxu0
      %v2343 = vadd.f32 0.0, %v2342
      %2344 = vmatmul.bf16.gmra.mxu0 %v2138
      %v2345 = vpop.f32.mrf.mxu0
      %v2346 = vadd.f32 0.0, %v2345
      %v2347 = vpop.f32.mrf.mxu0
      %v2348 = vadd.f32 0.0, %v2347
      %2349 = vmatmul.bf16.gmra.mxu0 %v2140
      %v2350 = vpop.f32.mrf.mxu0
      %v2351 = vadd.f32 0.0, %v2350
      %v2352 = vpop.f32.mrf.mxu0
      %v2353 = vadd.f32 0.0, %v2352
      %2354 = vmatmul.bf16.gmra.mxu0 %v2142
      %v2355 = vpop.f32.mrf.mxu0
      %v2356 = vadd.f32 0.0, %v2355
      %v2357 = vpop.f32.mrf.mxu0
      %v2358 = vadd.f32 0.0, %v2357
      %2359 = vmatmul.bf16.gmra.mxu0 %v2144
      %v2360 = vpop.f32.mrf.mxu0
      %v2361 = vadd.f32 0.0, %v2360
      %v2362 = vpop.f32.mrf.mxu0
      %v2363 = vadd.f32 0.0, %v2362
      %2364 = vmatmul.bf16.gmra.mxu0 %v2146
      %v2365 = vpop.f32.mrf.mxu0
      %v2366 = vadd.f32 0.0, %v2365
      %v2367 = vpop.f32.mrf.mxu0
      %v2368 = vadd.f32 0.0, %v2367
      %2369 = vmatmul.bf16.gmra.mxu0 %v2148
      %v2370 = vpop.f32.mrf.mxu0
      %v2371 = vadd.f32 0.0, %v2370
      %v2372 = vpop.f32.mrf.mxu0
      %v2373 = vadd.f32 0.0, %v2372
      %2374 = vmatmul.bf16.gmra.mxu0 %v2150
      %v2375 = vpop.f32.mrf.mxu0
      %v2376 = vadd.f32 0.0, %v2375
      %v2377 = vpop.f32.mrf.mxu0
      %v2378 = vadd.f32 0.0, %v2377
      %2379 = vmatmul.bf16.gmra.mxu0 %v2152
      %v2380 = vpop.f32.mrf.mxu0
      %v2381 = vadd.f32 0.0, %v2380
      %v2382 = vpop.f32.mrf.mxu0
      %v2383 = vadd.f32 0.0, %v2382
      %2384 = vmatmul.bf16.gmra.mxu0 %v2154
      %v2385 = vpop.f32.mrf.mxu0
      %v2386 = vadd.f32 0.0, %v2385
      %v2387 = vpop.f32.mrf.mxu0
      %v2388 = vadd.f32 0.0, %v2387
      %2389 = vdwg.mxu0
      %2390 = vmatpush.bf16.msra.mxu0 0
      %2391 = vmatpush.bf16.msra.mxu0 0
      %2392 = vmatpush.bf16.msra.mxu0 0
      %2393 = vmatpush.bf16.msra.mxu0 0
      %2394 = vmatpush.bf16.msra.mxu0 %v2240
      %2395 = vmatpush.bf16.msra.mxu0 %v2239
      %2396 = vmatpush.bf16.msra.mxu0 %v2238
      %2397 = vmatpush.bf16.msra.mxu0 %v2237
      %2398 = vmatmul.bf16.gmra.mxu0 %v2254
      %v2399 = vpop.f32.mrf.mxu0
      %v2400 = vadd.f32 %v2311, %v2399
      %v2401 = vpop.f32.mrf.mxu0
      %v2402 = vadd.f32 %v2313, %v2401
      %2403 = vmatmul.bf16.gmra.mxu0 %v2257
      %v2404 = vpop.f32.mrf.mxu0
      %v2405 = vadd.f32 %v2316, %v2404
      %v2406 = vpop.f32.mrf.mxu0
      %v2407 = vadd.f32 %v2318, %v2406
      %2408 = vmatmul.bf16.gmra.mxu0 %v2260
      %v2409 = vpop.f32.mrf.mxu0
      %v2410 = vadd.f32 %v2321, %v2409
      %v2411 = vpop.f32.mrf.mxu0
      %v2412 = vadd.f32 %v2323, %v2411
      %2413 = vmatmul.bf16.gmra.mxu0 %v2263
      %v2414 = vpop.f32.mrf.mxu0
      %v2415 = vadd.f32 %v2326, %v2414
      %v2416 = vpop.f32.mrf.mxu0
      %v2417 = vadd.f32 %v2328, %v2416
      %2418 = vmatmul.bf16.gmra.mxu0 %v2266
      %v2419 = vpop.f32.mrf.mxu0
      %v2420 = vadd.f32 %v2331, %v2419
      %v2421 = vpop.f32.mrf.mxu0
      %v2422 = vadd.f32 %v2333, %v2421
      %2423 = vmatmul.bf16.gmra.mxu0 %v2269
      %v2424 = vpop.f32.mrf.mxu0
      %v2425 = vadd.f32 %v2336, %v2424
      %v2426 = vpop.f32.mrf.mxu0
      %v2427 = vadd.f32 %v2338, %v2426
      %2428 = vmatmul.bf16.gmra.mxu0 %v2272
      %v2429 = vpop.f32.mrf.mxu0
      %v2430 = vadd.f32 %v2341, %v2429
      %v2431 = vpop.f32.mrf.mxu0
      %v2432 = vadd.f32 %v2343, %v2431
      %2433 = vmatmul.bf16.gmra.mxu0 %v2275
      %v2434 = vpop.f32.mrf.mxu0
      %v2435 = vadd.f32 %v2346, %v2434
      %v2436 = vpop.f32.mrf.mxu0
      %v2437 = vadd.f32 %v2348, %v2436
      %2438 = vmatmul.bf16.gmra.mxu0 %v2278
      %v2439 = vpop.f32.mrf.mxu0
      %v2440 = vadd.f32 %v2351, %v2439
      %v2441 = vpop.f32.mrf.mxu0
      %v2442 = vadd.f32 %v2353, %v2441
      %2443 = vmatmul.bf16.gmra.mxu0 %v2281
      %v2444 = vpop.f32.mrf.mxu0
      %v2445 = vadd.f32 %v2356, %v2444
      %v2446 = vpop.f32.mrf.mxu0
      %v2447 = vadd.f32 %v2358, %v2446
      %2448 = vmatmul.bf16.gmra.mxu0 %v2284
      %v2449 = vpop.f32.mrf.mxu0
      %v2450 = vadd.f32 %v2361, %v2449
      %v2451 = vpop.f32.mrf.mxu0
      %v2452 = vadd.f32 %v2363, %v2451
      %2453 = vmatmul.bf16.gmra.mxu0 %v2287
      %v2454 = vpop.f32.mrf.mxu0
      %v2455 = vadd.f32 %v2366, %v2454
      %v2456 = vpop.f32.mrf.mxu0
      %v2457 = vadd.f32 %v2368, %v2456
      %2458 = vmatmul.bf16.gmra.mxu0 %v2290
      %v2459 = vpop.f32.mrf.mxu0
      %v2460 = vadd.f32 %v2371, %v2459
      %v2461 = vpop.f32.mrf.mxu0
      %v2462 = vadd.f32 %v2373, %v2461
      %2463 = vmatmul.bf16.gmra.mxu0 %v2293
      %v2464 = vpop.f32.mrf.mxu0
      %v2465 = vadd.f32 %v2376, %v2464
      %v2466 = vpop.f32.mrf.mxu0
      %v2467 = vadd.f32 %v2378, %v2466
      %2468 = vmatmul.bf16.gmra.mxu0 %v2296
      %v2469 = vpop.f32.mrf.mxu0
      %v2470 = vadd.f32 %v2381, %v2469
      %v2471 = vpop.f32.mrf.mxu0
      %v2472 = vadd.f32 %v2383, %v2471
      %2473 = vmatmul.bf16.gmra.mxu0 %v2299
      %v2474 = vpop.f32.mrf.mxu0
      %v2475 = vadd.f32 %v2386, %v2474
      %v2476 = vpop.f32.mrf.mxu0
      %v2477 = vadd.f32 %v2388, %v2476
      %2478 = vdwg.mxu0
      %v2503 = vunpack.c.l.b16 %v1844
      %v2504 = vunpack.c.l.b16 %v1845
      %v2505 = vunpack.c.l.b16 %v1846
      %v2506 = vunpack.c.l.b16 %v1847
      %v2507 = vunpack.c.l.b16 %v1848
      %v2508 = vunpack.c.l.b16 %v1849
      %v2509 = vunpack.c.l.b16 %v1850
      %v2510 = vunpack.c.l.b16 %v1851
      %v2511 = vunpack.c.l.b16 %v1852
      %v2512 = vunpack.c.l.b16 %v1853
      %v2513 = vunpack.c.l.b16 %v1854
      %v2514 = vunpack.c.l.b16 %v1855
      %v2515 = vunpack.c.l.b16 %v1856
      %v2516 = vunpack.c.l.b16 %v1857
      %v2517 = vunpack.c.l.b16 %v1858
      %v2518 = vunpack.c.l.b16 %v1859
      %v2519 = vunpack.c.l.b16 %v1860
      %v2520 = vunpack.c.l.b16 %v1861
      %v2521 = vunpack.c.l.b16 %v1862
      %v2522 = vunpack.c.l.b16 %v1863
      %v2523 = vunpack.c.l.b16 %v1864
      %v2524 = vunpack.c.l.b16 %v1865
      %v2525 = vunpack.c.l.b16 %v1866
      %v2526 = vunpack.c.l.b16 %v1867
      %v2527 = vpack.c.b16 %v2504, %v2503
      %v2528 = vpack.c.b16 %v2506, %v2505
      %v2529 = vpack.c.b16 %v2508, %v2507
      %v2530 = vpack.c.b16 %v2510, %v2509
      %v2531 = vpack.c.b16 %v2512, %v2511
      %v2532 = vpack.c.b16 %v2514, %v2513
      %v2533 = vpack.c.b16 %v2516, %v2515
      %v2534 = vpack.c.b16 %v2518, %v2517
      %v2535 = vpack.c.b16 %v2520, %v2519
      %v2536 = vpack.c.b16 %v2522, %v2521
      %v2537 = vpack.c.b16 %v2524, %v2523
      %v2538 = vpack.c.b16 %v2526, %v2525
      %v2552 = vsel %vm226, %v1813, 0
      %v2555 = vsel %vm226, %v1815, 0
      %v2558 = vsel %vm226, %v1817, 0
      %v2561 = vsel %vm226, %v1819, 0
      %v2564 = vsel %vm226, %v1821, 0
      %v2567 = vsel %vm226, %v1823, 0
      %v2570 = vsel %vm226, %v1825, 0
      %v2573 = vsel %vm226, %v1827, 0
      %v2576 = vsel %vm226, %v1829, 0
      %v2579 = vsel %vm226, %v1831, 0
      %v2582 = vsel %vm226, %v1833, 0
      %v2585 = vsel %vm226, %v1835, 0
      %v2588 = vsel %vm226, %v1837, 0
      %v2591 = vsel %vm226, %v1839, 0
      %v2594 = vsel %vm226, %v1841, 0
      %v2597 = vsel %vm226, %v1843, 0
      %2599 = vmatpush.bf16.msra.mxu0 %v2534
      %2600 = vmatpush.bf16.msra.mxu0 %v2533
      %2601 = vmatpush.bf16.msra.mxu0 %v2532
      %2602 = vmatpush.bf16.msra.mxu0 %v2531
      %2603 = vmatpush.bf16.msra.mxu0 %v2530
      %2604 = vmatpush.bf16.msra.mxu0 %v2529
      %2605 = vmatpush.bf16.msra.mxu0 %v2528
      %2606 = vmatpush.bf16.msra.mxu0 %v2527
      %2607 = vmatmul.bf16.gmra.mxu0 %v1812
      %v2608 = vpop.f32.mrf.mxu0
      %v2609 = vadd.f32 %v2400, %v2608
      %v2610 = vpop.f32.mrf.mxu0
      %v2611 = vadd.f32 %v2402, %v2610
      %2612 = vmatmul.bf16.gmra.mxu0 %v1814
      %v2613 = vpop.f32.mrf.mxu0
      %v2614 = vadd.f32 %v2405, %v2613
      %v2615 = vpop.f32.mrf.mxu0
      %v2616 = vadd.f32 %v2407, %v2615
      %2617 = vmatmul.bf16.gmra.mxu0 %v1816
      %v2618 = vpop.f32.mrf.mxu0
      %v2619 = vadd.f32 %v2410, %v2618
      %v2620 = vpop.f32.mrf.mxu0
      %v2621 = vadd.f32 %v2412, %v2620
      %2622 = vmatmul.bf16.gmra.mxu0 %v1818
      %v2623 = vpop.f32.mrf.mxu0
      %v2624 = vadd.f32 %v2415, %v2623
      %v2625 = vpop.f32.mrf.mxu0
      %v2626 = vadd.f32 %v2417, %v2625
      %2627 = vmatmul.bf16.gmra.mxu0 %v1820
      %v2628 = vpop.f32.mrf.mxu0
      %v2629 = vadd.f32 %v2420, %v2628
      %v2630 = vpop.f32.mrf.mxu0
      %v2631 = vadd.f32 %v2422, %v2630
      %2632 = vmatmul.bf16.gmra.mxu0 %v1822
      %v2633 = vpop.f32.mrf.mxu0
      %v2634 = vadd.f32 %v2425, %v2633
      %v2635 = vpop.f32.mrf.mxu0
      %v2636 = vadd.f32 %v2427, %v2635
      %2637 = vmatmul.bf16.gmra.mxu0 %v1824
      %v2638 = vpop.f32.mrf.mxu0
      %v2639 = vadd.f32 %v2430, %v2638
      %v2640 = vpop.f32.mrf.mxu0
      %v2641 = vadd.f32 %v2432, %v2640
      %2642 = vmatmul.bf16.gmra.mxu0 %v1826
      %v2643 = vpop.f32.mrf.mxu0
      %v2644 = vadd.f32 %v2435, %v2643
      %v2645 = vpop.f32.mrf.mxu0
      %v2646 = vadd.f32 %v2437, %v2645
      %2647 = vmatmul.bf16.gmra.mxu0 %v1828
      %v2648 = vpop.f32.mrf.mxu0
      %v2649 = vadd.f32 %v2440, %v2648
      %v2650 = vpop.f32.mrf.mxu0
      %v2651 = vadd.f32 %v2442, %v2650
      %2652 = vmatmul.bf16.gmra.mxu0 %v1830
      %v2653 = vpop.f32.mrf.mxu0
      %v2654 = vadd.f32 %v2445, %v2653
      %v2655 = vpop.f32.mrf.mxu0
      %v2656 = vadd.f32 %v2447, %v2655
      %2657 = vmatmul.bf16.gmra.mxu0 %v1832
      %v2658 = vpop.f32.mrf.mxu0
      %v2659 = vadd.f32 %v2450, %v2658
      %v2660 = vpop.f32.mrf.mxu0
      %v2661 = vadd.f32 %v2452, %v2660
      %2662 = vmatmul.bf16.gmra.mxu0 %v1834
      %v2663 = vpop.f32.mrf.mxu0
      %v2664 = vadd.f32 %v2455, %v2663
      %v2665 = vpop.f32.mrf.mxu0
      %v2666 = vadd.f32 %v2457, %v2665
      %2667 = vmatmul.bf16.gmra.mxu0 %v1836
      %v2668 = vpop.f32.mrf.mxu0
      %v2669 = vadd.f32 %v2460, %v2668
      %v2670 = vpop.f32.mrf.mxu0
      %v2671 = vadd.f32 %v2462, %v2670
      %2672 = vmatmul.bf16.gmra.mxu0 %v1838
      %v2673 = vpop.f32.mrf.mxu0
      %v2674 = vadd.f32 %v2465, %v2673
      %v2675 = vpop.f32.mrf.mxu0
      %v2676 = vadd.f32 %v2467, %v2675
      %2677 = vmatmul.bf16.gmra.mxu0 %v1840
      %v2678 = vpop.f32.mrf.mxu0
      %v2679 = vadd.f32 %v2470, %v2678
      %v2680 = vpop.f32.mrf.mxu0
      %v2681 = vadd.f32 %v2472, %v2680
      %2682 = vmatmul.bf16.gmra.mxu0 %v1842
      %v2683 = vpop.f32.mrf.mxu0
      %v2684 = vadd.f32 %v2475, %v2683
      %v2685 = vpop.f32.mrf.mxu0
      %v2686 = vadd.f32 %v2477, %v2685
      %2687 = vdwg.mxu0
      %2688 = vmatpush.bf16.msra.mxu0 0
      %2689 = vmatpush.bf16.msra.mxu0 0
      %2690 = vmatpush.bf16.msra.mxu0 0
      %2691 = vmatpush.bf16.msra.mxu0 0
      %2692 = vmatpush.bf16.msra.mxu0 %v2538
      %2693 = vmatpush.bf16.msra.mxu0 %v2537
      %2694 = vmatpush.bf16.msra.mxu0 %v2536
      %2695 = vmatpush.bf16.msra.mxu0 %v2535
      %2696 = vmatmul.bf16.gmra.mxu0 %v2552
      %v2697 = vpop.f32.mrf.mxu0
      %v2698 = vadd.f32 %v2609, %v2697
      %v2699 = vpop.f32.mrf.mxu0
      %v2700 = vadd.f32 %v2611, %v2699
      %2701 = vmatmul.bf16.gmra.mxu0 %v2555
      %v2702 = vpop.f32.mrf.mxu0
      %v2703 = vadd.f32 %v2614, %v2702
      %v2704 = vpop.f32.mrf.mxu0
      %v2705 = vadd.f32 %v2616, %v2704
      %2706 = vmatmul.bf16.gmra.mxu0 %v2558
      %v2707 = vpop.f32.mrf.mxu0
      %v2708 = vadd.f32 %v2619, %v2707
      %v2709 = vpop.f32.mrf.mxu0
      %v2710 = vadd.f32 %v2621, %v2709
      %2711 = vmatmul.bf16.gmra.mxu0 %v2561
      %v2712 = vpop.f32.mrf.mxu0
      %v2713 = vadd.f32 %v2624, %v2712
      %v2714 = vpop.f32.mrf.mxu0
      %v2715 = vadd.f32 %v2626, %v2714
      %2716 = vmatmul.bf16.gmra.mxu0 %v2564
      %v2717 = vpop.f32.mrf.mxu0
      %v2718 = vadd.f32 %v2629, %v2717
      %v2719 = vpop.f32.mrf.mxu0
      %v2720 = vadd.f32 %v2631, %v2719
      %2721 = vmatmul.bf16.gmra.mxu0 %v2567
      %v2722 = vpop.f32.mrf.mxu0
      %v2723 = vadd.f32 %v2634, %v2722
      %v2724 = vpop.f32.mrf.mxu0
      %v2725 = vadd.f32 %v2636, %v2724
      %2726 = vmatmul.bf16.gmra.mxu0 %v2570
      %v2727 = vpop.f32.mrf.mxu0
      %v2728 = vadd.f32 %v2639, %v2727
      %v2729 = vpop.f32.mrf.mxu0
      %v2730 = vadd.f32 %v2641, %v2729
      %2731 = vmatmul.bf16.gmra.mxu0 %v2573
      %v2732 = vpop.f32.mrf.mxu0
      %v2733 = vadd.f32 %v2644, %v2732
      %v2734 = vpop.f32.mrf.mxu0
      %v2735 = vadd.f32 %v2646, %v2734
      %2736 = vmatmul.bf16.gmra.mxu0 %v2576
      %v2737 = vpop.f32.mrf.mxu0
      %v2738 = vadd.f32 %v2649, %v2737
      %v2739 = vpop.f32.mrf.mxu0
      %v2740 = vadd.f32 %v2651, %v2739
      %2741 = vmatmul.bf16.gmra.mxu0 %v2579
      %v2742 = vpop.f32.mrf.mxu0
      %v2743 = vadd.f32 %v2654, %v2742
      %v2744 = vpop.f32.mrf.mxu0
      %v2745 = vadd.f32 %v2656, %v2744
      %2746 = vmatmul.bf16.gmra.mxu0 %v2582
      %v2747 = vpop.f32.mrf.mxu0
      %v2748 = vadd.f32 %v2659, %v2747
      %v2749 = vpop.f32.mrf.mxu0
      %v2750 = vadd.f32 %v2661, %v2749
      %2751 = vmatmul.bf16.gmra.mxu0 %v2585
      %v2752 = vpop.f32.mrf.mxu0
      %v2753 = vadd.f32 %v2664, %v2752
      %v2754 = vpop.f32.mrf.mxu0
      %v2755 = vadd.f32 %v2666, %v2754
      %2756 = vmatmul.bf16.gmra.mxu0 %v2588
      %v2757 = vpop.f32.mrf.mxu0
      %v2758 = vadd.f32 %v2669, %v2757
      %v2759 = vpop.f32.mrf.mxu0
      %v2760 = vadd.f32 %v2671, %v2759
      %2761 = vmatmul.bf16.gmra.mxu0 %v2591
      %v2762 = vpop.f32.mrf.mxu0
      %v2763 = vadd.f32 %v2674, %v2762
      %v2764 = vpop.f32.mrf.mxu0
      %v2765 = vadd.f32 %v2676, %v2764
      %2766 = vmatmul.bf16.gmra.mxu0 %v2594
      %v2767 = vpop.f32.mrf.mxu0
      %v2768 = vadd.f32 %v2679, %v2767
      %v2769 = vpop.f32.mrf.mxu0
      %v2770 = vadd.f32 %v2681, %v2769
      %2771 = vmatmul.bf16.gmra.mxu0 %v2597
      %v2772 = vpop.f32.mrf.mxu0
      %v2773 = vadd.f32 %v2684, %v2772
      %v2774 = vpop.f32.mrf.mxu0
      %v2775 = vadd.f32 %v2686, %v2774
      %2776 = vdwg.mxu0
      %s2777 = scalar_lea.vmem [#allocation2], 48
      %v2778 = vld [vmem:[%s2777] sm:$0xff]
      %v2779 = vld [vmem:[%s2777 + $0x8] sm:$0xff]
      %v2780 = vld [vmem:[%s2777 + $0x18] sm:$0xff]
      %v2781 = vld [vmem:[%s2777 + $0x20] sm:$0xff]
      %v2782 = vld [vmem:[%s2777 + $0x30] sm:$0xff]
      %v2783 = vld [vmem:[%s2777 + $0x38] sm:$0xff]
      %v2784 = vld [vmem:[%s2777 + $0x48] sm:$0xff]
      %v2785 = vld [vmem:[%s2777 + $0x50] sm:$0xff]
      %v2786 = vld [vmem:[%s2777 + $0x60] sm:$0xff]
      %v2787 = vld [vmem:[%s2777 + $0x68] sm:$0xff]
      %v2788 = vld [vmem:[%s2777 + $0x78] sm:$0xff]
      %v2789 = vld [vmem:[%s2777 + $0x80] sm:$0xff]
      %v2790 = vld [vmem:[%s2777 + $0x90] sm:$0xff]
      %v2791 = vld [vmem:[%s2777 + $0x98] sm:$0xff]
      %v2792 = vld [vmem:[%s2777 + $0xa8] sm:$0xff]
      %v2793 = vld [vmem:[%s2777 + $0xb0] sm:$0xff]
      %v2794 = vld [vmem:[%s2777 + $0xc0] sm:$0xff]
      %v2795 = vld [vmem:[%s2777 + $0xc8] sm:$0xff]
      %v2796 = vld [vmem:[%s2777 + $0xd8] sm:$0xff]
      %v2797 = vld [vmem:[%s2777 + $0xe0] sm:$0xff]
      %v2798 = vld [vmem:[%s2777 + $0xf0] sm:$0xff]
      %v2799 = vld [vmem:[%s2777 + $0xf8] sm:$0xff]
      %v2800 = vld [vmem:[%s2777 + $0x108] sm:$0xff]
      %v2801 = vld [vmem:[%s2777 + $0x110] sm:$0xff]
      %v2802 = vld [vmem:[%s2777 + $0x120] sm:$0xff]
      %v2803 = vld [vmem:[%s2777 + $0x128] sm:$0xff]
      %v2804 = vld [vmem:[%s2777 + $0x138] sm:$0xff]
      %v2805 = vld [vmem:[%s2777 + $0x140] sm:$0xff]
      %v2806 = vld [vmem:[%s2777 + $0x150] sm:$0xff]
      %v2807 = vld [vmem:[%s2777 + $0x158] sm:$0xff]
      %v2808 = vld [vmem:[%s2777 + $0x168] sm:$0xff]
      %v2809 = vld [vmem:[%s2777 + $0x170] sm:$0xff]
      %v2810 = vld [vmem:[%s2777 + $0x1] sm:$0xff]
      %v2811 = vld [vmem:[%s2777 + $0x9] sm:$0xff]
      %v2812 = vld [vmem:[%s2777 + $0x19] sm:$0xff]
      %v2813 = vld [vmem:[%s2777 + $0x21] sm:$0xff]
      %v2814 = vld [vmem:[%s2777 + $0x31] sm:$0xff]
      %v2815 = vld [vmem:[%s2777 + $0x39] sm:$0xff]
      %v2816 = vld [vmem:[%s2777 + $0x49] sm:$0xff]
      %v2817 = vld [vmem:[%s2777 + $0x51] sm:$0xff]
      %v2818 = vld [vmem:[%s2777 + $0x61] sm:$0xff]
      %v2819 = vld [vmem:[%s2777 + $0x69] sm:$0xff]
      %v2820 = vld [vmem:[%s2777 + $0x79] sm:$0xff]
      %v2821 = vld [vmem:[%s2777 + $0x81] sm:$0xff]
      %v2822 = vld [vmem:[%s2777 + $0x91] sm:$0xff]
      %v2823 = vld [vmem:[%s2777 + $0x99] sm:$0xff]
      %v2824 = vld [vmem:[%s2777 + $0xa9] sm:$0xff]
      %v2825 = vld [vmem:[%s2777 + $0xb1] sm:$0xff]
      %v2826 = vld [vmem:[%s2777 + $0xc1] sm:$0xff]
      %v2827 = vld [vmem:[%s2777 + $0xc9] sm:$0xff]
      %v2828 = vld [vmem:[%s2777 + $0xd9] sm:$0xff]
      %v2829 = vld [vmem:[%s2777 + $0xe1] sm:$0xff]
      %v2830 = vld [vmem:[%s2777 + $0xf1] sm:$0xff]
      %v2831 = vld [vmem:[%s2777 + $0xf9] sm:$0xff]
      %v2832 = vld [vmem:[%s2777 + $0x109] sm:$0xff]
      %v2833 = vld [vmem:[%s2777 + $0x111] sm:$0xff]
      %v2834 = vld [vmem:[%s2777 + $0x121] sm:$0xff]
      %v2835 = vld [vmem:[%s2777 + $0x129] sm:$0xff]
      %v2836 = vld [vmem:[%s2777 + $0x139] sm:$0xff]
      %v2837 = vld [vmem:[%s2777 + $0x141] sm:$0xff]
      %v2838 = vld [vmem:[%s2777 + $0x151] sm:$0xff]
      %v2839 = vld [vmem:[%s2777 + $0x159] sm:$0xff]
      %v2840 = vld [vmem:[%s2777 + $0x169] sm:$0xff]
      %v2841 = vld [vmem:[%s2777 + $0x171] sm:$0xff]
      %v2842 = vld [vmem:[%s2777 + $0x2] sm:$0xff]
      %v2843 = vld [vmem:[%s2777 + $0xa] sm:$0xff]
      %v2844 = vld [vmem:[%s2777 + $0x1a] sm:$0xff]
      %v2845 = vld [vmem:[%s2777 + $0x22] sm:$0xff]
      %v2846 = vld [vmem:[%s2777 + $0x32] sm:$0xff]
      %v2847 = vld [vmem:[%s2777 + $0x3a] sm:$0xff]
      %v2848 = vld [vmem:[%s2777 + $0x4a] sm:$0xff]
      %v2849 = vld [vmem:[%s2777 + $0x52] sm:$0xff]
      %v2850 = vld [vmem:[%s2777 + $0x62] sm:$0xff]
      %v2851 = vld [vmem:[%s2777 + $0x6a] sm:$0xff]
      %v2852 = vld [vmem:[%s2777 + $0x7a] sm:$0xff]
      %v2853 = vld [vmem:[%s2777 + $0x82] sm:$0xff]
      %v2854 = vld [vmem:[%s2777 + $0x92] sm:$0xff]
      %v2855 = vld [vmem:[%s2777 + $0x9a] sm:$0xff]
      %v2856 = vld [vmem:[%s2777 + $0xaa] sm:$0xff]
      %v2857 = vld [vmem:[%s2777 + $0xb2] sm:$0xff]
      %v2858 = vld [vmem:[%s2777 + $0xc2] sm:$0xff]
      %v2859 = vld [vmem:[%s2777 + $0xca] sm:$0xff]
      %v2860 = vld [vmem:[%s2777 + $0xda] sm:$0xff]
      %v2861 = vld [vmem:[%s2777 + $0xe2] sm:$0xff]
      %v2862 = vld [vmem:[%s2777 + $0xf2] sm:$0xff]
      %v2863 = vld [vmem:[%s2777 + $0xfa] sm:$0xff]
      %v2864 = vld [vmem:[%s2777 + $0x10a] sm:$0xff]
      %v2865 = vld [vmem:[%s2777 + $0x112] sm:$0xff]
      %v2866 = vld [vmem:[%s2777 + $0x122] sm:$0xff]
      %v2867 = vld [vmem:[%s2777 + $0x12a] sm:$0xff]
      %v2868 = vld [vmem:[%s2777 + $0x13a] sm:$0xff]
      %v2869 = vld [vmem:[%s2777 + $0x142] sm:$0xff]
      %v2870 = vld [vmem:[%s2777 + $0x152] sm:$0xff]
      %v2871 = vld [vmem:[%s2777 + $0x15a] sm:$0xff]
      %v2872 = vld [vmem:[%s2777 + $0x16a] sm:$0xff]
      %v2873 = vld [vmem:[%s2777 + $0x172] sm:$0xff]
      %2906 = vrot.lane.b32.xlu0 %v2810, 64
      %v2907 = vpop.permute.xlu0 %2906
      %2908 = vrot.lane.b32.xlu0 %v2811, 64
      %v2909 = vpop.permute.xlu0 %2908
      %2910 = vrot.lane.b32.xlu0 %v2812, 64
      %v2911 = vpop.permute.xlu0 %2910
      %2912 = vrot.lane.b32.xlu0 %v2813, 64
      %v2913 = vpop.permute.xlu0 %2912
      %2914 = vrot.lane.b32.xlu0 %v2814, 64
      %v2915 = vpop.permute.xlu0 %2914
      %2916 = vrot.lane.b32.xlu0 %v2815, 64
      %v2917 = vpop.permute.xlu0 %2916
      %2918 = vrot.lane.b32.xlu0 %v2816, 64
      %v2919 = vpop.permute.xlu0 %2918
      %2920 = vrot.lane.b32.xlu0 %v2817, 64
      %v2921 = vpop.permute.xlu0 %2920
      %2922 = vrot.lane.b32.xlu0 %v2818, 64
      %v2923 = vpop.permute.xlu0 %2922
      %2924 = vrot.lane.b32.xlu0 %v2819, 64
      %v2925 = vpop.permute.xlu0 %2924
      %2926 = vrot.lane.b32.xlu0 %v2820, 64
      %v2927 = vpop.permute.xlu0 %2926
      %2928 = vrot.lane.b32.xlu0 %v2821, 64
      %v2929 = vpop.permute.xlu0 %2928
      %2930 = vrot.lane.b32.xlu0 %v2822, 64
      %v2931 = vpop.permute.xlu0 %2930
      %2932 = vrot.lane.b32.xlu0 %v2823, 64
      %v2933 = vpop.permute.xlu0 %2932
      %2934 = vrot.lane.b32.xlu0 %v2824, 64
      %v2935 = vpop.permute.xlu0 %2934
      %2936 = vrot.lane.b32.xlu0 %v2825, 64
      %v2937 = vpop.permute.xlu0 %2936
      %2938 = vrot.lane.b32.xlu0 %v2826, 64
      %v2939 = vpop.permute.xlu0 %2938
      %2940 = vrot.lane.b32.xlu0 %v2827, 64
      %v2941 = vpop.permute.xlu0 %2940
      %2942 = vrot.lane.b32.xlu0 %v2828, 64
      %v2943 = vpop.permute.xlu0 %2942
      %2944 = vrot.lane.b32.xlu0 %v2829, 64
      %v2945 = vpop.permute.xlu0 %2944
      %2946 = vrot.lane.b32.xlu0 %v2830, 64
      %v2947 = vpop.permute.xlu0 %2946
      %2948 = vrot.lane.b32.xlu0 %v2831, 64
      %v2949 = vpop.permute.xlu0 %2948
      %2950 = vrot.lane.b32.xlu0 %v2832, 64
      %v2951 = vpop.permute.xlu0 %2950
      %2952 = vrot.lane.b32.xlu0 %v2833, 64
      %v2953 = vpop.permute.xlu0 %2952
      %2954 = vrot.lane.b32.xlu0 %v2834, 64
      %v2955 = vpop.permute.xlu0 %2954
      %2956 = vrot.lane.b32.xlu0 %v2835, 64
      %v2957 = vpop.permute.xlu0 %2956
      %2958 = vrot.lane.b32.xlu0 %v2836, 64
      %v2959 = vpop.permute.xlu0 %2958
      %2960 = vrot.lane.b32.xlu0 %v2837, 64
      %v2961 = vpop.permute.xlu0 %2960
      %2962 = vrot.lane.b32.xlu0 %v2838, 64
      %v2963 = vpop.permute.xlu0 %2962
      %2964 = vrot.lane.b32.xlu0 %v2839, 64
      %v2965 = vpop.permute.xlu0 %2964
      %2966 = vrot.lane.b32.xlu0 %v2840, 64
      %v2967 = vpop.permute.xlu0 %2966
      %2968 = vrot.lane.b32.xlu0 %v2841, 64
      %v2969 = vpop.permute.xlu0 %2968
      %v3002 = vsel %vm226, %v2778, %v2907
      %v3003 = vsel %vm226, %v2779, %v2909
      %v3004 = vsel %vm226, %v2780, %v2911
      %v3005 = vsel %vm226, %v2781, %v2913
      %v3006 = vsel %vm226, %v2782, %v2915
      %v3007 = vsel %vm226, %v2783, %v2917
      %v3008 = vsel %vm226, %v2784, %v2919
      %v3009 = vsel %vm226, %v2785, %v2921
      %v3010 = vsel %vm226, %v2786, %v2923
      %v3011 = vsel %vm226, %v2787, %v2925
      %v3012 = vsel %vm226, %v2788, %v2927
      %v3013 = vsel %vm226, %v2789, %v2929
      %v3014 = vsel %vm226, %v2790, %v2931
      %v3015 = vsel %vm226, %v2791, %v2933
      %v3016 = vsel %vm226, %v2792, %v2935
      %v3017 = vsel %vm226, %v2793, %v2937
      %v3018 = vsel %vm226, %v2794, %v2939
      %v3019 = vsel %vm226, %v2795, %v2941
      %v3020 = vsel %vm226, %v2796, %v2943
      %v3021 = vsel %vm226, %v2797, %v2945
      %v3022 = vsel %vm226, %v2798, %v2947
      %v3023 = vsel %vm226, %v2799, %v2949
      %v3024 = vsel %vm226, %v2800, %v2951
      %v3025 = vsel %vm226, %v2801, %v2953
      %v3026 = vsel %vm226, %v2802, %v2955
      %v3027 = vsel %vm226, %v2803, %v2957
      %v3028 = vsel %vm226, %v2804, %v2959
      %v3029 = vsel %vm226, %v2805, %v2961
      %v3030 = vsel %vm226, %v2806, %v2963
      %v3031 = vsel %vm226, %v2807, %v2965
      %v3032 = vsel %vm226, %v2808, %v2967
      %v3033 = vsel %vm226, %v2809, %v2969
      %v3034 = vpack.c.bf16 %v3003, %v3002
      %v3035 = vpack.c.bf16 %v2843, %v2842
      %v3036 = vpack.c.bf16 %v3005, %v3004
      %v3037 = vpack.c.bf16 %v2845, %v2844
      %v3038 = vpack.c.bf16 %v3007, %v3006
      %v3039 = vpack.c.bf16 %v2847, %v2846
      %v3040 = vpack.c.bf16 %v3009, %v3008
      %v3041 = vpack.c.bf16 %v2849, %v2848
      %v3042 = vpack.c.bf16 %v3011, %v3010
      %v3043 = vpack.c.bf16 %v2851, %v2850
      %v3044 = vpack.c.bf16 %v3013, %v3012
      %v3045 = vpack.c.bf16 %v2853, %v2852
      %v3046 = vpack.c.bf16 %v3015, %v3014
      %v3047 = vpack.c.bf16 %v2855, %v2854
      %v3048 = vpack.c.bf16 %v3017, %v3016
      %v3049 = vpack.c.bf16 %v2857, %v2856
      %v3050 = vpack.c.bf16 %v3019, %v3018
      %v3051 = vpack.c.bf16 %v2859, %v2858
      %v3052 = vpack.c.bf16 %v3021, %v3020
      %v3053 = vpack.c.bf16 %v2861, %v2860
      %v3054 = vpack.c.bf16 %v3023, %v3022
      %v3055 = vpack.c.bf16 %v2863, %v2862
      %v3056 = vpack.c.bf16 %v3025, %v3024
      %v3057 = vpack.c.bf16 %v2865, %v2864
      %v3058 = vpack.c.bf16 %v3027, %v3026
      %v3059 = vpack.c.bf16 %v2867, %v2866
      %v3060 = vpack.c.bf16 %v3029, %v3028
      %v3061 = vpack.c.bf16 %v2869, %v2868
      %v3062 = vpack.c.bf16 %v3031, %v3030
      %v3063 = vpack.c.bf16 %v2871, %v2870
      %v3064 = vpack.c.bf16 %v3033, %v3032
      %v3065 = vpack.c.bf16 %v2873, %v2872
      %s3066 = scalar_lea.vmem %s3, 192
      %v3067 = vld [vmem:[%s3066] sm:$0xf]
      %v3068 = vld [vmem:[%s3066 + $0x4] sm:$0xf]
      %v3069 = vld [vmem:[%s3066 + $0x8] sm:$0xf]
      %v3070 = vld [vmem:[%s3066 + $0xc] sm:$0xf]
      %v3071 = vld [vmem:[%s3066 + $0x10] sm:$0xf]
      %v3072 = vld [vmem:[%s3066 + $0x14] sm:$0xf]
      %v3073 = vld [vmem:[%s3066 + $0x18] sm:$0xf]
      %v3074 = vld [vmem:[%s3066 + $0x1c] sm:$0xf]
      %v3075 = vld [vmem:[%s3066 + $0x20] sm:$0xf]
      %v3076 = vld [vmem:[%s3066 + $0x24] sm:$0xf]
      %v3077 = vld [vmem:[%s3066 + $0x28] sm:$0xf]
      %v3078 = vld [vmem:[%s3066 + $0x2c] sm:$0xf]
      %v3079 = vld [vmem:[%s3066 + $0x30] sm:$0xf]
      %v3080 = vld [vmem:[%s3066 + $0x34] sm:$0xf]
      %v3081 = vld [vmem:[%s3066 + $0x38] sm:$0xf]
      %v3082 = vld [vmem:[%s3066 + $0x3c] sm:$0xf]
      %v3083 = vld [vmem:[%s3066 + $0x40] sm:$0xf]
      %v3084 = vld [vmem:[%s3066 + $0x44] sm:$0xf]
      %v3085 = vld [vmem:[%s3066 + $0x48] sm:$0xf]
      %v3086 = vld [vmem:[%s3066 + $0x4c] sm:$0xf]
      %v3087 = vld [vmem:[%s3066 + $0x50] sm:$0xf]
      %v3088 = vld [vmem:[%s3066 + $0x54] sm:$0xf]
      %v3089 = vld [vmem:[%s3066 + $0x58] sm:$0xf]
      %v3090 = vld [vmem:[%s3066 + $0x5c] sm:$0xf]
      %v3115 = vunpack.c.l.b16 %v3067
      %v3116 = vunpack.c.l.b16 %v3068
      %v3117 = vunpack.c.l.b16 %v3069
      %v3118 = vunpack.c.l.b16 %v3070
      %v3119 = vunpack.c.l.b16 %v3071
      %v3120 = vunpack.c.l.b16 %v3072
      %v3121 = vunpack.c.l.b16 %v3073
      %v3122 = vunpack.c.l.b16 %v3074
      %v3123 = vunpack.c.l.b16 %v3075
      %v3124 = vunpack.c.l.b16 %v3076
      %v3125 = vunpack.c.l.b16 %v3077
      %v3126 = vunpack.c.l.b16 %v3078
      %v3127 = vunpack.c.l.b16 %v3079
      %v3128 = vunpack.c.l.b16 %v3080
      %v3129 = vunpack.c.l.b16 %v3081
      %v3130 = vunpack.c.l.b16 %v3082
      %v3131 = vunpack.c.l.b16 %v3083
      %v3132 = vunpack.c.l.b16 %v3084
      %v3133 = vunpack.c.l.b16 %v3085
      %v3134 = vunpack.c.l.b16 %v3086
      %v3135 = vunpack.c.l.b16 %v3087
      %v3136 = vunpack.c.l.b16 %v3088
      %v3137 = vunpack.c.l.b16 %v3089
      %v3138 = vunpack.c.l.b16 %v3090
      %v3139 = vpack.c.b16 %v3116, %v3115
      %v3140 = vpack.c.b16 %v3118, %v3117
      %v3141 = vpack.c.b16 %v3120, %v3119
      %v3142 = vpack.c.b16 %v3122, %v3121
      %v3143 = vpack.c.b16 %v3124, %v3123
      %v3144 = vpack.c.b16 %v3126, %v3125
      %v3145 = vpack.c.b16 %v3128, %v3127
      %v3146 = vpack.c.b16 %v3130, %v3129
      %v3147 = vpack.c.b16 %v3132, %v3131
      %v3148 = vpack.c.b16 %v3134, %v3133
      %v3149 = vpack.c.b16 %v3136, %v3135
      %v3150 = vpack.c.b16 %v3138, %v3137
      %v3164 = vsel %vm226, %v3035, 0
      %v3167 = vsel %vm226, %v3037, 0
      %v3170 = vsel %vm226, %v3039, 0
      %v3173 = vsel %vm226, %v3041, 0
      %v3176 = vsel %vm226, %v3043, 0
      %v3179 = vsel %vm226, %v3045, 0
      %v3182 = vsel %vm226, %v3047, 0
      %v3185 = vsel %vm226, %v3049, 0
      %v3188 = vsel %vm226, %v3051, 0
      %v3191 = vsel %vm226, %v3053, 0
      %v3194 = vsel %vm226, %v3055, 0
      %v3197 = vsel %vm226, %v3057, 0
      %v3200 = vsel %vm226, %v3059, 0
      %v3203 = vsel %vm226, %v3061, 0
      %v3206 = vsel %vm226, %v3063, 0
      %v3209 = vsel %vm226, %v3065, 0
      %3211 = vmatpush.bf16.msra.mxu0 %v3146
      %3212 = vmatpush.bf16.msra.mxu0 %v3145
      %3213 = vmatpush.bf16.msra.mxu0 %v3144
      %3214 = vmatpush.bf16.msra.mxu0 %v3143
      %3215 = vmatpush.bf16.msra.mxu0 %v3142
      %3216 = vmatpush.bf16.msra.mxu0 %v3141
      %3217 = vmatpush.bf16.msra.mxu0 %v3140
      %3218 = vmatpush.bf16.msra.mxu0 %v3139
      %3219 = vmatmul.bf16.gmra.mxu0 %v3034
      %v3220 = vpop.f32.mrf.mxu0
      %v3221 = vadd.f32 0.0, %v3220
      %v3222 = vpop.f32.mrf.mxu0
      %v3223 = vadd.f32 0.0, %v3222
      %3224 = vmatmul.bf16.gmra.mxu0 %v3036
      %v3225 = vpop.f32.mrf.mxu0
      %v3226 = vadd.f32 0.0, %v3225
      %v3227 = vpop.f32.mrf.mxu0
      %v3228 = vadd.f32 0.0, %v3227
      %3229 = vmatmul.bf16.gmra.mxu0 %v3038
      %v3230 = vpop.f32.mrf.mxu0
      %v3231 = vadd.f32 0.0, %v3230
      %v3232 = vpop.f32.mrf.mxu0
      %v3233 = vadd.f32 0.0, %v3232
      %3234 = vmatmul.bf16.gmra.mxu0 %v3040
      %v3235 = vpop.f32.mrf.mxu0
      %v3236 = vadd.f32 0.0, %v3235
      %v3237 = vpop.f32.mrf.mxu0
      %v3238 = vadd.f32 0.0, %v3237
      %3239 = vmatmul.bf16.gmra.mxu0 %v3042
      %v3240 = vpop.f32.mrf.mxu0
      %v3241 = vadd.f32 0.0, %v3240
      %v3242 = vpop.f32.mrf.mxu0
      %v3243 = vadd.f32 0.0, %v3242
      %3244 = vmatmul.bf16.gmra.mxu0 %v3044
      %v3245 = vpop.f32.mrf.mxu0
      %v3246 = vadd.f32 0.0, %v3245
      %v3247 = vpop.f32.mrf.mxu0
      %v3248 = vadd.f32 0.0, %v3247
      %3249 = vmatmul.bf16.gmra.mxu0 %v3046
      %v3250 = vpop.f32.mrf.mxu0
      %v3251 = vadd.f32 0.0, %v3250
      %v3252 = vpop.f32.mrf.mxu0
      %v3253 = vadd.f32 0.0, %v3252
      %3254 = vmatmul.bf16.gmra.mxu0 %v3048
      %v3255 = vpop.f32.mrf.mxu0
      %v3256 = vadd.f32 0.0, %v3255
      %v3257 = vpop.f32.mrf.mxu0
      %v3258 = vadd.f32 0.0, %v3257
      %3259 = vmatmul.bf16.gmra.mxu0 %v3050
      %v3260 = vpop.f32.mrf.mxu0
      %v3261 = vadd.f32 0.0, %v3260
      %v3262 = vpop.f32.mrf.mxu0
      %v3263 = vadd.f32 0.0, %v3262
      %3264 = vmatmul.bf16.gmra.mxu0 %v3052
      %v3265 = vpop.f32.mrf.mxu0
      %v3266 = vadd.f32 0.0, %v3265
      %v3267 = vpop.f32.mrf.mxu0
      %v3268 = vadd.f32 0.0, %v3267
      %3269 = vmatmul.bf16.gmra.mxu0 %v3054
      %v3270 = vpop.f32.mrf.mxu0
      %v3271 = vadd.f32 0.0, %v3270
      %v3272 = vpop.f32.mrf.mxu0
      %v3273 = vadd.f32 0.0, %v3272
      %3274 = vmatmul.bf16.gmra.mxu0 %v3056
      %v3275 = vpop.f32.mrf.mxu0
      %v3276 = vadd.f32 0.0, %v3275
      %v3277 = vpop.f32.mrf.mxu0
      %v3278 = vadd.f32 0.0, %v3277
      %3279 = vmatmul.bf16.gmra.mxu0 %v3058
      %v3280 = vpop.f32.mrf.mxu0
      %v3281 = vadd.f32 0.0, %v3280
      %v3282 = vpop.f32.mrf.mxu0
      %v3283 = vadd.f32 0.0, %v3282
      %3284 = vmatmul.bf16.gmra.mxu0 %v3060
      %v3285 = vpop.f32.mrf.mxu0
      %v3286 = vadd.f32 0.0, %v3285
      %v3287 = vpop.f32.mrf.mxu0
      %v3288 = vadd.f32 0.0, %v3287
      %3289 = vmatmul.bf16.gmra.mxu0 %v3062
      %v3290 = vpop.f32.mrf.mxu0
      %v3291 = vadd.f32 0.0, %v3290
      %v3292 = vpop.f32.mrf.mxu0
      %v3293 = vadd.f32 0.0, %v3292
      %3294 = vmatmul.bf16.gmra.mxu0 %v3064
      %v3295 = vpop.f32.mrf.mxu0
      %v3296 = vadd.f32 0.0, %v3295
      %v3297 = vpop.f32.mrf.mxu0
      %v3298 = vadd.f32 0.0, %v3297
      %3299 = vdwg.mxu0
      %3300 = vmatpush.bf16.msra.mxu0 0
      %3301 = vmatpush.bf16.msra.mxu0 0
      %3302 = vmatpush.bf16.msra.mxu0 0
      %3303 = vmatpush.bf16.msra.mxu0 0
      %3304 = vmatpush.bf16.msra.mxu0 %v3150
      %3305 = vmatpush.bf16.msra.mxu0 %v3149
      %3306 = vmatpush.bf16.msra.mxu0 %v3148
      %3307 = vmatpush.bf16.msra.mxu0 %v3147
      %3308 = vmatmul.bf16.gmra.mxu0 %v3164
      %v3309 = vpop.f32.mrf.mxu0
      %v3310 = vadd.f32 %v3221, %v3309
      %v3311 = vpop.f32.mrf.mxu0
      %v3312 = vadd.f32 %v3223, %v3311
      %3313 = vmatmul.bf16.gmra.mxu0 %v3167
      %v3314 = vpop.f32.mrf.mxu0
      %v3315 = vadd.f32 %v3226, %v3314
      %v3316 = vpop.f32.mrf.mxu0
      %v3317 = vadd.f32 %v3228, %v3316
      %3318 = vmatmul.bf16.gmra.mxu0 %v3170
      %v3319 = vpop.f32.mrf.mxu0
      %v3320 = vadd.f32 %v3231, %v3319
      %v3321 = vpop.f32.mrf.mxu0
      %v3322 = vadd.f32 %v3233, %v3321
      %3323 = vmatmul.bf16.gmra.mxu0 %v3173
      %v3324 = vpop.f32.mrf.mxu0
      %v3325 = vadd.f32 %v3236, %v3324
      %v3326 = vpop.f32.mrf.mxu0
      %v3327 = vadd.f32 %v3238, %v3326
      %3328 = vmatmul.bf16.gmra.mxu0 %v3176
      %v3329 = vpop.f32.mrf.mxu0
      %v3330 = vadd.f32 %v3241, %v3329
      %v3331 = vpop.f32.mrf.mxu0
      %v3332 = vadd.f32 %v3243, %v3331
      %3333 = vmatmul.bf16.gmra.mxu0 %v3179
      %v3334 = vpop.f32.mrf.mxu0
      %v3335 = vadd.f32 %v3246, %v3334
      %v3336 = vpop.f32.mrf.mxu0
      %v3337 = vadd.f32 %v3248, %v3336
      %3338 = vmatmul.bf16.gmra.mxu0 %v3182
      %v3339 = vpop.f32.mrf.mxu0
      %v3340 = vadd.f32 %v3251, %v3339
      %v3341 = vpop.f32.mrf.mxu0
      %v3342 = vadd.f32 %v3253, %v3341
      %3343 = vmatmul.bf16.gmra.mxu0 %v3185
      %v3344 = vpop.f32.mrf.mxu0
      %v3345 = vadd.f32 %v3256, %v3344
      %v3346 = vpop.f32.mrf.mxu0
      %v3347 = vadd.f32 %v3258, %v3346
      %3348 = vmatmul.bf16.gmra.mxu0 %v3188
      %v3349 = vpop.f32.mrf.mxu0
      %v3350 = vadd.f32 %v3261, %v3349
      %v3351 = vpop.f32.mrf.mxu0
      %v3352 = vadd.f32 %v3263, %v3351
      %3353 = vmatmul.bf16.gmra.mxu0 %v3191
      %v3354 = vpop.f32.mrf.mxu0
      %v3355 = vadd.f32 %v3266, %v3354
      %v3356 = vpop.f32.mrf.mxu0
      %v3357 = vadd.f32 %v3268, %v3356
      %3358 = vmatmul.bf16.gmra.mxu0 %v3194
      %v3359 = vpop.f32.mrf.mxu0
      %v3360 = vadd.f32 %v3271, %v3359
      %v3361 = vpop.f32.mrf.mxu0
      %v3362 = vadd.f32 %v3273, %v3361
      %3363 = vmatmul.bf16.gmra.mxu0 %v3197
      %v3364 = vpop.f32.mrf.mxu0
      %v3365 = vadd.f32 %v3276, %v3364
      %v3366 = vpop.f32.mrf.mxu0
      %v3367 = vadd.f32 %v3278, %v3366
      %3368 = vmatmul.bf16.gmra.mxu0 %v3200
      %v3369 = vpop.f32.mrf.mxu0
      %v3370 = vadd.f32 %v3281, %v3369
      %v3371 = vpop.f32.mrf.mxu0
      %v3372 = vadd.f32 %v3283, %v3371
      %3373 = vmatmul.bf16.gmra.mxu0 %v3203
      %v3374 = vpop.f32.mrf.mxu0
      %v3375 = vadd.f32 %v3286, %v3374
      %v3376 = vpop.f32.mrf.mxu0
      %v3377 = vadd.f32 %v3288, %v3376
      %3378 = vmatmul.bf16.gmra.mxu0 %v3206
      %v3379 = vpop.f32.mrf.mxu0
      %v3380 = vadd.f32 %v3291, %v3379
      %v3381 = vpop.f32.mrf.mxu0
      %v3382 = vadd.f32 %v3293, %v3381
      %3383 = vmatmul.bf16.gmra.mxu0 %v3209
      %v3384 = vpop.f32.mrf.mxu0
      %v3385 = vadd.f32 %v3296, %v3384
      %v3386 = vpop.f32.mrf.mxu0
      %v3387 = vadd.f32 %v3298, %v3386
      %3388 = vdwg.mxu0
      %v3389 = vadd.f32 %v2698, %v3310
      %v3390 = vadd.f32 %v2700, %v3312
      %v3391 = vadd.f32 %v2703, %v3315
      %v3392 = vadd.f32 %v2705, %v3317
      %v3393 = vadd.f32 %v2708, %v3320
      %v3394 = vadd.f32 %v2710, %v3322
      %v3395 = vadd.f32 %v2713, %v3325
      %v3396 = vadd.f32 %v2715, %v3327
      %v3397 = vadd.f32 %v2718, %v3330
      %v3398 = vadd.f32 %v2720, %v3332
      %v3399 = vadd.f32 %v2723, %v3335
      %v3400 = vadd.f32 %v2725, %v3337
      %v3401 = vadd.f32 %v2728, %v3340
      %v3402 = vadd.f32 %v2730, %v3342
      %v3403 = vadd.f32 %v2733, %v3345
      %v3404 = vadd.f32 %v2735, %v3347
      %v3405 = vadd.f32 %v2738, %v3350
      %v3406 = vadd.f32 %v2740, %v3352
      %v3407 = vadd.f32 %v2743, %v3355
      %v3408 = vadd.f32 %v2745, %v3357
      %v3409 = vadd.f32 %v2748, %v3360
      %v3410 = vadd.f32 %v2750, %v3362
      %v3411 = vadd.f32 %v2753, %v3365
      %v3412 = vadd.f32 %v2755, %v3367
      %v3413 = vadd.f32 %v2758, %v3370
      %v3414 = vadd.f32 %v2760, %v3372
      %v3415 = vadd.f32 %v2763, %v3375
      %v3416 = vadd.f32 %v2765, %v3377
      %v3417 = vadd.f32 %v2768, %v3380
      %v3418 = vadd.f32 %v2770, %v3382
      %v3419 = vadd.f32 %v2773, %v3385
      %v3420 = vadd.f32 %v2775, %v3387
      %v3422 = vperm.slane %v277, 0
      %v3424 = vadd.f32 %v3389, %v3422
      %v3425 = vadd.f32 %v3390, %v3422
      %v3426 = vadd.f32 %v3391, %v3422
      %v3427 = vadd.f32 %v3392, %v3422
      %v3428 = vadd.f32 %v3393, %v3422
      %v3429 = vadd.f32 %v3394, %v3422
      %v3430 = vadd.f32 %v3395, %v3422
      %v3431 = vadd.f32 %v3396, %v3422
      %v3432 = vadd.f32 %v3397, %v3422
      %v3433 = vadd.f32 %v3398, %v3422
      %v3434 = vadd.f32 %v3399, %v3422
      %v3435 = vadd.f32 %v3400, %v3422
      %v3436 = vadd.f32 %v3401, %v3422
      %v3437 = vadd.f32 %v3402, %v3422
      %v3438 = vadd.f32 %v3403, %v3422
      %v3439 = vadd.f32 %v3404, %v3422
      %v3440 = vadd.f32 %v3405, %v3422
      %v3441 = vadd.f32 %v3406, %v3422
      %v3442 = vadd.f32 %v3407, %v3422
      %v3443 = vadd.f32 %v3408, %v3422
      %v3444 = vadd.f32 %v3409, %v3422
      %v3445 = vadd.f32 %v3410, %v3422
      %v3446 = vadd.f32 %v3411, %v3422
      %v3447 = vadd.f32 %v3412, %v3422
      %v3448 = vadd.f32 %v3413, %v3422
      %v3449 = vadd.f32 %v3414, %v3422
      %v3450 = vadd.f32 %v3415, %v3422
      %v3451 = vadd.f32 %v3416, %v3422
      %v3452 = vadd.f32 %v3417, %v3422
      %v3453 = vadd.f32 %v3418, %v3422
      %v3454 = vadd.f32 %v3419, %v3422
      %v3455 = vadd.f32 %v3420, %v3422
      %v3456 = vmax.f32 %v3424, 0.0
      %v3457 = vmax.f32 %v3425, 0.0
      %v3458 = vmax.f32 %v3426, 0.0
      %v3459 = vmax.f32 %v3427, 0.0
      %v3460 = vmax.f32 %v3428, 0.0
      %v3461 = vmax.f32 %v3429, 0.0
      %v3462 = vmax.f32 %v3430, 0.0
      %v3463 = vmax.f32 %v3431, 0.0
      %v3464 = vmax.f32 %v3432, 0.0
      %v3465 = vmax.f32 %v3433, 0.0
      %v3466 = vmax.f32 %v3434, 0.0
      %v3467 = vmax.f32 %v3435, 0.0
      %v3468 = vmax.f32 %v3436, 0.0
      %v3469 = vmax.f32 %v3437, 0.0
      %v3470 = vmax.f32 %v3438, 0.0
      %v3471 = vmax.f32 %v3439, 0.0
      %v3472 = vmax.f32 %v3440, 0.0
      %v3473 = vmax.f32 %v3441, 0.0
      %v3474 = vmax.f32 %v3442, 0.0
      %v3475 = vmax.f32 %v3443, 0.0
      %v3476 = vmax.f32 %v3444, 0.0
      %v3477 = vmax.f32 %v3445, 0.0
      %v3478 = vmax.f32 %v3446, 0.0
      %v3479 = vmax.f32 %v3447, 0.0
      %v3480 = vmax.f32 %v3448, 0.0
      %v3481 = vmax.f32 %v3449, 0.0
      %v3482 = vmax.f32 %v3450, 0.0
      %v3483 = vmax.f32 %v3451, 0.0
      %v3484 = vmax.f32 %v3452, 0.0
      %v3485 = vmax.f32 %v3453, 0.0
      %v3486 = vmax.f32 %v3454, 0.0
      %v3487 = vmax.f32 %v3455, 0.0
      %3488 = vst.msk [vmem:[#allocation3] sm:$0xff] %vm226, %v3456
      %3489 = vst.msk [vmem:[#allocation3 + $0x8] sm:$0xff] %vm226, %v3457
      %3490 = vst.msk [vmem:[#allocation3 + $0x10] sm:$0xff] %vm226, %v3458
      %3491 = vst.msk [vmem:[#allocation3 + $0x18] sm:$0xff] %vm226, %v3459
      %3492 = vst.msk [vmem:[#allocation3 + $0x20] sm:$0xff] %vm226, %v3460
      %3493 = vst.msk [vmem:[#allocation3 + $0x28] sm:$0xff] %vm226, %v3461
      %3494 = vst.msk [vmem:[#allocation3 + $0x30] sm:$0xff] %vm226, %v3462
      %3495 = vst.msk [vmem:[#allocation3 + $0x38] sm:$0xff] %vm226, %v3463
      %3496 = vst.msk [vmem:[#allocation3 + $0x40] sm:$0xff] %vm226, %v3464
      %3497 = vst.msk [vmem:[#allocation3 + $0x48] sm:$0xff] %vm226, %v3465
      %3498 = vst.msk [vmem:[#allocation3 + $0x50] sm:$0xff] %vm226, %v3466
      %3499 = vst.msk [vmem:[#allocation3 + $0x58] sm:$0xff] %vm226, %v3467
      %3500 = vst.msk [vmem:[#allocation3 + $0x60] sm:$0xff] %vm226, %v3468
      %3501 = vst.msk [vmem:[#allocation3 + $0x68] sm:$0xff] %vm226, %v3469
      %3502 = vst.msk [vmem:[#allocation3 + $0x70] sm:$0xff] %vm226, %v3470
      %3503 = vst.msk [vmem:[#allocation3 + $0x78] sm:$0xff] %vm226, %v3471
      %3504 = vst.msk [vmem:[#allocation3 + $0x80] sm:$0xff] %vm226, %v3472
      %3505 = vst.msk [vmem:[#allocation3 + $0x88] sm:$0xff] %vm226, %v3473
      %3506 = vst.msk [vmem:[#allocation3 + $0x90] sm:$0xff] %vm226, %v3474
      %3507 = vst.msk [vmem:[#allocation3 + $0x98] sm:$0xff] %vm226, %v3475
      %3508 = vst.msk [vmem:[#allocation3 + $0xa0] sm:$0xff] %vm226, %v3476
      %3509 = vst.msk [vmem:[#allocation3 + $0xa8] sm:$0xff] %vm226, %v3477
      %3510 = vst.msk [vmem:[#allocation3 + $0xb0] sm:$0xff] %vm226, %v3478
      %3511 = vst.msk [vmem:[#allocation3 + $0xb8] sm:$0xff] %vm226, %v3479
      %3512 = vst.msk [vmem:[#allocation3 + $0xc0] sm:$0xff] %vm226, %v3480
      %3513 = vst.msk [vmem:[#allocation3 + $0xc8] sm:$0xff] %vm226, %v3481
      %3514 = vst.msk [vmem:[#allocation3 + $0xd0] sm:$0xff] %vm226, %v3482
      %3515 = vst.msk [vmem:[#allocation3 + $0xd8] sm:$0xff] %vm226, %v3483
      %3516 = vst.msk [vmem:[#allocation3 + $0xe0] sm:$0xff] %vm226, %v3484
      %3517 = vst.msk [vmem:[#allocation3 + $0xe8] sm:$0xff] %vm226, %v3485
      %3518 = vst.msk [vmem:[#allocation3 + $0xf0] sm:$0xff] %vm226, %v3486
      %3519 = vst.msk [vmem:[#allocation3 + $0xf8] sm:$0xff] %vm226, %v3487
      %v3520 = vld [vmem:[#allocation3] ss:$2 sm:$0xff]
      %s3521 = scalar_lea.vmem [#allocation3], 16
      %v3522 = vld [vmem:[%s3521] ss:$2 sm:$0xff]
      %s3523 = scalar_lea.vmem [#allocation3], 32
      %v3524 = vld [vmem:[%s3523] ss:$2 sm:$0xff]
      %s3525 = scalar_lea.vmem [#allocation3], 48
      %v3526 = vld [vmem:[%s3525] ss:$2 sm:$0xff]
      %s3527 = scalar_lea.vmem [#allocation3], 64
      %v3528 = vld [vmem:[%s3527] ss:$2 sm:$0xff]
      %s3529 = scalar_lea.vmem [#allocation3], 80
      %v3530 = vld [vmem:[%s3529] ss:$2 sm:$0xff]
      %s3531 = scalar_lea.vmem [#allocation3], 96
      %v3532 = vld [vmem:[%s3531] ss:$2 sm:$0xff]
      %s3533 = scalar_lea.vmem [#allocation3], 112
      %v3534 = vld [vmem:[%s3533] ss:$2 sm:$0xff]
      %s3535 = scalar_lea.vmem [#allocation3], 128
      %v3536 = vld [vmem:[%s3535] ss:$2 sm:$0xff]
      %s3537 = scalar_lea.vmem [#allocation3], 144
      %v3538 = vld [vmem:[%s3537] ss:$2 sm:$0xff]
      %s3539 = scalar_lea.vmem [#allocation3], 160
      %v3540 = vld [vmem:[%s3539] ss:$2 sm:$0xff]
      %s3541 = scalar_lea.vmem [#allocation3], 176
      %v3542 = vld [vmem:[%s3541] ss:$2 sm:$0xff]
      %s3543 = scalar_lea.vmem [#allocation3], 192
      %v3544 = vld [vmem:[%s3543] ss:$2 sm:$0xff]
      %s3545 = scalar_lea.vmem [#allocation3], 208
      %v3546 = vld [vmem:[%s3545] ss:$2 sm:$0xff]
      %s3547 = scalar_lea.vmem [#allocation3], 224
      %v3548 = vld [vmem:[%s3547] ss:$2 sm:$0xff]
      %s3549 = scalar_lea.vmem [#allocation3], 240
      %v3550 = vld [vmem:[%s3549] ss:$2 sm:$0xff]
      %s3551 = scalar_lea.vmem [#allocation3], 1
      %v3552 = vld [vmem:[%s3551] ss:$2 sm:$0xff]
      %s3553 = scalar_lea.vmem [#allocation3], 17
      %v3554 = vld [vmem:[%s3553] ss:$2 sm:$0xff]
      %s3555 = scalar_lea.vmem [#allocation3], 33
      %v3556 = vld [vmem:[%s3555] ss:$2 sm:$0xff]
      %s3557 = scalar_lea.vmem [#allocation3], 49
      %v3558 = vld [vmem:[%s3557] ss:$2 sm:$0xff]
      %s3559 = scalar_lea.vmem [#allocation3], 65
      %v3560 = vld [vmem:[%s3559] ss:$2 sm:$0xff]
      %s3561 = scalar_lea.vmem [#allocation3], 81
      %v3562 = vld [vmem:[%s3561] ss:$2 sm:$0xff]
      %s3563 = scalar_lea.vmem [#allocation3], 97
      %v3564 = vld [vmem:[%s3563] ss:$2 sm:$0xff]
      %s3565 = scalar_lea.vmem [#allocation3], 113
      %v3566 = vld [vmem:[%s3565] ss:$2 sm:$0xff]
      %s3567 = scalar_lea.vmem [#allocation3], 129
      %v3568 = vld [vmem:[%s3567] ss:$2 sm:$0xff]
      %s3569 = scalar_lea.vmem [#allocation3], 145
      %v3570 = vld [vmem:[%s3569] ss:$2 sm:$0xff]
      %s3571 = scalar_lea.vmem [#allocation3], 161
      %v3572 = vld [vmem:[%s3571] ss:$2 sm:$0xff]
      %s3573 = scalar_lea.vmem [#allocation3], 177
      %v3574 = vld [vmem:[%s3573] ss:$2 sm:$0xff]
      %s3575 = scalar_lea.vmem [#allocation3], 193
      %v3576 = vld [vmem:[%s3575] ss:$2 sm:$0xff]
      %s3577 = scalar_lea.vmem [#allocation3], 209
      %v3578 = vld [vmem:[%s3577] ss:$2 sm:$0xff]
      %s3579 = scalar_lea.vmem [#allocation3], 225
      %v3580 = vld [vmem:[%s3579] ss:$2 sm:$0xff]
      %s3581 = scalar_lea.vmem [#allocation3], 241
      %v3582 = vld [vmem:[%s3581] ss:$2 sm:$0xff]
      %v3583 = vmax.f32 %v3520, %v3552
      %v3584 = vmax.f32 %v3522, %v3554
      %v3585 = vmax.f32 %v3524, %v3556
      %v3586 = vmax.f32 %v3526, %v3558
      %v3587 = vmax.f32 %v3528, %v3560
      %v3588 = vmax.f32 %v3530, %v3562
      %v3589 = vmax.f32 %v3532, %v3564
      %v3590 = vmax.f32 %v3534, %v3566
      %v3591 = vmax.f32 %v3536, %v3568
      %v3592 = vmax.f32 %v3538, %v3570
      %v3593 = vmax.f32 %v3540, %v3572
      %v3594 = vmax.f32 %v3542, %v3574
      %v3595 = vmax.f32 %v3544, %v3576
      %v3596 = vmax.f32 %v3546, %v3578
      %v3597 = vmax.f32 %v3548, %v3580
      %v3598 = vmax.f32 %v3550, %v3582
      %v3599 = vmax.f32 %v3583, %v3584
      %v3600 = vmax.f32 %v3585, %v3586
      %v3601 = vmax.f32 %v3587, %v3588
      %v3602 = vmax.f32 %v3589, %v3590
      %v3603 = vmax.f32 %v3591, %v3592
      %v3604 = vmax.f32 %v3593, %v3594
      %v3605 = vmax.f32 %v3595, %v3596
      %v3606 = vmax.f32 %v3597, %v3598
      %v3615 = vrot.slane %v3600, 7
      %vm3616 = vcmask 1041409
      %v3617 = vsel %vm3616, %v3615, %v3599
      %v3618 = vrot.slane %v3601, 6
      %vm3619 = vcmask 1042434
      %v3620 = vsel %vm3619, %v3618, %v3617
      %v3621 = vrot.slane %v3602, 5
      %vm3622 = vcmask 1043459
      %v3623 = vsel %vm3622, %v3621, %v3620
      %v3624 = vrot.slane %v3603, 4
      %vm3625 = vcmask 1044484
      %v3626 = vsel %vm3625, %v3624, %v3623
      %v3627 = vrot.slane %v3604, 3
      %vm3628 = vcmask 1045509
      %v3629 = vsel %vm3628, %v3627, %v3626
      %v3630 = vrot.slane %v3605, 2
      %vm3631 = vcmask 1046534
      %v3632 = vsel %vm3631, %v3630, %v3629
      %v3633 = vrot.slane %v3606, 1
      %vm3634 = vcmask 1047559
      %v3635 = vsel %vm3634, %v3633, %v3632
      %v3637 = vrot.slane %v3599, 1
      %v3638 = vsel %vm3616, %v3600, %v3637
      %v3639 = vrot.slane %v3601, 7
      %v3640 = vsel %vm3619, %v3639, %v3638
      %v3641 = vrot.slane %v3602, 6
      %v3642 = vsel %vm3622, %v3641, %v3640
      %v3643 = vrot.slane %v3603, 5
      %v3644 = vsel %vm3625, %v3643, %v3642
      %v3645 = vrot.slane %v3604, 4
      %v3646 = vsel %vm3628, %v3645, %v3644
      %v3647 = vrot.slane %v3605, 3
      %v3648 = vsel %vm3631, %v3647, %v3646
      %v3649 = vrot.slane %v3606, 2
      %v3650 = vsel %vm3634, %v3649, %v3648
      %3651 = vrot.lane.b32.xlu0 %v3650, 64
      %v3652 = vpop.permute.xlu0 %3651
      %v3654 = vrot.slane %v3599, 2
      %v3655 = vrot.slane %v3600, 1
      %v3656 = vsel %vm3616, %v3655, %v3654
      %v3657 = vsel %vm3619, %v3601, %v3656
      %v3658 = vrot.slane %v3602, 7
      %v3659 = vsel %vm3622, %v3658, %v3657
      %v3660 = vrot.slane %v3603, 6
      %v3661 = vsel %vm3625, %v3660, %v3659
      %v3662 = vrot.slane %v3604, 5
      %v3663 = vsel %vm3628, %v3662, %v3661
      %v3664 = vrot.slane %v3605, 4
      %v3665 = vsel %vm3631, %v3664, %v3663
      %v3666 = vrot.slane %v3606, 3
      %v3667 = vsel %vm3634, %v3666, %v3665
      %v3669 = vrot.slane %v3599, 3
      %v3670 = vrot.slane %v3600, 2
      %v3671 = vsel %vm3616, %v3670, %v3669
      %v3672 = vrot.slane %v3601, 1
      %v3673 = vsel %vm3619, %v3672, %v3671
      %v3674 = vsel %vm3622, %v3602, %v3673
      %v3675 = vrot.slane %v3603, 7
      %v3676 = vsel %vm3625, %v3675, %v3674
      %v3677 = vrot.slane %v3604, 6
      %v3678 = vsel %vm3628, %v3677, %v3676
      %v3679 = vrot.slane %v3605, 5
      %v3680 = vsel %vm3631, %v3679, %v3678
      %v3681 = vrot.slane %v3606, 4
      %v3682 = vsel %vm3634, %v3681, %v3680
      %3683 = vrot.lane.b32.xlu0 %v3682, 64
      %v3684 = vpop.permute.xlu0 %3683
      %v3686 = vrot.slane %v3599, 4
      %v3687 = vrot.slane %v3600, 3
      %v3688 = vsel %vm3616, %v3687, %v3686
      %v3689 = vrot.slane %v3601, 2
      %v3690 = vsel %vm3619, %v3689, %v3688
      %v3691 = vrot.slane %v3602, 1
      %v3692 = vsel %vm3622, %v3691, %v3690
      %v3693 = vsel %vm3625, %v3603, %v3692
      %v3694 = vrot.slane %v3604, 7
      %v3695 = vsel %vm3628, %v3694, %v3693
      %v3696 = vrot.slane %v3605, 6
      %v3697 = vsel %vm3631, %v3696, %v3695
      %v3698 = vrot.slane %v3606, 5
      %v3699 = vsel %vm3634, %v3698, %v3697
      %v3701 = vrot.slane %v3599, 5
      %v3702 = vrot.slane %v3600, 4
      %v3703 = vsel %vm3616, %v3702, %v3701
      %v3704 = vrot.slane %v3601, 3
      %v3705 = vsel %vm3619, %v3704, %v3703
      %v3706 = vrot.slane %v3602, 2
      %v3707 = vsel %vm3622, %v3706, %v3705
      %v3708 = vrot.slane %v3603, 1
      %v3709 = vsel %vm3625, %v3708, %v3707
      %v3710 = vsel %vm3628, %v3604, %v3709
      %v3711 = vrot.slane %v3605, 7
      %v3712 = vsel %vm3631, %v3711, %v3710
      %v3713 = vrot.slane %v3606, 6
      %v3714 = vsel %vm3634, %v3713, %v3712
      %3715 = vrot.lane.b32.xlu0 %v3714, 64
      %v3716 = vpop.permute.xlu0 %3715
      %v3718 = vrot.slane %v3599, 6
      %v3719 = vrot.slane %v3600, 5
      %v3720 = vsel %vm3616, %v3719, %v3718
      %v3721 = vrot.slane %v3601, 4
      %v3722 = vsel %vm3619, %v3721, %v3720
      %v3723 = vrot.slane %v3602, 3
      %v3724 = vsel %vm3622, %v3723, %v3722
      %v3725 = vrot.slane %v3603, 2
      %v3726 = vsel %vm3625, %v3725, %v3724
      %v3727 = vrot.slane %v3604, 1
      %v3728 = vsel %vm3628, %v3727, %v3726
      %v3729 = vsel %vm3631, %v3605, %v3728
      %v3730 = vrot.slane %v3606, 7
      %v3731 = vsel %vm3634, %v3730, %v3729
      %v3733 = vrot.slane %v3599, 7
      %v3734 = vrot.slane %v3600, 6
      %v3735 = vsel %vm3616, %v3734, %v3733
      %v3736 = vrot.slane %v3601, 5
      %v3737 = vsel %vm3619, %v3736, %v3735
      %v3738 = vrot.slane %v3602, 4
      %v3739 = vsel %vm3622, %v3738, %v3737
      %v3740 = vrot.slane %v3603, 3
      %v3741 = vsel %vm3625, %v3740, %v3739
      %v3742 = vrot.slane %v3604, 2
      %v3743 = vsel %vm3628, %v3742, %v3741
      %v3744 = vrot.slane %v3605, 1
      %v3745 = vsel %vm3631, %v3744, %v3743
      %v3746 = vsel %vm3634, %v3606, %v3745
      %3747 = vrot.lane.b32.xlu0 %v3746, 64
      %v3748 = vpop.permute.xlu0 %3747
      %v3750 = vsel %vm226, %v3635, %v3652
      %v3751 = vsel %vm226, %v3667, %v3684
      %v3752 = vsel %vm226, %v3699, %v3716
      %v3753 = vsel %vm226, %v3731, %v3748
      %v3754 = vpack.c.bf16 %v3751, %v3750
      %v3755 = vpack.c.bf16 %v3753, %v3752
      %3756 = vst [vmem:[%s224] sm:$0xff] %v3754
      %3757 = vst [vmem:[%s224 + $0x8] sm:$0xff] %v3755
      %p3758 = scmp.lt.s32.totalorder %s16, 1
      %s3759 = scalar_select %p3758, %s16, 1
      %s3760 = smul.addr %s3759, 4
      %s3761 = smul.addr %s3760, 4
      %s3762 = scalar_lea.vmem %s5, %s3761
      // Predicated region
      $region41: #{rep_forward.2} parent=39 // pred_check
        %p3763 = pneg %p144
      $region42: #{rep_forward.2} parent=39 // pred_check_branch
        %3765 = sbr.rel (%p3763) target = $region44
      $region43: #{rep_forward.2} parent=39 // pred_region
        _
      $region44: #{rep_forward.2} parent=39 // pred_fallthru
        _
    $region40: #{rep_forward.2} parent=5 // pred_fallthru
      _
    %p3766 = scmp.le.s32.totalorder 2, %s11
    // Predicated region
    $region45: #{rep_forward.2} parent=5 // pred_check
      %p3767 = pneg %p3766
    $region46: #{rep_forward.2} parent=5 // pred_check_branch
      %3769 = sbr.rel (%p3767) target = $region48
    $region47: #{rep_forward.2} parent=5 // pred_region
      %s3770 = ssub.s32 %s11, 2
      // Predicated region
      $region49: #{rep_forward.2} parent=47 // pred_check
        %p3771 = pneg %p150
      $region50: #{rep_forward.2} parent=47 // pred_check_branch
        %3773 = sbr.rel (%p3771) target = $region52
      $region51: #{rep_forward.2} parent=47 // pred_region
        %p3774 = scmp.lt.s32.totalorder %s17, 1
        %s3775 = scalar_select %p3774, %s17, 1
        %s3776 = smul.addr %s3775, 4
        %s3777 = smul.addr %s3776, 4
        %s3778 = scalar_lea.vmem %s5, %s3777
      $region52: #{rep_forward.2} parent=47 // pred_fallthru
        _
    $region48: #{rep_forward.2} parent=5 // pred_fallthru
      _
  $region6: #{rep_forward.2} parent=0 // loop_footer
    %s15 = sadd.s32 1, %s11
  $region7: #{rep_forward.2} parent=0 // loop_footer_branch
    %10 = sbr.rel target = $region3
  $region8: #{rep_forward.2} parent=0 // loop_exit
    _

</llo_original>
